<compile_context>
chip_gen: v7x
topology: tpu7x:2x2x1
jax: 0.10.0
libtpu: 0.0.40
codegen_flags: <defaults>
</compile_context>

<pallas_src>
import functools
import math

import jax
import jax.numpy as jnp
from jax.experimental import pallas as pl
from jax.experimental.pallas import tpu as pltpu

# ---- scaled-down bert-base config (encoder truncated to N_LAYERS) -----------
VOCAB = 1000
MAX_POS = 64
TYPE_VOCAB = 2
HIDDEN = 128          # stands in for 768
N_HEADS = 4           # stands in for 12
HEAD_DIM = HIDDEN // N_HEADS
INTERMEDIATE = 256    # stands in for 3072
N_LAYERS = 4
N_FEATURES = 3
N_CLASSES = 2
LN_EPS = 1e-12

OUT_PAD = 128         # lane-dense padded head output width
OUT_ROWS = 8          # sublane-dense padded head output rows


# ----------------------------- in-kernel helpers ------------------------------
def _layernorm(x, g, b, eps):
    """LayerNorm over the last (hidden) axis, all f32."""
    mu = jnp.mean(x, axis=-1, keepdims=True)
    xc = x - mu
    var = jnp.mean(xc * xc, axis=-1, keepdims=True)
    return xc * jax.lax.rsqrt(var + eps) * g + b


def _gelu(x):
    # TODO(synk): HF BERT uses exact erf-GELU; tanh approximation used here.
    return 0.5 * x * (1.0 + jnp.tanh(0.7978845608028654 * (x + 0.044715 * x * x * x)))


# ----------------------------- fused forward kernel ---------------------------
def _fused_bert_kernel(
    x_ref, m_ref,
    emb_g_ref, emb_b_ref,
    qkv_w_ref, qkv_b_ref,
    ao_w_ref, ao_b_ref,
    ln1_g_ref, ln1_b_ref,
    i_w_ref, i_b_ref,
    o_w_ref, o_b_ref,
    ln2_g_ref, ln2_b_ref,
    pool_w_ref, pool_b_ref,
    clf_w_ref, clf_b_ref,
    cls_w_ref, cls_b_ref,
    out_ref,
    h_ref,                       # VMEM scratch (S, H) f32 — resident activation
    *, eps, n_heads, head_dim, extract_features,
):
    layer = pl.program_id(1)
    n_layers = pl.num_programs(1)
    H = n_heads * head_dim

    # ---- layer 0: embedding LayerNorm seeds the resident activation ---------
    @pl.when(layer == 0)
    def _():
        h_ref[...] = _layernorm(x_ref[...], emb_g_ref[...], emb_b_ref[...], eps)

    x = h_ref[...]                                        # (S, H) f32
    S = x.shape[0]

    # ---- fused QKV projection (Q weight/bias pre-scaled by 1/sqrt(dh)) ------
    qkv = jnp.dot(x.astype(jnp.bfloat16), qkv_w_ref[...],
                  preferred_element_type=jnp.float32) + qkv_b_ref[...]   # (S,3H)
    qkv_bf = qkv.astype(jnp.bfloat16)                     # single hoisted cast

    # ---- batched multi-head attention ----------------------------------------
    # Build (n_heads, S, dh) operands from lane slices (layout-safe), then two
    # batched MXU dots cover all heads at once.
    def split_heads(t):
        return jnp.stack(
            [t[:, h * head_dim:(h + 1) * head_dim] for h in range(n_heads)],
            axis=0)                                       # (nH, S, dh)

    qh = split_heads(qkv_bf[:, 0:H])
    kh = split_heads(qkv_bf[:, H:2 * H])
    vh = split_heads(qkv_bf[:, 2 * H:3 * H])

    s = jnp.einsum("hqd,hkd->hqk", qh, kh,
                   preferred_element_type=jnp.float32)    # (nH, S, S) f32
    s = s + m_ref[...]                                    # (1,S) key-axis bias
    s = s - jnp.max(s, axis=-1, keepdims=True)
    p = jnp.exp(s)
    p = p * pl.reciprocal(jnp.sum(p, axis=-1, keepdims=True), approx=True)
    ctx = jnp.einsum("hqk,hkd->hqd", p.astype(jnp.bfloat16), vh,
                     preferred_element_type=jnp.float32)  # (nH, S, dh) f32
    ctx = jnp.concatenate([ctx[h] for h in range(n_heads)], axis=-1)  # (S, H)

    # ---- attention output projection + residual + LayerNorm ------------------
    attn = jnp.dot(ctx.astype(jnp.bfloat16), ao_w_ref[...],
                   preferred_element_type=jnp.float32) + ao_b_ref[...]
    h1 = _layernorm(attn + x, ln1_g_ref[...], ln1_b_ref[...], eps)

    # ---- FFN: up proj + GELU, down proj, residual + LayerNorm ----------------
    inter = jnp.dot(h1.astype(jnp.bfloat16), i_w_ref[...],
                    preferred_element_type=jnp.float32) + i_b_ref[...]
    inter = _gelu(inter)
    ffn = jnp.dot(inter.astype(jnp.bfloat16), o_w_ref[...],
                  preferred_element_type=jnp.float32) + o_b_ref[...]
    h_new = _layernorm(ffn + h1, ln2_g_ref[...], ln2_b_ref[...], eps)
    h_ref[...] = h_new

    # ---- last layer: fused pooler -> classifier [-> cls] head ---------------
    # Classifier / cls weights are zero-padded to 128 output lanes at pack
    # time, so the projections are exact and the store is lane-dense.
    @pl.when(layer == n_layers - 1)
    def _():
        cls_row = h_new[0:1, :]                           # (1, H) CLS token
        pooled = jnp.tanh(
            jnp.dot(cls_row.astype(jnp.bfloat16), pool_w_ref[...],
                    preferred_element_type=jnp.float32) + pool_b_ref[...])
        # dropout is a no-op in eval mode
        feats = jnp.dot(pooled, clf_w_ref[...],
                        preferred_element_type=jnp.float32) + clf_b_ref[...]
        if extract_features:
            res = feats                                   # (1, OUT_PAD)
        else:
            res = jnp.dot(feats, cls_w_ref[...],
                          preferred_element_type=jnp.float32) + cls_b_ref[...]
        out_ref[...] = jnp.broadcast_to(res, (OUT_ROWS, OUT_PAD)).astype(out_ref.dtype)


# ----------------------------- Pallas wrapper ----------------------------------
def pallas_bert_forward(packed, x_emb, mask_bias, B, S, extract_features):
    """x_emb: (B*S, H) f32 pre-LN embeddings; mask_bias: (B, 1, S) f32."""
    n_out = N_FEATURES if extract_features else N_CLASSES
    wfull = lambda b, l: (0, 0)            # shared (head / emb-LN) params
    lidx = lambda b, l: (l, 0, 0)          # per-layer stacked params
    out = pl.pallas_call(
        functools.partial(
            _fused_bert_kernel, eps=LN_EPS, n_heads=N_HEADS, head_dim=HEAD_DIM,
            extract_features=extract_features),
        out_shape=jax.ShapeDtypeStruct((B, OUT_ROWS, OUT_PAD), jnp.float32),
        grid=(B, N_LAYERS),
        in_specs=[
            pl.BlockSpec((S, HIDDEN), lambda b, l: (b, 0)),            # x rows of b
            pl.BlockSpec((None, 1, S), lambda b, l: (b, 0, 0)),        # mask bias of b
            pl.BlockSpec((1, HIDDEN), wfull),                          # emb LN gamma
            pl.BlockSpec((1, HIDDEN), wfull),                          # emb LN beta
            pl.BlockSpec((None, HIDDEN, 3 * HIDDEN), lidx),            # QKV weight (bf16)
            pl.BlockSpec((None, 1, 3 * HIDDEN), lidx),                 # QKV bias
            pl.BlockSpec((None, HIDDEN, HIDDEN), lidx),                # attn out proj (bf16)
            pl.BlockSpec((None, 1, HIDDEN), lidx),
            pl.BlockSpec((None, 1, HIDDEN), lidx),                     # LN1 gamma
            pl.BlockSpec((None, 1, HIDDEN), lidx),                     # LN1 beta
            pl.BlockSpec((None, HIDDEN, INTERMEDIATE), lidx),          # FFN up (bf16)
            pl.BlockSpec((None, 1, INTERMEDIATE), lidx),
            pl.BlockSpec((None, INTERMEDIATE, HIDDEN), lidx),          # FFN down (bf16)
            pl.BlockSpec((None, 1, HIDDEN), lidx),
            pl.BlockSpec((None, 1, HIDDEN), lidx),                     # LN2 gamma
            pl.BlockSpec((None, 1, HIDDEN), lidx),                     # LN2 beta
            pl.BlockSpec((HIDDEN, HIDDEN), wfull),                     # pooler W (bf16)
            pl.BlockSpec((1, HIDDEN), wfull),                          # pooler b
            pl.BlockSpec((HIDDEN, OUT_PAD), wfull),                    # classifier W (padded)
            pl.BlockSpec((1, OUT_PAD), wfull),                         # classifier b (padded)
            pl.BlockSpec((OUT_PAD, OUT_PAD), wfull),                   # cls W (padded)
            pl.BlockSpec((1, OUT_PAD), wfull),                         # cls b (padded)
        ],
        out_specs=pl.BlockSpec((None, OUT_ROWS, OUT_PAD), lambda b, l: (b, 0, 0)),
        scratch_shapes=[pltpu.VMEM((S, HIDDEN), jnp.float32)],
        compiler_params=pltpu.CompilerParams(
            dimension_semantics=("parallel", "arbitrary")),
    )(x_emb, mask_bias,
      packed["emb_ln_g"], packed["emb_ln_b"],
      packed["qkv_w"], packed["qkv_b"],
      packed["ao_w"], packed["ao_b"],
      packed["ln1_g"], packed["ln1_b"],
      packed["i_w"], packed["i_b"],
      packed["o_w"], packed["o_b"],
      packed["ln2_g"], packed["ln2_b"],
      packed["pooler_w"], packed["pooler_b"],
      packed["clf_w"], packed["clf_b"],
      packed["cls_w"], packed["cls_b"])
    return out[:, 0, :n_out]


# ----------------------------- parameters --------------------------------------
def init_params(key):
    """PyTorch-shaped f32 parameters."""
    def nrm(k, shape):
        return 0.02 * jax.random.normal(k, shape, dtype=jnp.float32)

    keys = jax.random.split(key, 8 + N_LAYERS)
    params = {
        "word_emb": nrm(keys[0], (VOCAB, HIDDEN)),
        "pos_emb": nrm(keys[1], (MAX_POS, HIDDEN)),
        "type_emb": nrm(keys[2], (TYPE_VOCAB, HIDDEN)),
        "emb_ln_g": jnp.ones((HIDDEN,), jnp.float32),
        "emb_ln_b": jnp.zeros((HIDDEN,), jnp.float32),
        "pooler_w": nrm(keys[3], (HIDDEN, HIDDEN)),
        "pooler_b": jnp.zeros((HIDDEN,), jnp.float32),
        "classifier_w": nrm(keys[4], (HIDDEN, N_FEATURES)),   # replaces bert.classifier
        "classifier_b": jnp.zeros((N_FEATURES,), jnp.float32),
        "cls_w": nrm(keys[5], (N_FEATURES, N_CLASSES)),       # self.cls
        "cls_b": jnp.zeros((N_CLASSES,), jnp.float32),
        "layers": [],
    }
    for l in range(N_LAYERS):
        lk = jax.random.split(keys[8 + l], 6)
        params["layers"].append({
            "q_w": nrm(lk[0], (HIDDEN, HIDDEN)), "q_b": jnp.zeros((HIDDEN,), jnp.float32),
            "k_w": nrm(lk[1], (HIDDEN, HIDDEN)), "k_b": jnp.zeros((HIDDEN,), jnp.float32),
            "v_w": nrm(lk[2], (HIDDEN, HIDDEN)), "v_b": jnp.zeros((HIDDEN,), jnp.float32),
            "ao_w": nrm(lk[3], (HIDDEN, HIDDEN)), "ao_b": jnp.zeros((HIDDEN,), jnp.float32),
            "attn_ln_g": jnp.ones((HIDDEN,), jnp.float32),
            "attn_ln_b": jnp.zeros((HIDDEN,), jnp.float32),
            "i_w": nrm(lk[4], (HIDDEN, INTERMEDIATE)),
            "i_b": jnp.zeros((INTERMEDIATE,), jnp.float32),
            "o_w": nrm(lk[5], (INTERMEDIATE, HIDDEN)),
            "o_b": jnp.zeros((HIDDEN,), jnp.float32),
            "out_ln_g": jnp.ones((HIDDEN,), jnp.float32),
            "out_ln_b": jnp.zeros((HIDDEN,), jnp.float32),
        })
    return params


def pack_params(params):
    """One-time prep: fuse QKV (Q pre-scaled by 1/sqrt(dh)), stack layers on a
    leading axis, cast MXU weights to bf16, pad head weights to 128 lanes."""
    bf = jnp.bfloat16
    inv = 1.0 / math.sqrt(HEAD_DIM)
    L = params["layers"]

    def stack(fn, dtype=jnp.float32):
        return jnp.stack([fn(p) for p in L], axis=0).astype(dtype)

    packed = {
        "word_emb": params["word_emb"],
        "pos_emb": params["pos_emb"],
        "type_emb": params["type_emb"],
        "emb_ln_g": params["emb_ln_g"].reshape(1, HIDDEN),
        "emb_ln_b": params["emb_ln_b"].reshape(1, HIDDEN),
        # stacked per-layer weights: leading layer axis, indexed by the grid
        "qkv_w": stack(lambda p: jnp.concatenate(
            [p["q_w"] * inv, p["k_w"], p["v_w"]], axis=1), bf),
        "qkv_b": stack(lambda p: jnp.concatenate(
            [p["q_b"] * inv, p["k_b"], p["v_b"]]).reshape(1, 3 * HIDDEN)),
        "ao_w": stack(lambda p: p["ao_w"], bf),
        "ao_b": stack(lambda p: p["ao_b"].reshape(1, HIDDEN)),
        "ln1_g": stack(lambda p: p["attn_ln_g"].reshape(1, HIDDEN)),
        "ln1_b": stack(lambda p: p["attn_ln_b"].reshape(1, HIDDEN)),
        "i_w": stack(lambda p: p["i_w"], bf),
        "i_b": stack(lambda p: p["i_b"].reshape(1, INTERMEDIATE)),
        "o_w": stack(lambda p: p["o_w"], bf),
        "o_b": stack(lambda p: p["o_b"].reshape(1, HIDDEN)),
        "ln2_g": stack(lambda p: p["out_ln_g"].reshape(1, HIDDEN)),
        "ln2_b": stack(lambda p: p["out_ln_b"].reshape(1, HIDDEN)),
        # head params (classifier / cls zero-padded to lane-dense 128 columns)
        "pooler_w": params["pooler_w"].astype(bf),
        "pooler_b": params["pooler_b"].reshape(1, HIDDEN),
        "clf_w": jnp.zeros((HIDDEN, OUT_PAD), jnp.float32)
                    .at[:, :N_FEATURES].set(params["classifier_w"]),
        "clf_b": jnp.zeros((1, OUT_PAD), jnp.float32)
                    .at[0, :N_FEATURES].set(params["classifier_b"]),
        "cls_w": jnp.zeros((OUT_PAD, OUT_PAD), jnp.float32)
                    .at[:N_FEATURES, :N_CLASSES].set(params["cls_w"]),
        "cls_b": jnp.zeros((1, OUT_PAD), jnp.float32)
                    .at[0, :N_CLASSES].set(params["cls_b"]),
    }
    return packed


# ----------------------------- model --------------------------------------------
def bert_for_features(packed, input_ids, attn_mask, extract_features=False):
    B, S = input_ids.shape
    # embeddings: gathers stay in plain XLA; the sum fuses with the gathers.
    we = jnp.take(packed["word_emb"], input_ids, axis=0)             # (B,S,H)
    pe = packed["pos_emb"][:S][None, :, :]                           # (1,S,H)
    # token_type_ids default to zeros (segment 0), matching the HF default.
    te = jnp.take(packed["type_emb"], jnp.zeros_like(input_ids), axis=0)
    x = (we + pe + te).reshape(B * S, HIDDEN)

    # HF-style additive attention mask bias, shaped (B, 1, S)
    mask_bias = ((1.0 - attn_mask.astype(jnp.float32)) * -10000.0)[:, None, :]

    # single fused pallas_call: emb-LN + 4 encoder layers + pooler/head
    return pallas_bert_forward(packed, x, mask_bias, B, S, extract_features)


if __name__ == "__main__":
    key = jax.random.PRNGKey(0)
    pkey, ikey = jax.random.split(key)
    B, S = 2, 8
    params = init_params(pkey)
    packed = pack_params(params)
    input_ids = jax.random.randint(ikey, (B, S), 0, VOCAB, dtype=jnp.int32)
    attn_mask = jnp.ones((B, S), dtype=jnp.int32)

    fwd = jax.jit(functools.partial(bert_for_features, extract_features=False))
    logits = fwd(packed, input_ids, attn_mask)
    jax.block_until_ready(logits)
    assert logits.shape == (B, N_CLASSES) and logits.dtype == jnp.float32

    feat_fn = jax.jit(functools.partial(bert_for_features, extract_features=True))
    feats = feat_fn(packed, input_ids, attn_mask)
    jax.block_until_ready(feats)
    assert feats.shape == (B, N_FEATURES)

    print("KERNEL_OK")
</pallas_src>

<mosaic_0001>
module attributes {stable_mosaic.version = 11 : i64} {
  func.func @_fused_bert_kernel(%arg0: i32, %arg1: i32, %arg2: memref<8x128xf32, #tpu.memory_space<vmem>>, %arg3: memref<1x1x8xf32, #tpu.memory_space<vmem>>, %arg4: memref<1x128xf32, #tpu.memory_space<vmem>>, %arg5: memref<1x128xf32, #tpu.memory_space<vmem>>, %arg6: memref<1x128x384xbf16, #tpu.memory_space<vmem>>, %arg7: memref<1x1x384xf32, #tpu.memory_space<vmem>>, %arg8: memref<1x128x128xbf16, #tpu.memory_space<vmem>>, %arg9: memref<1x1x128xf32, #tpu.memory_space<vmem>>, %arg10: memref<1x1x128xf32, #tpu.memory_space<vmem>>, %arg11: memref<1x1x128xf32, #tpu.memory_space<vmem>>, %arg12: memref<1x128x256xbf16, #tpu.memory_space<vmem>>, %arg13: memref<1x1x256xf32, #tpu.memory_space<vmem>>, %arg14: memref<1x256x128xbf16, #tpu.memory_space<vmem>>, %arg15: memref<1x1x128xf32, #tpu.memory_space<vmem>>, %arg16: memref<1x1x128xf32, #tpu.memory_space<vmem>>, %arg17: memref<1x1x128xf32, #tpu.memory_space<vmem>>, %arg18: memref<128x128xbf16, #tpu.memory_space<vmem>>, %arg19: memref<1x128xf32, #tpu.memory_space<vmem>>, %arg20: memref<128x128xf32, #tpu.memory_space<vmem>>, %arg21: memref<1x128xf32, #tpu.memory_space<vmem>>, %arg22: memref<128x128xf32, #tpu.memory_space<vmem>>, %arg23: memref<1x128xf32, #tpu.memory_space<vmem>>, %arg24: memref<1x8x128xf32, #tpu.memory_space<vmem>>, %arg25: memref<8x128xf32, #tpu.memory_space<vmem>>) attributes {dimension_semantics = [#tpu.dimension_semantics<parallel>, #tpu.dimension_semantics<arbitrary>], iteration_bounds = array<i64: 2, 4>, scalar_prefetch = 0 : i64, scratch_operands = 1 : i64, tpu.core_type = #tpu.core_type<tc>, window_params = [{transform_indices = @transform_0, window_bounds = array<i64: 8, 128>}, {transform_indices = @transform_1, window_bounds = array<i64: 1, 1, 8>}, {pipeline_mode = #tpu.pipeline_mode<synchronous>, transform_indices = @transform_2, window_bounds = array<i64: 1, 128>}, {pipeline_mode = #tpu.pipeline_mode<synchronous>, transform_indices = @transform_3, window_bounds = array<i64: 1, 128>}, {transform_indices = @transform_4, window_bounds = array<i64: 1, 128, 384>}, {transform_indices = @transform_5, window_bounds = array<i64: 1, 1, 384>}, {transform_indices = @transform_6, window_bounds = array<i64: 1, 128, 128>}, {transform_indices = @transform_7, window_bounds = array<i64: 1, 1, 128>}, {transform_indices = @transform_8, window_bounds = array<i64: 1, 1, 128>}, {transform_indices = @transform_9, window_bounds = array<i64: 1, 1, 128>}, {transform_indices = @transform_10, window_bounds = array<i64: 1, 128, 256>}, {transform_indices = @transform_11, window_bounds = array<i64: 1, 1, 256>}, {transform_indices = @transform_12, window_bounds = array<i64: 1, 256, 128>}, {transform_indices = @transform_13, window_bounds = array<i64: 1, 1, 128>}, {transform_indices = @transform_14, window_bounds = array<i64: 1, 1, 128>}, {transform_indices = @transform_15, window_bounds = array<i64: 1, 1, 128>}, {pipeline_mode = #tpu.pipeline_mode<synchronous>, transform_indices = @transform_16, window_bounds = array<i64: 128, 128>}, {pipeline_mode = #tpu.pipeline_mode<synchronous>, transform_indices = @transform_17, window_bounds = array<i64: 1, 128>}, {pipeline_mode = #tpu.pipeline_mode<synchronous>, transform_indices = @transform_18, window_bounds = array<i64: 128, 128>}, {pipeline_mode = #tpu.pipeline_mode<synchronous>, transform_indices = @transform_19, window_bounds = array<i64: 1, 128>}, {pipeline_mode = #tpu.pipeline_mode<synchronous>, transform_indices = @transform_20, window_bounds = array<i64: 128, 128>}, {pipeline_mode = #tpu.pipeline_mode<synchronous>, transform_indices = @transform_21, window_bounds = array<i64: 1, 128>}, {transform_indices = @transform_22, window_bounds = array<i64: 1, 8, 128>}]} {
    %c0_i32 = arith.constant 0 : i32
    %0 = arith.cmpi eq, %arg1, %c0_i32 : i32
    %1 = arith.extui %0 : i1 to i32
    %c0_i32_0 = arith.constant 0 : i32
    %2 = arith.cmpi ne, %1, %c0_i32_0 : i32
    scf.if %2 {
      %c0_65 = arith.constant 0 : index
      %c0_66 = arith.constant 0 : index
      %161 = vector.load %arg2[%c0_65, %c0_66] : memref<8x128xf32, #tpu.memory_space<vmem>>, vector<8x128xf32>
      %c0_67 = arith.constant 0 : index
      %c0_68 = arith.constant 0 : index
      %162 = vector.load %arg4[%c0_67, %c0_68] : memref<1x128xf32, #tpu.memory_space<vmem>>, vector<1x128xf32>
      %c0_69 = arith.constant 0 : index
      %c0_70 = arith.constant 0 : index
      %163 = vector.load %arg5[%c0_69, %c0_70] : memref<1x128xf32, #tpu.memory_space<vmem>>, vector<1x128xf32>
      %cst_71 = arith.constant dense<0.000000e+00> : vector<8xf32>
      %164 = vector.multi_reduction <add>, %161, %cst_71 [1] : vector<8x128xf32> to vector<8xf32>
      %165 = vector.shape_cast %164 : vector<8xf32> to vector<8x1xf32>
      %cst_72 = arith.constant 1.280000e+02 : f32
      %166 = vector.broadcast %cst_72 : f32 to vector<8x1xf32>
      %167 = arith.divf %165, %166 : vector<8x1xf32>
      %168 = vector.broadcast %167 : vector<8x1xf32> to vector<8x128xf32>
      %169 = arith.subf %161, %168 : vector<8x128xf32>
      %170 = arith.mulf %169, %169 : vector<8x128xf32>
      %cst_73 = arith.constant dense<0.000000e+00> : vector<8xf32>
      %171 = vector.multi_reduction <add>, %170, %cst_73 [1] : vector<8x128xf32> to vector<8xf32>
      %172 = vector.shape_cast %171 : vector<8xf32> to vector<8x1xf32>
      %cst_74 = arith.constant 1.280000e+02 : f32
      %173 = vector.broadcast %cst_74 : f32 to vector<8x1xf32>
      %174 = arith.divf %172, %173 : vector<8x1xf32>
      %cst_75 = arith.constant 9.99999996E-13 : f32
      %175 = vector.broadcast %cst_75 : f32 to vector<8x1xf32>
      %176 = arith.addf %174, %175 : vector<8x1xf32>
      %177 = math.rsqrt %176 : vector<8x1xf32>
      %178 = vector.broadcast %177 : vector<8x1xf32> to vector<8x128xf32>
      %179 = arith.mulf %169, %178 : vector<8x128xf32>
      %180 = vector.broadcast %162 : vector<1x128xf32> to vector<8x128xf32>
      %181 = arith.mulf %179, %180 : vector<8x128xf32>
      %182 = vector.broadcast %163 : vector<1x128xf32> to vector<8x128xf32>
      %183 = arith.addf %181, %182 : vector<8x128xf32>
      %c0_76 = arith.constant 0 : index
      %c0_77 = arith.constant 0 : index
      %184 = vector.load %arg25[%c0_76, %c0_77] : memref<8x128xf32, #tpu.memory_space<vmem>>, vector<8x128xf32>
      tpu.vector_store %arg25[%c0_76, %c0_77], %183 {strides = array<i32>} : memref<8x128xf32, #tpu.memory_space<vmem>>, vector<8x128xf32>,
    } else {
    }
    %c0 = arith.constant 0 : index
    %c0_1 = arith.constant 0 : index
    %3 = vector.load %arg25[%c0, %c0_1] : memref<8x128xf32, #tpu.memory_space<vmem>>, vector<8x128xf32>
    %4 = arith.truncf %3 : vector<8x128xf32> to vector<8x128xbf16>
    %c0_2 = arith.constant 0 : index
    %c0_3 = arith.constant 0 : index
    %c0_4 = arith.constant 0 : index
    %5 = vector.load %arg6[%c0_2, %c0_3, %c0_4] : memref<1x128x384xbf16, #tpu.memory_space<vmem>>, vector<1x128x384xbf16>
    %6 = vector.shape_cast %5 : vector<1x128x384xbf16> to vector<128x384xbf16>
    %cst = arith.constant dense<0.000000e+00> : vector<8x384xf32>
    %7 = tpu.matmul %4, %6, %cst {dimension_numbers = #tpu.dot_dimension_numbers<[1], [0], [0], [1], [0, 0, 1, 1], [], []>} : vector<8x128xbf16>, vector<128x384xbf16>, vector<8x384xf32> -> vector<8x384xf32>
    %c0_5 = arith.constant 0 : index
    %c0_6 = arith.constant 0 : index
    %c0_7 = arith.constant 0 : index
    %8 = vector.load %arg7[%c0_5, %c0_6, %c0_7] : memref<1x1x384xf32, #tpu.memory_space<vmem>>, vector<1x1x384xf32>
    %9 = vector.shape_cast %8 : vector<1x1x384xf32> to vector<1x384xf32>
    %10 = vector.broadcast %9 : vector<1x384xf32> to vector<8x384xf32>
    %11 = arith.addf %7, %10 : vector<8x384xf32>
    %12 = arith.truncf %11 : vector<8x384xf32> to vector<8x384xbf16>
    %13 = vector.extract_strided_slice %12 {offsets = [0, 0], sizes = [8, 128], strides = [1, 1]} : vector<8x384xbf16> to vector<8x128xbf16>
    %14 = vector.extract_strided_slice %13 {offsets = [0, 0], sizes = [8, 32], strides = [1, 1]} : vector<8x128xbf16> to vector<8x32xbf16>
    %15 = vector.extract_strided_slice %13 {offsets = [0, 32], sizes = [8, 32], strides = [1, 1]} : vector<8x128xbf16> to vector<8x32xbf16>
    %16 = vector.extract_strided_slice %13 {offsets = [0, 64], sizes = [8, 32], strides = [1, 1]} : vector<8x128xbf16> to vector<8x32xbf16>
    %17 = vector.extract_strided_slice %13 {offsets = [0, 96], sizes = [8, 32], strides = [1, 1]} : vector<8x128xbf16> to vector<8x32xbf16>
    %18 = vector.shape_cast %14 : vector<8x32xbf16> to vector<1x8x32xbf16>
    %19 = vector.shape_cast %15 : vector<8x32xbf16> to vector<1x8x32xbf16>
    %20 = vector.shape_cast %16 : vector<8x32xbf16> to vector<1x8x32xbf16>
    %21 = vector.shape_cast %17 : vector<8x32xbf16> to vector<1x8x32xbf16>
    %22 = tpu.concatenate %18, %19, %20, %21 in 0 : vector<1x8x32xbf16>, vector<1x8x32xbf16>, vector<1x8x32xbf16>, vector<1x8x32xbf16> -> vector<4x8x32xbf16>
    %23 = vector.extract_strided_slice %12 {offsets = [0, 128], sizes = [8, 128], strides = [1, 1]} : vector<8x384xbf16> to vector<8x128xbf16>
    %24 = vector.extract_strided_slice %23 {offsets = [0, 0], sizes = [8, 32], strides = [1, 1]} : vector<8x128xbf16> to vector<8x32xbf16>
    %25 = vector.extract_strided_slice %23 {offsets = [0, 32], sizes = [8, 32], strides = [1, 1]} : vector<8x128xbf16> to vector<8x32xbf16>
    %26 = vector.extract_strided_slice %23 {offsets = [0, 64], sizes = [8, 32], strides = [1, 1]} : vector<8x128xbf16> to vector<8x32xbf16>
    %27 = vector.extract_strided_slice %23 {offsets = [0, 96], sizes = [8, 32], strides = [1, 1]} : vector<8x128xbf16> to vector<8x32xbf16>
    %28 = vector.shape_cast %24 : vector<8x32xbf16> to vector<1x8x32xbf16>
    %29 = vector.shape_cast %25 : vector<8x32xbf16> to vector<1x8x32xbf16>
    %30 = vector.shape_cast %26 : vector<8x32xbf16> to vector<1x8x32xbf16>
    %31 = vector.shape_cast %27 : vector<8x32xbf16> to vector<1x8x32xbf16>
    %32 = tpu.concatenate %28, %29, %30, %31 in 0 : vector<1x8x32xbf16>, vector<1x8x32xbf16>, vector<1x8x32xbf16>, vector<1x8x32xbf16> -> vector<4x8x32xbf16>
    %33 = vector.extract_strided_slice %12 {offsets = [0, 256], sizes = [8, 128], strides = [1, 1]} : vector<8x384xbf16> to vector<8x128xbf16>
    %34 = vector.extract_strided_slice %33 {offsets = [0, 0], sizes = [8, 32], strides = [1, 1]} : vector<8x128xbf16> to vector<8x32xbf16>
    %35 = vector.extract_strided_slice %33 {offsets = [0, 32], sizes = [8, 32], strides = [1, 1]} : vector<8x128xbf16> to vector<8x32xbf16>
    %36 = vector.extract_strided_slice %33 {offsets = [0, 64], sizes = [8, 32], strides = [1, 1]} : vector<8x128xbf16> to vector<8x32xbf16>
    %37 = vector.extract_strided_slice %33 {offsets = [0, 96], sizes = [8, 32], strides = [1, 1]} : vector<8x128xbf16> to vector<8x32xbf16>
    %38 = vector.shape_cast %34 : vector<8x32xbf16> to vector<1x8x32xbf16>
    %39 = vector.shape_cast %35 : vector<8x32xbf16> to vector<1x8x32xbf16>
    %40 = vector.shape_cast %36 : vector<8x32xbf16> to vector<1x8x32xbf16>
    %41 = vector.shape_cast %37 : vector<8x32xbf16> to vector<1x8x32xbf16>
    %42 = tpu.concatenate %38, %39, %40, %41 in 0 : vector<1x8x32xbf16>, vector<1x8x32xbf16>, vector<1x8x32xbf16>, vector<1x8x32xbf16> -> vector<4x8x32xbf16>
    "tpu.trace_start"() <{level = 10 : i32, message = "hqd,hkd->hqk"}> : () -> ()
    %cst_8 = arith.constant dense<0.000000e+00> : vector<4x8x8xf32>
    %43 = tpu.matmul %22, %32, %cst_8 {dimension_numbers = #tpu.dot_dimension_numbers<[2], [2], [1], [1], [0, 0, 0, 1, 1, 1], [0], [0]>} : vector<4x8x32xbf16>, vector<4x8x32xbf16>, vector<4x8x8xf32> -> vector<4x8x8xf32>
    "tpu.trace_stop"() : () -> ()
    %c0_9 = arith.constant 0 : index
    %c0_10 = arith.constant 0 : index
    %c0_11 = arith.constant 0 : index
    %44 = vector.load %arg3[%c0_9, %c0_10, %c0_11] : memref<1x1x8xf32, #tpu.memory_space<vmem>>, vector<1x1x8xf32>
    %45 = vector.shape_cast %44 : vector<1x1x8xf32> to vector<1x8xf32>
    %46 = vector.shape_cast %45 : vector<1x8xf32> to vector<1x1x8xf32>
    %47 = vector.broadcast %46 : vector<1x1x8xf32> to vector<4x8x8xf32>
    %48 = arith.addf %43, %47 : vector<4x8x8xf32>
    %cst_12 = arith.constant dense<0xFF800000> : vector<4x8xf32>
    %49 = vector.multi_reduction <maximumf>, %48, %cst_12 [2] : vector<4x8x8xf32> to vector<4x8xf32>
    %50 = vector.shape_cast %49 : vector<4x8xf32> to vector<4x8x1xf32>
    %51 = vector.broadcast %50 : vector<4x8x1xf32> to vector<4x8x8xf32>
    %52 = arith.subf %48, %51 : vector<4x8x8xf32>
    %53 = math.exp %52 : vector<4x8x8xf32>
    %cst_13 = arith.constant dense<0.000000e+00> : vector<4x8xf32>
    %54 = vector.multi_reduction <add>, %53, %cst_13 [2] : vector<4x8x8xf32> to vector<4x8xf32>
    %55 = vector.shape_cast %54 : vector<4x8xf32> to vector<4x8x1xf32>
    %56 = tpu.reciprocal %55 {approx = true} : vector<4x8x1xf32> -> vector<4x8x1xf32>
    %57 = vector.broadcast %56 : vector<4x8x1xf32> to vector<4x8x8xf32>
    %58 = arith.mulf %53, %57 : vector<4x8x8xf32>
    %59 = arith.truncf %58 : vector<4x8x8xf32> to vector<4x8x8xbf16>
    "tpu.trace_start"() <{level = 10 : i32, message = "hqk,hkd->hqd"}> : () -> ()
    %cst_14 = arith.constant dense<0.000000e+00> : vector<4x8x32xf32>
    %60 = tpu.matmul %59, %42, %cst_14 {dimension_numbers = #tpu.dot_dimension_numbers<[2], [1], [1], [2], [0, 0, 0, 1, 1, 2], [0], [0]>} : vector<4x8x8xbf16>, vector<4x8x32xbf16>, vector<4x8x32xf32> -> vector<4x8x32xf32>
    "tpu.trace_stop"() : () -> ()
    %61 = vector.extract_strided_slice %60 {offsets = [0, 0, 0], sizes = [1, 8, 32], strides = [1, 1, 1]} : vector<4x8x32xf32> to vector<1x8x32xf32>
    %62 = vector.shape_cast %61 : vector<1x8x32xf32> to vector<8x32xf32>
    %63 = vector.extract_strided_slice %60 {offsets = [1, 0, 0], sizes = [1, 8, 32], strides = [1, 1, 1]} : vector<4x8x32xf32> to vector<1x8x32xf32>
    %64 = vector.shape_cast %63 : vector<1x8x32xf32> to vector<8x32xf32>
    %65 = vector.extract_strided_slice %60 {offsets = [2, 0, 0], sizes = [1, 8, 32], strides = [1, 1, 1]} : vector<4x8x32xf32> to vector<1x8x32xf32>
    %66 = vector.shape_cast %65 : vector<1x8x32xf32> to vector<8x32xf32>
    %67 = vector.extract_strided_slice %60 {offsets = [3, 0, 0], sizes = [1, 8, 32], strides = [1, 1, 1]} : vector<4x8x32xf32> to vector<1x8x32xf32>
    %68 = vector.shape_cast %67 : vector<1x8x32xf32> to vector<8x32xf32>
    %69 = tpu.concatenate %62, %64, %66, %68 in 1 : vector<8x32xf32>, vector<8x32xf32>, vector<8x32xf32>, vector<8x32xf32> -> vector<8x128xf32>
    %70 = arith.truncf %69 : vector<8x128xf32> to vector<8x128xbf16>
    %c0_15 = arith.constant 0 : index
    %c0_16 = arith.constant 0 : index
    %c0_17 = arith.constant 0 : index
    %71 = vector.load %arg8[%c0_15, %c0_16, %c0_17] : memref<1x128x128xbf16, #tpu.memory_space<vmem>>, vector<1x128x128xbf16>
    %72 = vector.shape_cast %71 : vector<1x128x128xbf16> to vector<128x128xbf16>
    %cst_18 = arith.constant dense<0.000000e+00> : vector<8x128xf32>
    %73 = tpu.matmul %70, %72, %cst_18 {dimension_numbers = #tpu.dot_dimension_numbers<[1], [0], [0], [1], [0, 0, 1, 1], [], []>} : vector<8x128xbf16>, vector<128x128xbf16>, vector<8x128xf32> -> vector<8x128xf32>
    %c0_19 = arith.constant 0 : index
    %c0_20 = arith.constant 0 : index
    %c0_21 = arith.constant 0 : index
    %74 = vector.load %arg9[%c0_19, %c0_20, %c0_21] : memref<1x1x128xf32, #tpu.memory_space<vmem>>, vector<1x1x128xf32>
    %75 = vector.shape_cast %74 : vector<1x1x128xf32> to vector<1x128xf32>
    %76 = vector.broadcast %75 : vector<1x128xf32> to vector<8x128xf32>
    %77 = arith.addf %73, %76 : vector<8x128xf32>
    %78 = arith.addf %77, %3 : vector<8x128xf32>
    %c0_22 = arith.constant 0 : index
    %c0_23 = arith.constant 0 : index
    %c0_24 = arith.constant 0 : index
    %79 = vector.load %arg10[%c0_22, %c0_23, %c0_24] : memref<1x1x128xf32, #tpu.memory_space<vmem>>, vector<1x1x128xf32>
    %80 = vector.shape_cast %79 : vector<1x1x128xf32> to vector<1x128xf32>
    %c0_25 = arith.constant 0 : index
    %c0_26 = arith.constant 0 : index
    %c0_27 = arith.constant 0 : index
    %81 = vector.load %arg11[%c0_25, %c0_26, %c0_27] : memref<1x1x128xf32, #tpu.memory_space<vmem>>, vector<1x1x128xf32>
    %82 = vector.shape_cast %81 : vector<1x1x128xf32> to vector<1x128xf32>
    %cst_28 = arith.constant dense<0.000000e+00> : vector<8xf32>
    %83 = vector.multi_reduction <add>, %78, %cst_28 [1] : vector<8x128xf32> to vector<8xf32>
    %84 = vector.shape_cast %83 : vector<8xf32> to vector<8x1xf32>
    %cst_29 = arith.constant 1.280000e+02 : f32
    %85 = vector.broadcast %cst_29 : f32 to vector<8x1xf32>
    %86 = arith.divf %84, %85 : vector<8x1xf32>
    %87 = vector.broadcast %86 : vector<8x1xf32> to vector<8x128xf32>
    %88 = arith.subf %78, %87 : vector<8x128xf32>
    %89 = arith.mulf %88, %88 : vector<8x128xf32>
    %cst_30 = arith.constant dense<0.000000e+00> : vector<8xf32>
    %90 = vector.multi_reduction <add>, %89, %cst_30 [1] : vector<8x128xf32> to vector<8xf32>
    %91 = vector.shape_cast %90 : vector<8xf32> to vector<8x1xf32>
    %cst_31 = arith.constant 1.280000e+02 : f32
    %92 = vector.broadcast %cst_31 : f32 to vector<8x1xf32>
    %93 = arith.divf %91, %92 : vector<8x1xf32>
    %cst_32 = arith.constant 9.99999996E-13 : f32
    %94 = vector.broadcast %cst_32 : f32 to vector<8x1xf32>
    %95 = arith.addf %93, %94 : vector<8x1xf32>
    %96 = math.rsqrt %95 : vector<8x1xf32>
    %97 = vector.broadcast %96 : vector<8x1xf32> to vector<8x128xf32>
    %98 = arith.mulf %88, %97 : vector<8x128xf32>
    %99 = vector.broadcast %80 : vector<1x128xf32> to vector<8x128xf32>
    %100 = arith.mulf %98, %99 : vector<8x128xf32>
    %101 = vector.broadcast %82 : vector<1x128xf32> to vector<8x128xf32>
    %102 = arith.addf %100, %101 : vector<8x128xf32>
    %103 = arith.truncf %102 : vector<8x128xf32> to vector<8x128xbf16>
    %c0_33 = arith.constant 0 : index
    %c0_34 = arith.constant 0 : index
    %c0_35 = arith.constant 0 : index
    %104 = vector.load %arg12[%c0_33, %c0_34, %c0_35] : memref<1x128x256xbf16, #tpu.memory_space<vmem>>, vector<1x128x256xbf16>
    %105 = vector.shape_cast %104 : vector<1x128x256xbf16> to vector<128x256xbf16>
    %cst_36 = arith.constant dense<0.000000e+00> : vector<8x256xf32>
    %106 = tpu.matmul %103, %105, %cst_36 {dimension_numbers = #tpu.dot_dimension_numbers<[1], [0], [0], [1], [0, 0, 1, 1], [], []>} : vector<8x128xbf16>, vector<128x256xbf16>, vector<8x256xf32> -> vector<8x256xf32>
    %c0_37 = arith.constant 0 : index
    %c0_38 = arith.constant 0 : index
    %c0_39 = arith.constant 0 : index
    %107 = vector.load %arg13[%c0_37, %c0_38, %c0_39] : memref<1x1x256xf32, #tpu.memory_space<vmem>>, vector<1x1x256xf32>
    %108 = vector.shape_cast %107 : vector<1x1x256xf32> to vector<1x256xf32>
    %109 = vector.broadcast %108 : vector<1x256xf32> to vector<8x256xf32>
    %110 = arith.addf %106, %109 : vector<8x256xf32>
    %cst_40 = arith.constant 5.000000e-01 : f32
    %111 = vector.broadcast %cst_40 : f32 to vector<8x256xf32>
    %112 = arith.mulf %111, %110 : vector<8x256xf32>
    %cst_41 = arith.constant 4.471500e-02 : f32
    %113 = vector.broadcast %cst_41 : f32 to vector<8x256xf32>
    %114 = arith.mulf %113, %110 : vector<8x256xf32>
    %115 = arith.mulf %114, %110 : vector<8x256xf32>
    %116 = arith.mulf %115, %110 : vector<8x256xf32>
    %117 = arith.addf %110, %116 : vector<8x256xf32>
    %cst_42 = arith.constant 0.797884583 : f32
    %118 = vector.broadcast %cst_42 : f32 to vector<8x256xf32>
    %119 = arith.mulf %118, %117 : vector<8x256xf32>
    %120 = math.tanh %119 : vector<8x256xf32>
    %cst_43 = arith.constant 1.000000e+00 : f32
    %121 = vector.broadcast %cst_43 : f32 to vector<8x256xf32>
    %122 = arith.addf %121, %120 : vector<8x256xf32>
    %123 = arith.mulf %112, %122 : vector<8x256xf32>
    %124 = arith.truncf %123 : vector<8x256xf32> to vector<8x256xbf16>
    %c0_44 = arith.constant 0 : index
    %c0_45 = arith.constant 0 : index
    %c0_46 = arith.constant 0 : index
    %125 = vector.load %arg14[%c0_44, %c0_45, %c0_46] : memref<1x256x128xbf16, #tpu.memory_space<vmem>>, vector<1x256x128xbf16>
    %126 = vector.shape_cast %125 : vector<1x256x128xbf16> to vector<256x128xbf16>
    %cst_47 = arith.constant dense<0.000000e+00> : vector<8x128xf32>
    %127 = tpu.matmul %124, %126, %cst_47 {dimension_numbers = #tpu.dot_dimension_numbers<[1], [0], [0], [1], [0, 0, 1, 1], [], []>} : vector<8x256xbf16>, vector<256x128xbf16>, vector<8x128xf32> -> vector<8x128xf32>
    %c0_48 = arith.constant 0 : index
    %c0_49 = arith.constant 0 : index
    %c0_50 = arith.constant 0 : index
    %128 = vector.load %arg15[%c0_48, %c0_49, %c0_50] : memref<1x1x128xf32, #tpu.memory_space<vmem>>, vector<1x1x128xf32>
    %129 = vector.shape_cast %128 : vector<1x1x128xf32> to vector<1x128xf32>
    %130 = vector.broadcast %129 : vector<1x128xf32> to vector<8x128xf32>
    %131 = arith.addf %127, %130 : vector<8x128xf32>
    %132 = arith.addf %131, %102 : vector<8x128xf32>
    %c0_51 = arith.constant 0 : index
    %c0_52 = arith.constant 0 : index
    %c0_53 = arith.constant 0 : index
    %133 = vector.load %arg16[%c0_51, %c0_52, %c0_53] : memref<1x1x128xf32, #tpu.memory_space<vmem>>, vector<1x1x128xf32>
    %134 = vector.shape_cast %133 : vector<1x1x128xf32> to vector<1x128xf32>
    %c0_54 = arith.constant 0 : index
    %c0_55 = arith.constant 0 : index
    %c0_56 = arith.constant 0 : index
    %135 = vector.load %arg17[%c0_54, %c0_55, %c0_56] : memref<1x1x128xf32, #tpu.memory_space<vmem>>, vector<1x1x128xf32>
    %136 = vector.shape_cast %135 : vector<1x1x128xf32> to vector<1x128xf32>
    %cst_57 = arith.constant dense<0.000000e+00> : vector<8xf32>
    %137 = vector.multi_reduction <add>, %132, %cst_57 [1] : vector<8x128xf32> to vector<8xf32>
    %138 = vector.shape_cast %137 : vector<8xf32> to vector<8x1xf32>
    %cst_58 = arith.constant 1.280000e+02 : f32
    %139 = vector.broadcast %cst_58 : f32 to vector<8x1xf32>
    %140 = arith.divf %138, %139 : vector<8x1xf32>
    %141 = vector.broadcast %140 : vector<8x1xf32> to vector<8x128xf32>
    %142 = arith.subf %132, %141 : vector<8x128xf32>
    %143 = arith.mulf %142, %142 : vector<8x128xf32>
    %cst_59 = arith.constant dense<0.000000e+00> : vector<8xf32>
    %144 = vector.multi_reduction <add>, %143, %cst_59 [1] : vector<8x128xf32> to vector<8xf32>
    %145 = vector.shape_cast %144 : vector<8xf32> to vector<8x1xf32>
    %cst_60 = arith.constant 1.280000e+02 : f32
    %146 = vector.broadcast %cst_60 : f32 to vector<8x1xf32>
    %147 = arith.divf %145, %146 : vector<8x1xf32>
    %cst_61 = arith.constant 9.99999996E-13 : f32
    %148 = vector.broadcast %cst_61 : f32 to vector<8x1xf32>
    %149 = arith.addf %147, %148 : vector<8x1xf32>
    %150 = math.rsqrt %149 : vector<8x1xf32>
    %151 = vector.broadcast %150 : vector<8x1xf32> to vector<8x128xf32>
    %152 = arith.mulf %142, %151 : vector<8x128xf32>
    %153 = vector.broadcast %134 : vector<1x128xf32> to vector<8x128xf32>
    %154 = arith.mulf %152, %153 : vector<8x128xf32>
    %155 = vector.broadcast %136 : vector<1x128xf32> to vector<8x128xf32>
    %156 = arith.addf %154, %155 : vector<8x128xf32>
    %c0_62 = arith.constant 0 : index
    %c0_63 = arith.constant 0 : index
    %157 = vector.load %arg25[%c0_62, %c0_63] : memref<8x128xf32, #tpu.memory_space<vmem>>, vector<8x128xf32>
    tpu.vector_store %arg25[%c0_62, %c0_63], %156 {strides = array<i32>} : memref<8x128xf32, #tpu.memory_space<vmem>>, vector<8x128xf32>,
    %c3_i32 = arith.constant 3 : i32
    %158 = arith.cmpi eq, %arg1, %c3_i32 : i32
    %159 = arith.extui %158 : i1 to i32
    %c0_i32_64 = arith.constant 0 : i32
    %160 = arith.cmpi ne, %159, %c0_i32_64 : i32
    scf.if %160 {
      %161 = vector.extract_strided_slice %156 {offsets = [0, 0], sizes = [1, 128], strides = [1, 1]} : vector<8x128xf32> to vector<1x128xf32>
      %162 = arith.truncf %161 : vector<1x128xf32> to vector<1x128xbf16>
      %c0_65 = arith.constant 0 : index
      %c0_66 = arith.constant 0 : index
      %163 = vector.load %arg18[%c0_65, %c0_66] : memref<128x128xbf16, #tpu.memory_space<vmem>>, vector<128x128xbf16>
      %cst_67 = arith.constant dense<0.000000e+00> : vector<1x128xf32>
      %164 = tpu.matmul %162, %163, %cst_67 {dimension_numbers = #tpu.dot_dimension_numbers<[1], [0], [0], [1], [0, 0, 1, 1], [], []>} : vector<1x128xbf16>, vector<128x128xbf16>, vector<1x128xf32> -> vector<1x128xf32>
      %c0_68 = arith.constant 0 : index
      %c0_69 = arith.constant 0 : index
      %165 = vector.load %arg19[%c0_68, %c0_69] : memref<1x128xf32, #tpu.memory_space<vmem>>, vector<1x128xf32>
      %166 = arith.addf %164, %165 : vector<1x128xf32>
      %167 = math.tanh %166 : vector<1x128xf32>
      %c0_70 = arith.constant 0 : index
      %c0_71 = arith.constant 0 : index
      %168 = vector.load %arg20[%c0_70, %c0_71] : memref<128x128xf32, #tpu.memory_space<vmem>>, vector<128x128xf32>
      %cst_72 = arith.constant dense<0.000000e+00> : vector<1x128xf32>
      %169 = tpu.matmul %167, %168, %cst_72 {dimension_numbers = #tpu.dot_dimension_numbers<[1], [0], [0], [1], [0, 0, 1, 1], [], []>} : vector<1x128xf32>, vector<128x128xf32>, vector<1x128xf32> -> vector<1x128xf32>
      %c0_73 = arith.constant 0 : index
      %c0_74 = arith.constant 0 : index
      %170 = vector.load %arg21[%c0_73, %c0_74] : memref<1x128xf32, #tpu.memory_space<vmem>>, vector<1x128xf32>
      %171 = arith.addf %169, %170 : vector<1x128xf32>
      %c0_75 = arith.constant 0 : index
      %c0_76 = arith.constant 0 : index
      %172 = vector.load %arg22[%c0_75, %c0_76] : memref<128x128xf32, #tpu.memory_space<vmem>>, vector<128x128xf32>
      %cst_77 = arith.constant dense<0.000000e+00> : vector<1x128xf32>
      %173 = tpu.matmul %171, %172, %cst_77 {dimension_numbers = #tpu.dot_dimension_numbers<[1], [0], [0], [1], [0, 0, 1, 1], [], []>} : vector<1x128xf32>, vector<128x128xf32>, vector<1x128xf32> -> vector<1x128xf32>
      %c0_78 = arith.constant 0 : index
      %c0_79 = arith.constant 0 : index
      %174 = vector.load %arg23[%c0_78, %c0_79] : memref<1x128xf32, #tpu.memory_space<vmem>>, vector<1x128xf32>
      %175 = arith.addf %173, %174 : vector<1x128xf32>
      %176 = vector.shape_cast %175 : vector<1x128xf32> to vector<1x128xf32>
      %177 = vector.broadcast %176 : vector<1x128xf32> to vector<8x128xf32>
      %c0_80 = arith.constant 0 : index
      %c0_81 = arith.constant 0 : index
      %c0_82 = arith.constant 0 : index
      %178 = vector.load %arg24[%c0_80, %c0_81, %c0_82] : memref<1x8x128xf32, #tpu.memory_space<vmem>>, vector<1x8x128xf32>
      %179 = vector.shape_cast %178 : vector<1x8x128xf32> to vector<8x128xf32>
      %180 = vector.shape_cast %177 : vector<8x128xf32> to vector<1x8x128xf32>
      tpu.vector_store %arg24[%c0_80, %c0_81, %c0_82], %180 {strides = array<i32>} : memref<1x8x128xf32, #tpu.memory_space<vmem>>, vector<1x8x128xf32>,
    } else {
    }
    return
  }
  func.func @transform_0(%arg0: i32, %arg1: i32) -> (i32, i32) {
    %c0_i32 = arith.constant 0 : i32
    %c0_i32_0 = arith.constant 0 : i32
    return %arg0, %c0_i32 : i32, i32
  }
  func.func @transform_1(%arg0: i32, %arg1: i32) -> (i32, i32, i32) {
    %c0_i32 = arith.constant 0 : i32
    %c0_i32_0 = arith.constant 0 : i32
    %c0_i32_1 = arith.constant 0 : i32
    return %arg0, %c0_i32, %c0_i32_0 : i32, i32, i32
  }
  func.func @transform_2(%arg0: i32, %arg1: i32) -> (i32, i32) {
    %c0_i32 = arith.constant 0 : i32
    %c0_i32_0 = arith.constant 0 : i32
    %c0_i32_1 = arith.constant 0 : i32
    return %c0_i32, %c0_i32_0 : i32, i32
  }
  func.func @transform_3(%arg0: i32, %arg1: i32) -> (i32, i32) {
    %c0_i32 = arith.constant 0 : i32
    %c0_i32_0 = arith.constant 0 : i32
    %c0_i32_1 = arith.constant 0 : i32
    return %c0_i32, %c0_i32_0 : i32, i32
  }
  func.func @transform_4(%arg0: i32, %arg1: i32) -> (i32, i32, i32) {
    %c0_i32 = arith.constant 0 : i32
    %c0_i32_0 = arith.constant 0 : i32
    %c0_i32_1 = arith.constant 0 : i32
    return %arg1, %c0_i32, %c0_i32_0 : i32, i32, i32
  }
  func.func @transform_5(%arg0: i32, %arg1: i32) -> (i32, i32, i32) {
    %c0_i32 = arith.constant 0 : i32
    %c0_i32_0 = arith.constant 0 : i32
    %c0_i32_1 = arith.constant 0 : i32
    return %arg1, %c0_i32, %c0_i32_0 : i32, i32, i32
  }
  func.func @transform_6(%arg0: i32, %arg1: i32) -> (i32, i32, i32) {
    %c0_i32 = arith.constant 0 : i32
    %c0_i32_0 = arith.constant 0 : i32
    %c0_i32_1 = arith.constant 0 : i32
    return %arg1, %c0_i32, %c0_i32_0 : i32, i32, i32
  }
  func.func @transform_7(%arg0: i32, %arg1: i32) -> (i32, i32, i32) {
    %c0_i32 = arith.constant 0 : i32
    %c0_i32_0 = arith.constant 0 : i32
    %c0_i32_1 = arith.constant 0 : i32
    return %arg1, %c0_i32, %c0_i32_0 : i32, i32, i32
  }
  func.func @transform_8(%arg0: i32, %arg1: i32) -> (i32, i32, i32) {
    %c0_i32 = arith.constant 0 : i32
    %c0_i32_0 = arith.constant 0 : i32
    %c0_i32_1 = arith.constant 0 : i32
    return %arg1, %c0_i32, %c0_i32_0 : i32, i32, i32
  }
  func.func @transform_9(%arg0: i32, %arg1: i32) -> (i32, i32, i32) {
    %c0_i32 = arith.constant 0 : i32
    %c0_i32_0 = arith.constant 0 : i32
    %c0_i32_1 = arith.constant 0 : i32
    return %arg1, %c0_i32, %c0_i32_0 : i32, i32, i32
  }
  func.func @transform_10(%arg0: i32, %arg1: i32) -> (i32, i32, i32) {
    %c0_i32 = arith.constant 0 : i32
    %c0_i32_0 = arith.constant 0 : i32
    %c0_i32_1 = arith.constant 0 : i32
    return %arg1, %c0_i32, %c0_i32_0 : i32, i32, i32
  }
  func.func @transform_11(%arg0: i32, %arg1: i32) -> (i32, i32, i32) {
    %c0_i32 = arith.constant 0 : i32
    %c0_i32_0 = arith.constant 0 : i32
    %c0_i32_1 = arith.constant 0 : i32
    return %arg1, %c0_i32, %c0_i32_0 : i32, i32, i32
  }
  func.func @transform_12(%arg0: i32, %arg1: i32) -> (i32, i32, i32) {
    %c0_i32 = arith.constant 0 : i32
    %c0_i32_0 = arith.constant 0 : i32
    %c0_i32_1 = arith.constant 0 : i32
    return %arg1, %c0_i32, %c0_i32_0 : i32, i32, i32
  }
  func.func @transform_13(%arg0: i32, %arg1: i32) -> (i32, i32, i32) {
    %c0_i32 = arith.constant 0 : i32
    %c0_i32_0 = arith.constant 0 : i32
    %c0_i32_1 = arith.constant 0 : i32
    return %arg1, %c0_i32, %c0_i32_0 : i32, i32, i32
  }
  func.func @transform_14(%arg0: i32, %arg1: i32) -> (i32, i32, i32) {
    %c0_i32 = arith.constant 0 : i32
    %c0_i32_0 = arith.constant 0 : i32
    %c0_i32_1 = arith.constant 0 : i32
    return %arg1, %c0_i32, %c0_i32_0 : i32, i32, i32
  }
  func.func @transform_15(%arg0: i32, %arg1: i32) -> (i32, i32, i32) {
    %c0_i32 = arith.constant 0 : i32
    %c0_i32_0 = arith.constant 0 : i32
    %c0_i32_1 = arith.constant 0 : i32
    return %arg1, %c0_i32, %c0_i32_0 : i32, i32, i32
  }
  func.func @transform_16(%arg0: i32, %arg1: i32) -> (i32, i32) {
    %c0_i32 = arith.constant 0 : i32
    %c0_i32_0 = arith.constant 0 : i32
    %c0_i32_1 = arith.constant 0 : i32
    return %c0_i32, %c0_i32_0 : i32, i32
  }
  func.func @transform_17(%arg0: i32, %arg1: i32) -> (i32, i32) {
    %c0_i32 = arith.constant 0 : i32
    %c0_i32_0 = arith.constant 0 : i32
    %c0_i32_1 = arith.constant 0 : i32
    return %c0_i32, %c0_i32_0 : i32, i32
  }
  func.func @transform_18(%arg0: i32, %arg1: i32) -> (i32, i32) {
    %c0_i32 = arith.constant 0 : i32
    %c0_i32_0 = arith.constant 0 : i32
    %c0_i32_1 = arith.constant 0 : i32
    return %c0_i32, %c0_i32_0 : i32, i32
  }
  func.func @transform_19(%arg0: i32, %arg1: i32) -> (i32, i32) {
    %c0_i32 = arith.constant 0 : i32
    %c0_i32_0 = arith.constant 0 : i32
    %c0_i32_1 = arith.constant 0 : i32
    return %c0_i32, %c0_i32_0 : i32, i32
  }
  func.func @transform_20(%arg0: i32, %arg1: i32) -> (i32, i32) {
    %c0_i32 = arith.constant 0 : i32
    %c0_i32_0 = arith.constant 0 : i32
    %c0_i32_1 = arith.constant 0 : i32
    return %c0_i32, %c0_i32_0 : i32, i32
  }
  func.func @transform_21(%arg0: i32, %arg1: i32) -> (i32, i32) {
    %c0_i32 = arith.constant 0 : i32
    %c0_i32_0 = arith.constant 0 : i32
    %c0_i32_1 = arith.constant 0 : i32
    return %c0_i32, %c0_i32_0 : i32, i32
  }
  func.func @transform_22(%arg0: i32, %arg1: i32) -> (i32, i32, i32) {
    %c0_i32 = arith.constant 0 : i32
    %c0_i32_0 = arith.constant 0 : i32
    %c0_i32_1 = arith.constant 0 : i32
    return %arg0, %c0_i32, %c0_i32_0 : i32, i32, i32
  }
}

</mosaic_0001>

<llo_original>
// kernel: bert_for_features.1
$region0: #{bert_for_features.1}
  #allocation0 [shape = 'u32[]', space=smem, size = 0x4, offset = 0x4, fixed_abs, tag = 'smem constant byte address 0x4 - core index']
  #allocation1 [shape = 'u32[144,128]{1,0:T(1,128)}', space=vmem, size = 0x12000, scoped, tag = 'internal scratch']
  #allocation2 [shape = 'f32[8,128]{1,0:T(8,128)}', space=vmem, size = 0x1000, scoped, tag = 'scratch operand']
  %s0 = inlined_call_operand.vmem [shape: f32[16,128], index: 0, kind: input, shape index: {}]
  %s1 = inlined_call_operand.vmem [shape: f32[2,1,8], index: 1, kind: input, shape index: {}]
  %s2 = inlined_call_operand.vmem [shape: f32[1,128], index: 2, kind: input, shape index: {}]
  %s3 = inlined_call_operand.vmem [shape: f32[1,128], index: 3, kind: input, shape index: {}]
  %s4 = inlined_call_operand.hbm [shape: bf16[4,128,384], index: 4, kind: input, shape index: {}]
  %s5 = inlined_call_operand.vmem [shape: f32[4,1,384], index: 5, kind: input, shape index: {}]
  %s6 = inlined_call_operand.hbm [shape: bf16[4,128,128], index: 6, kind: input, shape index: {}]
  %s7 = inlined_call_operand.vmem [shape: f32[4,1,128], index: 7, kind: input, shape index: {}]
  %s8 = inlined_call_operand.vmem [shape: f32[4,1,128], index: 8, kind: input, shape index: {}]
  %s9 = inlined_call_operand.vmem [shape: f32[4,1,128], index: 9, kind: input, shape index: {}]
  %s10 = inlined_call_operand.hbm [shape: bf16[4,128,256], index: 10, kind: input, shape index: {}]
  %s11 = inlined_call_operand.vmem [shape: f32[4,1,256], index: 11, kind: input, shape index: {}]
  %s12 = inlined_call_operand.hbm [shape: bf16[4,256,128], index: 12, kind: input, shape index: {}]
  %s13 = inlined_call_operand.vmem [shape: f32[4,1,128], index: 13, kind: input, shape index: {}]
  %s14 = inlined_call_operand.vmem [shape: f32[4,1,128], index: 14, kind: input, shape index: {}]
  %s15 = inlined_call_operand.vmem [shape: f32[4,1,128], index: 15, kind: input, shape index: {}]
  %s16 = inlined_call_operand.vmem [shape: bf16[128,128], index: 16, kind: input, shape index: {}]
  %s17 = inlined_call_operand.vmem [shape: f32[1,128], index: 17, kind: input, shape index: {}]
  %s18 = inlined_call_operand.vmem [shape: f32[128,128], index: 18, kind: input, shape index: {}]
  %s19 = inlined_call_operand.vmem [shape: f32[1,128], index: 19, kind: input, shape index: {}]
  %s20 = inlined_call_operand.vmem [shape: f32[128,128], index: 20, kind: input, shape index: {}]
  %s21 = inlined_call_operand.vmem [shape: f32[1,128], index: 21, kind: input, shape index: {}]
  %s22 = inlined_call_operand.vmem [shape: f32[2,8,128], index: 22, kind: output, shape index: {}]
  %s23 = sld [smem:[#allocation0]]
  $region145: #{bert_for_features.1} parent=0
    _
  %s25 = ssub.s32 1, %s23
  %s26 = scalar_select 0, %s25, %s23
  $region1: #{bert_for_features.1} parent=0
    #allocation3 [shape = 'u8[196608]{0}', space=vmem, size = 0x30000, scoped, tag = 'input window, operand 4']
    #allocation4 [shape = 's32[2]{0}', space=sflag, size = 0x8, scoped, tag = 'scoped memory for bert_for_features.1']
    #allocation5 [shape = 'u8[65536]{0}', space=vmem, size = 0x10000, scoped, tag = 'input window, operand 6']
    #allocation6 [shape = 's32[2]{0}', space=sflag, size = 0x8, scoped, tag = 'scoped memory for bert_for_features.1']
    #allocation7 [shape = 'u8[131072]{0}', space=vmem, size = 0x20000, scoped, tag = 'input window, operand 10']
    #allocation8 [shape = 'u8[131072]{0}', space=vmem, size = 0x20000, scoped, tag = 'input window, operand 12']
    #allocation9 [shape = 's32[2]{0}', space=sflag, size = 0x8, scoped, tag = 'scoped memory for bert_for_features.1']
    %27 = vsyncpa [#allocation4], 0
    %s28 = scalar_lea.sflag [#allocation4], 1
    %29 = vsyncpa %s28, 0
    %30 = vsyncpa [#allocation6], 0
    %s31 = scalar_lea.sflag [#allocation6], 1
    %32 = vsyncpa %s31, 0
    %33 = vsyncpa [#allocation9], 0
    %s34 = scalar_lea.sflag [#allocation9], 1
    %35 = vsyncpa %s34, 0
    loop: start=0, step=1, limit=10
    $region2: #{bert_for_features.1} parent=1 // loop_pre_header
      _
    $region3: #{bert_for_features.1} parent=1 // loop_header
      %s37 = sphi 0, %s41
      %p38 = scmp.ge.s32.totalorder %s37, 10
      %s44 = sphi 0, %s56
      %s45 = sphi 0, %s52
      %s46 = sphi 0, %s44
      %s47 = sphi 0, %s45
      %s48 = sphi 0, %s46
      %s49 = sphi 0, %s47
      %s59 = sphi 0, %s61
      %s62 = sphi 0, %s59
      %s63 = sphi 0, %s62
      %s79 = sphi 0, %s63
      %s85 = sphi 0, %s87
      %s88 = sphi 0, %s85
      %s89 = sphi 0, %s88
      %s105 = sphi 0, %s89
      %s109 = sphi 0, %s109
      %s111 = sphi 0, %s109
      %s112 = sphi 0, %s111
      %s126 = sphi 0, %s112
      %s130 = sphi 0, %s130
      %s132 = sphi 0, %s130
      %s133 = sphi 0, %s132
      %s147 = sphi 0, %s133
      %s153 = sphi 0, %s155
      %s156 = sphi 0, %s153
      %s157 = sphi 0, %s156
      %s173 = sphi 0, %s157
      %s179 = sphi 0, %s181
      %s182 = sphi 0, %s179
      %s183 = sphi 0, %s182
      %s199 = sphi 0, %s183
      %s205 = sphi 0, %s207
      %s208 = sphi 0, %s205
      %s209 = sphi 0, %s208
      %s225 = sphi 0, %s209
      %s231 = sphi 0, %s233
      %s234 = sphi 0, %s231
      %s235 = sphi 0, %s234
      %s251 = sphi 0, %s235
      %s257 = sphi 0, %s259
      %s260 = sphi 0, %s257
      %s261 = sphi 0, %s260
      %s277 = sphi 0, %s261
      %s283 = sphi 0, %s285
      %s286 = sphi 0, %s283
      %s287 = sphi 0, %s286
      %s303 = sphi 0, %s287
      %s309 = sphi 0, %s311
      %s312 = sphi 0, %s309
      %s313 = sphi 0, %s312
      %s329 = sphi 0, %s313
      %s335 = sphi 0, %s337
      %s338 = sphi 0, %s335
      %s339 = sphi 0, %s338
      %s355 = sphi 0, %s339
      %s361 = sphi 0, %s363
      %s364 = sphi 0, %s361
      %s365 = sphi 0, %s364
      %s381 = sphi 0, %s365
      %s387 = sphi 0, %s389
      %s390 = sphi 0, %s387
      %s391 = sphi 0, %s390
      %s407 = sphi 0, %s391
      %s413 = sphi 0, %s415
      %s416 = sphi 0, %s413
      %s417 = sphi 0, %s416
      %s433 = sphi 0, %s417
      %s439 = sphi 0, %s441
      %s442 = sphi 0, %s439
      %s443 = sphi 0, %s442
      %s459 = sphi 0, %s443
      %s463 = sphi 0, %s463
      %s465 = sphi 0, %s463
      %s466 = sphi 0, %s465
      %s480 = sphi 0, %s466
      %s484 = sphi 0, %s484
      %s486 = sphi 0, %s484
      %s487 = sphi 0, %s486
      %s501 = sphi 0, %s487
      %s505 = sphi 0, %s505
      %s507 = sphi 0, %s505
      %s508 = sphi 0, %s507
      %s522 = sphi 0, %s508
      %s526 = sphi 0, %s526
      %s528 = sphi 0, %s526
      %s529 = sphi 0, %s528
      %s543 = sphi 0, %s529
      %s547 = sphi 0, %s547
      %s549 = sphi 0, %s547
      %s550 = sphi 0, %s549
      %s564 = sphi 0, %s550
      %s568 = sphi 0, %s568
      %s570 = sphi 0, %s568
      %s571 = sphi 0, %s570
      %s585 = sphi 0, %s571
      %s591 = sphi 0, %s593
      %s594 = sphi 0, %s591
      %s595 = sphi 0, %s594
      %s611 = sphi 0, %s595
    $region4: #{bert_for_features.1} parent=1 // loop_header_branch
      %40 = sbr.rel (%p38) target = $region8
    $region5: #{bert_for_features.1} parent=1 // loop_body
      %s42 = ssub.s32 %s37, 1
      %s43 = ssub.s32 %s37, 2
      %s50 = sadd.s32 1, %s45
      %p51 = scmp.ge.s32.totalorder %s50, 4
      %s52 = scalar_select %p51, 0, %s50
      %s53 = sadd.s32 1, %s44
      %s54 = scalar_select %p51, %s53, %s44
      %p55 = scmp.ge.s32.totalorder %s54, 2
      %s56 = scalar_select %p55, 0, %s54
      %s57 = ssub.s32 %s44, %s56
      %p58 = scmp.eq.s32.totalorder %s57, 0
      %s60 = sadd.s32 %s59, 1
      %s61 = scalar_select %p58, %s59, %s60
      %p64 = pneg %p58
      %p65 = scmp.eq.s32.totalorder %s37, 7
      %p66 = por %p64, %p65
      %p67 = scmp.ne.s32.totalorder %s59, %s62
      %p68 = scmp.eq.s32.totalorder %s37, 0
      %p69 = por %p67, %p68
      %p70 = scmp.ne.s32.totalorder %s59, %s62
      %p71 = scmp.eq.s32.totalorder %s42, 7
      %p72 = por %p70, %p71
      %p73 = scmp.ne.s32.totalorder %s62, %s63
      %p74 = scmp.eq.s32.totalorder %s42, 0
      %p75 = por %p73, %p74
      %p76 = scmp.ne.s32.totalorder %s62, %s63
      %p77 = scmp.eq.s32.totalorder %s43, 7
      %p78 = por %p76, %p77
      %p80 = scmp.ne.s32.totalorder %s63, %s79
      %p81 = scmp.eq.s32.totalorder %s43, 0
      %p82 = por %p80, %p81
      %s83 = ssub.s32 %s44, %s56
      %p84 = scmp.eq.s32.totalorder %s83, 0
      %s86 = sadd.s32 %s85, 1
      %s87 = scalar_select %p84, %s85, %s86
      %p90 = pneg %p84
      %p91 = scmp.eq.s32.totalorder %s37, 7
      %p92 = por %p90, %p91
      %p93 = scmp.ne.s32.totalorder %s85, %s88
      %p94 = scmp.eq.s32.totalorder %s37, 0
      %p95 = por %p93, %p94
      %p96 = scmp.ne.s32.totalorder %s85, %s88
      %p97 = scmp.eq.s32.totalorder %s42, 7
      %p98 = por %p96, %p97
      %p99 = scmp.ne.s32.totalorder %s88, %s89
      %p100 = scmp.eq.s32.totalorder %s42, 0
      %p101 = por %p99, %p100
      %p102 = scmp.ne.s32.totalorder %s88, %s89
      %p103 = scmp.eq.s32.totalorder %s43, 7
      %p104 = por %p102, %p103
      %p106 = scmp.ne.s32.totalorder %s89, %s105
      %p107 = scmp.eq.s32.totalorder %s43, 0
      %p108 = por %p106, %p107
      %s110 = sadd.s32 %s109, 1
      %p113 = scmp.eq.s32.totalorder %s37, 7
      %p114 = scmp.ne.s32.totalorder %s109, %s111
      %p115 = scmp.eq.s32.totalorder %s37, 0
      %p116 = por %p114, %p115
      %p117 = scmp.ne.s32.totalorder %s109, %s111
      %p118 = scmp.eq.s32.totalorder %s42, 7
      %p119 = por %p117, %p118
      %p120 = scmp.ne.s32.totalorder %s111, %s112
      %p121 = scmp.eq.s32.totalorder %s42, 0
      %p122 = por %p120, %p121
      %p123 = scmp.ne.s32.totalorder %s111, %s112
      %p124 = scmp.eq.s32.totalorder %s43, 7
      %p125 = por %p123, %p124
      %p127 = scmp.ne.s32.totalorder %s112, %s126
      %p128 = scmp.eq.s32.totalorder %s43, 0
      %p129 = por %p127, %p128
      %s131 = sadd.s32 %s130, 1
      %p134 = scmp.eq.s32.totalorder %s37, 7
      %p135 = scmp.ne.s32.totalorder %s130, %s132
      %p136 = scmp.eq.s32.totalorder %s37, 0
      %p137 = por %p135, %p136
      %p138 = scmp.ne.s32.totalorder %s130, %s132
      %p139 = scmp.eq.s32.totalorder %s42, 7
      %p140 = por %p138, %p139
      %p141 = scmp.ne.s32.totalorder %s132, %s133
      %p142 = scmp.eq.s32.totalorder %s42, 0
      %p143 = por %p141, %p142
      %p144 = scmp.ne.s32.totalorder %s132, %s133
      %p145 = scmp.eq.s32.totalorder %s43, 7
      %p146 = por %p144, %p145
      %p148 = scmp.ne.s32.totalorder %s133, %s147
      %p149 = scmp.eq.s32.totalorder %s43, 0
      %p150 = por %p148, %p149
      %s151 = ssub.s32 %s45, %s52
      %p152 = scmp.eq.s32.totalorder %s151, 0
      %s154 = sadd.s32 %s153, 1
      %s155 = scalar_select %p152, %s153, %s154
      %p158 = pneg %p152
      %p159 = scmp.eq.s32.totalorder %s37, 7
      %p160 = por %p158, %p159
      %p161 = scmp.ne.s32.totalorder %s153, %s156
      %p162 = scmp.eq.s32.totalorder %s37, 0
      %p163 = por %p161, %p162
      %p164 = scmp.ne.s32.totalorder %s153, %s156
      %p165 = scmp.eq.s32.totalorder %s42, 7
      %p166 = por %p164, %p165
      %p167 = scmp.ne.s32.totalorder %s156, %s157
      %p168 = scmp.eq.s32.totalorder %s42, 0
      %p169 = por %p167, %p168
      %p170 = scmp.ne.s32.totalorder %s156, %s157
      %p171 = scmp.eq.s32.totalorder %s43, 7
      %p172 = por %p170, %p171
      %p174 = scmp.ne.s32.totalorder %s157, %s173
      %p175 = scmp.eq.s32.totalorder %s43, 0
      %p176 = por %p174, %p175
      %s177 = ssub.s32 %s45, %s52
      %p178 = scmp.eq.s32.totalorder %s177, 0
      %s180 = sadd.s32 %s179, 1
      %s181 = scalar_select %p178, %s179, %s180
      %p184 = pneg %p178
      %p185 = scmp.eq.s32.totalorder %s37, 7
      %p186 = por %p184, %p185
      %p187 = scmp.ne.s32.totalorder %s179, %s182
      %p188 = scmp.eq.s32.totalorder %s37, 0
      %p189 = por %p187, %p188
      %p190 = scmp.ne.s32.totalorder %s179, %s182
      %p191 = scmp.eq.s32.totalorder %s42, 7
      %p192 = por %p190, %p191
      %p193 = scmp.ne.s32.totalorder %s182, %s183
      %p194 = scmp.eq.s32.totalorder %s42, 0
      %p195 = por %p193, %p194
      %p196 = scmp.ne.s32.totalorder %s182, %s183
      %p197 = scmp.eq.s32.totalorder %s43, 7
      %p198 = por %p196, %p197
      %p200 = scmp.ne.s32.totalorder %s183, %s199
      %p201 = scmp.eq.s32.totalorder %s43, 0
      %p202 = por %p200, %p201
      %s203 = ssub.s32 %s45, %s52
      %p204 = scmp.eq.s32.totalorder %s203, 0
      %s206 = sadd.s32 %s205, 1
      %s207 = scalar_select %p204, %s205, %s206
      %p210 = pneg %p204
      %p211 = scmp.eq.s32.totalorder %s37, 7
      %p212 = por %p210, %p211
      %p213 = scmp.ne.s32.totalorder %s205, %s208
      %p214 = scmp.eq.s32.totalorder %s37, 0
      %p215 = por %p213, %p214
      %p216 = scmp.ne.s32.totalorder %s205, %s208
      %p217 = scmp.eq.s32.totalorder %s42, 7
      %p218 = por %p216, %p217
      %p219 = scmp.ne.s32.totalorder %s208, %s209
      %p220 = scmp.eq.s32.totalorder %s42, 0
      %p221 = por %p219, %p220
      %p222 = scmp.ne.s32.totalorder %s208, %s209
      %p223 = scmp.eq.s32.totalorder %s43, 7
      %p224 = por %p222, %p223
      %p226 = scmp.ne.s32.totalorder %s209, %s225
      %p227 = scmp.eq.s32.totalorder %s43, 0
      %p228 = por %p226, %p227
      %s229 = ssub.s32 %s45, %s52
      %p230 = scmp.eq.s32.totalorder %s229, 0
      %s232 = sadd.s32 %s231, 1
      %s233 = scalar_select %p230, %s231, %s232
      %p236 = pneg %p230
      %p237 = scmp.eq.s32.totalorder %s37, 7
      %p238 = por %p236, %p237
      %p239 = scmp.ne.s32.totalorder %s231, %s234
      %p240 = scmp.eq.s32.totalorder %s37, 0
      %p241 = por %p239, %p240
      %p242 = scmp.ne.s32.totalorder %s231, %s234
      %p243 = scmp.eq.s32.totalorder %s42, 7
      %p244 = por %p242, %p243
      %p245 = scmp.ne.s32.totalorder %s234, %s235
      %p246 = scmp.eq.s32.totalorder %s42, 0
      %p247 = por %p245, %p246
      %p248 = scmp.ne.s32.totalorder %s234, %s235
      %p249 = scmp.eq.s32.totalorder %s43, 7
      %p250 = por %p248, %p249
      %p252 = scmp.ne.s32.totalorder %s235, %s251
      %p253 = scmp.eq.s32.totalorder %s43, 0
      %p254 = por %p252, %p253
      %s255 = ssub.s32 %s45, %s52
      %p256 = scmp.eq.s32.totalorder %s255, 0
      %s258 = sadd.s32 %s257, 1
      %s259 = scalar_select %p256, %s257, %s258
      %p262 = pneg %p256
      %p263 = scmp.eq.s32.totalorder %s37, 7
      %p264 = por %p262, %p263
      %p265 = scmp.ne.s32.totalorder %s257, %s260
      %p266 = scmp.eq.s32.totalorder %s37, 0
      %p267 = por %p265, %p266
      %p268 = scmp.ne.s32.totalorder %s257, %s260
      %p269 = scmp.eq.s32.totalorder %s42, 7
      %p270 = por %p268, %p269
      %p271 = scmp.ne.s32.totalorder %s260, %s261
      %p272 = scmp.eq.s32.totalorder %s42, 0
      %p273 = por %p271, %p272
      %p274 = scmp.ne.s32.totalorder %s260, %s261
      %p275 = scmp.eq.s32.totalorder %s43, 7
      %p276 = por %p274, %p275
      %p278 = scmp.ne.s32.totalorder %s261, %s277
      %p279 = scmp.eq.s32.totalorder %s43, 0
      %p280 = por %p278, %p279
      %s281 = ssub.s32 %s45, %s52
      %p282 = scmp.eq.s32.totalorder %s281, 0
      %s284 = sadd.s32 %s283, 1
      %s285 = scalar_select %p282, %s283, %s284
      %p288 = pneg %p282
      %p289 = scmp.eq.s32.totalorder %s37, 7
      %p290 = por %p288, %p289
      %p291 = scmp.ne.s32.totalorder %s283, %s286
      %p292 = scmp.eq.s32.totalorder %s37, 0
      %p293 = por %p291, %p292
      %p294 = scmp.ne.s32.totalorder %s283, %s286
      %p295 = scmp.eq.s32.totalorder %s42, 7
      %p296 = por %p294, %p295
      %p297 = scmp.ne.s32.totalorder %s286, %s287
      %p298 = scmp.eq.s32.totalorder %s42, 0
      %p299 = por %p297, %p298
      %p300 = scmp.ne.s32.totalorder %s286, %s287
      %p301 = scmp.eq.s32.totalorder %s43, 7
      %p302 = por %p300, %p301
      %p304 = scmp.ne.s32.totalorder %s287, %s303
      %p305 = scmp.eq.s32.totalorder %s43, 0
      %p306 = por %p304, %p305
      %s307 = ssub.s32 %s45, %s52
      %p308 = scmp.eq.s32.totalorder %s307, 0
      %s310 = sadd.s32 %s309, 1
      %s311 = scalar_select %p308, %s309, %s310
      %p314 = pneg %p308
      %p315 = scmp.eq.s32.totalorder %s37, 7
      %p316 = por %p314, %p315
      %p317 = scmp.ne.s32.totalorder %s309, %s312
      %p318 = scmp.eq.s32.totalorder %s37, 0
      %p319 = por %p317, %p318
      %p320 = scmp.ne.s32.totalorder %s309, %s312
      %p321 = scmp.eq.s32.totalorder %s42, 7
      %p322 = por %p320, %p321
      %p323 = scmp.ne.s32.totalorder %s312, %s313
      %p324 = scmp.eq.s32.totalorder %s42, 0
      %p325 = por %p323, %p324
      %p326 = scmp.ne.s32.totalorder %s312, %s313
      %p327 = scmp.eq.s32.totalorder %s43, 7
      %p328 = por %p326, %p327
      %p330 = scmp.ne.s32.totalorder %s313, %s329
      %p331 = scmp.eq.s32.totalorder %s43, 0
      %p332 = por %p330, %p331
      %s333 = ssub.s32 %s45, %s52
      %p334 = scmp.eq.s32.totalorder %s333, 0
      %s336 = sadd.s32 %s335, 1
      %s337 = scalar_select %p334, %s335, %s336
      %p340 = pneg %p334
      %p341 = scmp.eq.s32.totalorder %s37, 7
      %p342 = por %p340, %p341
      %p343 = scmp.ne.s32.totalorder %s335, %s338
      %p344 = scmp.eq.s32.totalorder %s37, 0
      %p345 = por %p343, %p344
      %p346 = scmp.ne.s32.totalorder %s335, %s338
      %p347 = scmp.eq.s32.totalorder %s42, 7
      %p348 = por %p346, %p347
      %p349 = scmp.ne.s32.totalorder %s338, %s339
      %p350 = scmp.eq.s32.totalorder %s42, 0
      %p351 = por %p349, %p350
      %p352 = scmp.ne.s32.totalorder %s338, %s339
      %p353 = scmp.eq.s32.totalorder %s43, 7
      %p354 = por %p352, %p353
      %p356 = scmp.ne.s32.totalorder %s339, %s355
      %p357 = scmp.eq.s32.totalorder %s43, 0
      %p358 = por %p356, %p357
      %s359 = ssub.s32 %s45, %s52
      %p360 = scmp.eq.s32.totalorder %s359, 0
      %s362 = sadd.s32 %s361, 1
      %s363 = scalar_select %p360, %s361, %s362
      %p366 = pneg %p360
      %p367 = scmp.eq.s32.totalorder %s37, 7
      %p368 = por %p366, %p367
      %p369 = scmp.ne.s32.totalorder %s361, %s364
      %p370 = scmp.eq.s32.totalorder %s37, 0
      %p371 = por %p369, %p370
      %p372 = scmp.ne.s32.totalorder %s361, %s364
      %p373 = scmp.eq.s32.totalorder %s42, 7
      %p374 = por %p372, %p373
      %p375 = scmp.ne.s32.totalorder %s364, %s365
      %p376 = scmp.eq.s32.totalorder %s42, 0
      %p377 = por %p375, %p376
      %p378 = scmp.ne.s32.totalorder %s364, %s365
      %p379 = scmp.eq.s32.totalorder %s43, 7
      %p380 = por %p378, %p379
      %p382 = scmp.ne.s32.totalorder %s365, %s381
      %p383 = scmp.eq.s32.totalorder %s43, 0
      %p384 = por %p382, %p383
      %s385 = ssub.s32 %s45, %s52
      %p386 = scmp.eq.s32.totalorder %s385, 0
      %s388 = sadd.s32 %s387, 1
      %s389 = scalar_select %p386, %s387, %s388
      %p392 = pneg %p386
      %p393 = scmp.eq.s32.totalorder %s37, 7
      %p394 = por %p392, %p393
      %p395 = scmp.ne.s32.totalorder %s387, %s390
      %p396 = scmp.eq.s32.totalorder %s37, 0
      %p397 = por %p395, %p396
      %p398 = scmp.ne.s32.totalorder %s387, %s390
      %p399 = scmp.eq.s32.totalorder %s42, 7
      %p400 = por %p398, %p399
      %p401 = scmp.ne.s32.totalorder %s390, %s391
      %p402 = scmp.eq.s32.totalorder %s42, 0
      %p403 = por %p401, %p402
      %p404 = scmp.ne.s32.totalorder %s390, %s391
      %p405 = scmp.eq.s32.totalorder %s43, 7
      %p406 = por %p404, %p405
      %p408 = scmp.ne.s32.totalorder %s391, %s407
      %p409 = scmp.eq.s32.totalorder %s43, 0
      %p410 = por %p408, %p409
      %s411 = ssub.s32 %s45, %s52
      %p412 = scmp.eq.s32.totalorder %s411, 0
      %s414 = sadd.s32 %s413, 1
      %s415 = scalar_select %p412, %s413, %s414
      %p418 = pneg %p412
      %p419 = scmp.eq.s32.totalorder %s37, 7
      %p420 = por %p418, %p419
      %p421 = scmp.ne.s32.totalorder %s413, %s416
      %p422 = scmp.eq.s32.totalorder %s37, 0
      %p423 = por %p421, %p422
      %p424 = scmp.ne.s32.totalorder %s413, %s416
      %p425 = scmp.eq.s32.totalorder %s42, 7
      %p426 = por %p424, %p425
      %p427 = scmp.ne.s32.totalorder %s416, %s417
      %p428 = scmp.eq.s32.totalorder %s42, 0
      %p429 = por %p427, %p428
      %p430 = scmp.ne.s32.totalorder %s416, %s417
      %p431 = scmp.eq.s32.totalorder %s43, 7
      %p432 = por %p430, %p431
      %p434 = scmp.ne.s32.totalorder %s417, %s433
      %p435 = scmp.eq.s32.totalorder %s43, 0
      %p436 = por %p434, %p435
      %s437 = ssub.s32 %s45, %s52
      %p438 = scmp.eq.s32.totalorder %s437, 0
      %s440 = sadd.s32 %s439, 1
      %s441 = scalar_select %p438, %s439, %s440
      %p444 = pneg %p438
      %p445 = scmp.eq.s32.totalorder %s37, 7
      %p446 = por %p444, %p445
      %p447 = scmp.ne.s32.totalorder %s439, %s442
      %p448 = scmp.eq.s32.totalorder %s37, 0
      %p449 = por %p447, %p448
      %p450 = scmp.ne.s32.totalorder %s439, %s442
      %p451 = scmp.eq.s32.totalorder %s42, 7
      %p452 = por %p450, %p451
      %p453 = scmp.ne.s32.totalorder %s442, %s443
      %p454 = scmp.eq.s32.totalorder %s42, 0
      %p455 = por %p453, %p454
      %p456 = scmp.ne.s32.totalorder %s442, %s443
      %p457 = scmp.eq.s32.totalorder %s43, 7
      %p458 = por %p456, %p457
      %p460 = scmp.ne.s32.totalorder %s443, %s459
      %p461 = scmp.eq.s32.totalorder %s43, 0
      %p462 = por %p460, %p461
      %s464 = sadd.s32 %s463, 1
      %p467 = scmp.eq.s32.totalorder %s37, 7
      %p468 = scmp.ne.s32.totalorder %s463, %s465
      %p469 = scmp.eq.s32.totalorder %s37, 0
      %p470 = por %p468, %p469
      %p471 = scmp.ne.s32.totalorder %s463, %s465
      %p472 = scmp.eq.s32.totalorder %s42, 7
      %p473 = por %p471, %p472
      %p474 = scmp.ne.s32.totalorder %s465, %s466
      %p475 = scmp.eq.s32.totalorder %s42, 0
      %p476 = por %p474, %p475
      %p477 = scmp.ne.s32.totalorder %s465, %s466
      %p478 = scmp.eq.s32.totalorder %s43, 7
      %p479 = por %p477, %p478
      %p481 = scmp.ne.s32.totalorder %s466, %s480
      %p482 = scmp.eq.s32.totalorder %s43, 0
      %p483 = por %p481, %p482
      %s485 = sadd.s32 %s484, 1
      %p488 = scmp.eq.s32.totalorder %s37, 7
      %p489 = scmp.ne.s32.totalorder %s484, %s486
      %p490 = scmp.eq.s32.totalorder %s37, 0
      %p491 = por %p489, %p490
      %p492 = scmp.ne.s32.totalorder %s484, %s486
      %p493 = scmp.eq.s32.totalorder %s42, 7
      %p494 = por %p492, %p493
      %p495 = scmp.ne.s32.totalorder %s486, %s487
      %p496 = scmp.eq.s32.totalorder %s42, 0
      %p497 = por %p495, %p496
      %p498 = scmp.ne.s32.totalorder %s486, %s487
      %p499 = scmp.eq.s32.totalorder %s43, 7
      %p500 = por %p498, %p499
      %p502 = scmp.ne.s32.totalorder %s487, %s501
      %p503 = scmp.eq.s32.totalorder %s43, 0
      %p504 = por %p502, %p503
      %s506 = sadd.s32 %s505, 1
      %p509 = scmp.eq.s32.totalorder %s37, 7
      %p510 = scmp.ne.s32.totalorder %s505, %s507
      %p511 = scmp.eq.s32.totalorder %s37, 0
      %p512 = por %p510, %p511
      %p513 = scmp.ne.s32.totalorder %s505, %s507
      %p514 = scmp.eq.s32.totalorder %s42, 7
      %p515 = por %p513, %p514
      %p516 = scmp.ne.s32.totalorder %s507, %s508
      %p517 = scmp.eq.s32.totalorder %s42, 0
      %p518 = por %p516, %p517
      %p519 = scmp.ne.s32.totalorder %s507, %s508
      %p520 = scmp.eq.s32.totalorder %s43, 7
      %p521 = por %p519, %p520
      %p523 = scmp.ne.s32.totalorder %s508, %s522
      %p524 = scmp.eq.s32.totalorder %s43, 0
      %p525 = por %p523, %p524
      %s527 = sadd.s32 %s526, 1
      %p530 = scmp.eq.s32.totalorder %s37, 7
      %p531 = scmp.ne.s32.totalorder %s526, %s528
      %p532 = scmp.eq.s32.totalorder %s37, 0
      %p533 = por %p531, %p532
      %p534 = scmp.ne.s32.totalorder %s526, %s528
      %p535 = scmp.eq.s32.totalorder %s42, 7
      %p536 = por %p534, %p535
      %p537 = scmp.ne.s32.totalorder %s528, %s529
      %p538 = scmp.eq.s32.totalorder %s42, 0
      %p539 = por %p537, %p538
      %p540 = scmp.ne.s32.totalorder %s528, %s529
      %p541 = scmp.eq.s32.totalorder %s43, 7
      %p542 = por %p540, %p541
      %p544 = scmp.ne.s32.totalorder %s529, %s543
      %p545 = scmp.eq.s32.totalorder %s43, 0
      %p546 = por %p544, %p545
      %s548 = sadd.s32 %s547, 1
      %p551 = scmp.eq.s32.totalorder %s37, 7
      %p552 = scmp.ne.s32.totalorder %s547, %s549
      %p553 = scmp.eq.s32.totalorder %s37, 0
      %p554 = por %p552, %p553
      %p555 = scmp.ne.s32.totalorder %s547, %s549
      %p556 = scmp.eq.s32.totalorder %s42, 7
      %p557 = por %p555, %p556
      %p558 = scmp.ne.s32.totalorder %s549, %s550
      %p559 = scmp.eq.s32.totalorder %s42, 0
      %p560 = por %p558, %p559
      %p561 = scmp.ne.s32.totalorder %s549, %s550
      %p562 = scmp.eq.s32.totalorder %s43, 7
      %p563 = por %p561, %p562
      %p565 = scmp.ne.s32.totalorder %s550, %s564
      %p566 = scmp.eq.s32.totalorder %s43, 0
      %p567 = por %p565, %p566
      %s569 = sadd.s32 %s568, 1
      %p572 = scmp.eq.s32.totalorder %s37, 7
      %p573 = scmp.ne.s32.totalorder %s568, %s570
      %p574 = scmp.eq.s32.totalorder %s37, 0
      %p575 = por %p573, %p574
      %p576 = scmp.ne.s32.totalorder %s568, %s570
      %p577 = scmp.eq.s32.totalorder %s42, 7
      %p578 = por %p576, %p577
      %p579 = scmp.ne.s32.totalorder %s570, %s571
      %p580 = scmp.eq.s32.totalorder %s42, 0
      %p581 = por %p579, %p580
      %p582 = scmp.ne.s32.totalorder %s570, %s571
      %p583 = scmp.eq.s32.totalorder %s43, 7
      %p584 = por %p582, %p583
      %p586 = scmp.ne.s32.totalorder %s571, %s585
      %p587 = scmp.eq.s32.totalorder %s43, 0
      %p588 = por %p586, %p587
      %s589 = ssub.s32 %s44, %s56
      %p590 = scmp.eq.s32.totalorder %s589, 0
      %s592 = sadd.s32 %s591, 1
      %s593 = scalar_select %p590, %s591, %s592
      %p596 = pneg %p590
      %p597 = scmp.eq.s32.totalorder %s37, 7
      %p598 = por %p596, %p597
      %p599 = scmp.ne.s32.totalorder %s591, %s594
      %p600 = scmp.eq.s32.totalorder %s37, 0
      %p601 = por %p599, %p600
      %p602 = scmp.ne.s32.totalorder %s591, %s594
      %p603 = scmp.eq.s32.totalorder %s42, 7
      %p604 = por %p602, %p603
      %p605 = scmp.ne.s32.totalorder %s594, %s595
      %p606 = scmp.eq.s32.totalorder %s42, 0
      %p607 = por %p605, %p606
      %p608 = scmp.ne.s32.totalorder %s594, %s595
      %p609 = scmp.eq.s32.totalorder %s43, 7
      %p610 = por %p608, %p609
      %p612 = scmp.ne.s32.totalorder %s595, %s611
      %p613 = scmp.eq.s32.totalorder %s43, 0
      %p614 = por %p612, %p613
      %p615 = scmp.le.s32.totalorder 1, %s37
      %p616 = scmp.lt.s32.totalorder %s37, 9
      %p617 = pnand %p615, %p616
      %p618 = pneg %p617
      // Predicated region
      $region9: #{bert_for_features.1} parent=5 // pred_check
        _
      $region10: #{bert_for_features.1} parent=5 // pred_check_branch
        %620 = sbr.rel (%p617) target = $region12
      $region11: #{bert_for_features.1} parent=5 // pred_region
        %s621 = ssub.s32 %s37, 1
        // Predicated region
        $region13: #{bert_for_features.1} parent=11 // pred_check
          %p622 = pneg %p122
        $region14: #{bert_for_features.1} parent=11 // pred_check_branch
          %624 = sbr.rel (%p622) target = $region16
        $region15: #{bert_for_features.1} parent=11 // pred_region
          _
        $region16: #{bert_for_features.1} parent=11 // pred_fallthru
          _
        // Predicated region
        $region17: #{bert_for_features.1} parent=11 // pred_check
          %p625 = pneg %p143
        $region18: #{bert_for_features.1} parent=11 // pred_check_branch
          %627 = sbr.rel (%p625) target = $region20
        $region19: #{bert_for_features.1} parent=11 // pred_region
          _
        $region20: #{bert_for_features.1} parent=11 // pred_fallthru
          _
        // Predicated region
        $region21: #{bert_for_features.1} parent=11 // pred_check
          %p628 = pneg %p476
        $region22: #{bert_for_features.1} parent=11 // pred_check_branch
          %630 = sbr.rel (%p628) target = $region24
        $region23: #{bert_for_features.1} parent=11 // pred_region
          _
        $region24: #{bert_for_features.1} parent=11 // pred_fallthru
          _
        // Predicated region
        $region25: #{bert_for_features.1} parent=11 // pred_check
          %p631 = pneg %p497
        $region26: #{bert_for_features.1} parent=11 // pred_check_branch
          %633 = sbr.rel (%p631) target = $region28
        $region27: #{bert_for_features.1} parent=11 // pred_region
          _
        $region28: #{bert_for_features.1} parent=11 // pred_fallthru
          _
        // Predicated region
        $region29: #{bert_for_features.1} parent=11 // pred_check
          %p634 = pneg %p518
        $region30: #{bert_for_features.1} parent=11 // pred_check_branch
          %636 = sbr.rel (%p634) target = $region32
        $region31: #{bert_for_features.1} parent=11 // pred_region
          _
        $region32: #{bert_for_features.1} parent=11 // pred_fallthru
          _
        // Predicated region
        $region33: #{bert_for_features.1} parent=11 // pred_check
          %p637 = pneg %p539
        $region34: #{bert_for_features.1} parent=11 // pred_check_branch
          %639 = sbr.rel (%p637) target = $region36
        $region35: #{bert_for_features.1} parent=11 // pred_region
          _
        $region36: #{bert_for_features.1} parent=11 // pred_fallthru
          _
        // Predicated region
        $region37: #{bert_for_features.1} parent=11 // pred_check
          %p640 = pneg %p560
        $region38: #{bert_for_features.1} parent=11 // pred_check_branch
          %642 = sbr.rel (%p640) target = $region40
        $region39: #{bert_for_features.1} parent=11 // pred_region
          _
        $region40: #{bert_for_features.1} parent=11 // pred_fallthru
          _
        // Predicated region
        $region41: #{bert_for_features.1} parent=11 // pred_check
          %p643 = pneg %p581
        $region42: #{bert_for_features.1} parent=11 // pred_check_branch
          %645 = sbr.rel (%p643) target = $region44
        $region43: #{bert_for_features.1} parent=11 // pred_region
          _
        $region44: #{bert_for_features.1} parent=11 // pred_fallthru
          _
      $region12: #{bert_for_features.1} parent=5 // pred_fallthru
        _
      %p646 = scmp.lt.s32.totalorder %s37, 8
      // Predicated region
      $region45: #{bert_for_features.1} parent=5 // pred_check
        %p647 = pneg %p646
      $region46: #{bert_for_features.1} parent=5 // pred_check_branch
        %649 = sbr.rel (%p647) target = $region48
      $region47: #{bert_for_features.1} parent=5 // pred_region
        // Predicated region
        $region49: #{bert_for_features.1} parent=47 // pred_check
          %p650 = pneg %p69
        $region50: #{bert_for_features.1} parent=47 // pred_check_branch
          %652 = sbr.rel (%p650) target = $region52
        $region51: #{bert_for_features.1} parent=47 // pred_region
          %p653 = scmp.lt.s32.totalorder %s44, 1
          %s654 = scalar_select %p653, %s44, 1
          %s655 = smul.addr %s654, 8
          %s656 = scalar_lea.vmem %s0, %s655
        $region52: #{bert_for_features.1} parent=47 // pred_fallthru
          _
        // Predicated region
        $region53: #{bert_for_features.1} parent=47 // pred_check
          %p657 = pneg %p95
        $region54: #{bert_for_features.1} parent=47 // pred_check_branch
          %659 = sbr.rel (%p657) target = $region56
        $region55: #{bert_for_features.1} parent=47 // pred_region
          %p660 = scmp.lt.s32.totalorder %s44, 1
          %s661 = scalar_select %p660, %s44, 1
          %s662 = scalar_lea.vmem %s1, %s661
        $region56: #{bert_for_features.1} parent=47 // pred_fallthru
          _
        // Predicated region
        $region57: #{bert_for_features.1} parent=47 // pred_check
          %p663 = pneg %p163
        $region58: #{bert_for_features.1} parent=47 // pred_check_branch
          %665 = sbr.rel (%p663) target = $region60
        $region59: #{bert_for_features.1} parent=47 // pred_region
          %s666 = sand.u32 %s153, 1
          %s667 = scalar_lea.sflag [#allocation4], %s666
          %s668 = sand.u32 %s153, 1
          %s669 = smul.addr %s668, 192
          %s670 = scalar_lea.vmem [#allocation3], %s669
          %s672 = ssub.s32 3072, 3072
          %673 = vsyncadd %s667, %s672
          %s674 = smul.addr %s45, 48
          %s675 = smul.addr %s674, 64
          %s676 = scalar_lea.hbm %s4, %s675
          %s677 = sshll.u32 %s670, 4
          %s678 = int_to_ptr.vmem [resolvable:$true] %s677
          %683 = dma.hbm_to_vmem [thread:$0]  %s676, 3072, %s678, %s667, 192, 192, 12
        $region60: #{bert_for_features.1} parent=47 // pred_fallthru
          _
        // Predicated region
        $region61: #{bert_for_features.1} parent=47 // pred_check
          %p684 = pneg %p189
        $region62: #{bert_for_features.1} parent=47 // pred_check_branch
          %686 = sbr.rel (%p684) target = $region64
        $region63: #{bert_for_features.1} parent=47 // pred_region
          %p687 = scmp.lt.s32.totalorder %s45, 3
          %s688 = scalar_select %p687, %s45, 3
          %s689 = smul.addr %s688, 3
          %s690 = scalar_lea.vmem %s5, %s689
        $region64: #{bert_for_features.1} parent=47 // pred_fallthru
          _
        // Predicated region
        $region65: #{bert_for_features.1} parent=47 // pred_check
          %p691 = pneg %p215
        $region66: #{bert_for_features.1} parent=47 // pred_check_branch
          %693 = sbr.rel (%p691) target = $region68
        $region67: #{bert_for_features.1} parent=47 // pred_region
          %s694 = sand.u32 %s37, 1
          %s695 = scalar_lea.sflag [#allocation6], %s694
          %s696 = sand.u32 %s205, 1
          %s697 = smul.addr %s696, 64
          %s698 = scalar_lea.vmem [#allocation5], %s697
          %s700 = ssub.s32 1024, 1024
          %701 = vsyncadd %s695, %s700
          %s702 = smul.addr %s45, 16
          %s703 = smul.addr %s702, 64
          %s704 = scalar_lea.hbm %s6, %s703
          %s705 = sshll.u32 %s698, 4
          %s706 = int_to_ptr.vmem [resolvable:$true] %s705
          %711 = dma.hbm_to_vmem [thread:$0]  %s704, 1024, %s706, %s695, 64, 64, 4
        $region68: #{bert_for_features.1} parent=47 // pred_fallthru
          _
        // Predicated region
        $region69: #{bert_for_features.1} parent=47 // pred_check
          %p712 = pneg %p241
        $region70: #{bert_for_features.1} parent=47 // pred_check_branch
          %714 = sbr.rel (%p712) target = $region72
        $region71: #{bert_for_features.1} parent=47 // pred_region
          %p715 = scmp.lt.s32.totalorder %s45, 3
          %s716 = scalar_select %p715, %s45, 3
          %s717 = scalar_lea.vmem %s7, %s716
        $region72: #{bert_for_features.1} parent=47 // pred_fallthru
          _
        // Predicated region
        $region73: #{bert_for_features.1} parent=47 // pred_check
          %p718 = pneg %p267
        $region74: #{bert_for_features.1} parent=47 // pred_check_branch
          %720 = sbr.rel (%p718) target = $region76
        $region75: #{bert_for_features.1} parent=47 // pred_region
          %p721 = scmp.lt.s32.totalorder %s45, 3
          %s722 = scalar_select %p721, %s45, 3
          %s723 = scalar_lea.vmem %s8, %s722
        $region76: #{bert_for_features.1} parent=47 // pred_fallthru
          _
        // Predicated region
        $region77: #{bert_for_features.1} parent=47 // pred_check
          %p724 = pneg %p293
        $region78: #{bert_for_features.1} parent=47 // pred_check_branch
          %726 = sbr.rel (%p724) target = $region80
        $region79: #{bert_for_features.1} parent=47 // pred_region
          %p727 = scmp.lt.s32.totalorder %s45, 3
          %s728 = scalar_select %p727, %s45, 3
          %s729 = scalar_lea.vmem %s9, %s728
        $region80: #{bert_for_features.1} parent=47 // pred_fallthru
          _
        // Predicated region
        $region81: #{bert_for_features.1} parent=47 // pred_check
          %p730 = pneg %p319
        $region82: #{bert_for_features.1} parent=47 // pred_check_branch
          %732 = sbr.rel (%p730) target = $region84
        $region83: #{bert_for_features.1} parent=47 // pred_region
          %s733 = sand.u32 %s37, 1
          %s734 = scalar_lea.sflag [#allocation6], %s733
          %s735 = sand.u32 %s309, 1
          %s736 = smul.addr %s735, 128
          %s737 = scalar_lea.vmem [#allocation7], %s736
          %s739 = ssub.s32 2048, 2048
          %740 = vsyncadd %s734, %s739
          %s741 = smul.addr %s45, 32
          %s742 = smul.addr %s741, 64
          %s743 = scalar_lea.hbm %s10, %s742
          %s744 = sshll.u32 %s737, 4
          %s745 = int_to_ptr.vmem [resolvable:$true] %s744
          %750 = dma.hbm_to_vmem [thread:$0]  %s743, 2048, %s745, %s734, 128, 128, 8
        $region84: #{bert_for_features.1} parent=47 // pred_fallthru
          _
        // Predicated region
        $region85: #{bert_for_features.1} parent=47 // pred_check
          %p751 = pneg %p345
        $region86: #{bert_for_features.1} parent=47 // pred_check_branch
          %753 = sbr.rel (%p751) target = $region88
        $region87: #{bert_for_features.1} parent=47 // pred_region
          %p754 = scmp.lt.s32.totalorder %s45, 3
          %s755 = scalar_select %p754, %s45, 3
          %s756 = smul.addr %s755, 2
          %s757 = scalar_lea.vmem %s11, %s756
        $region88: #{bert_for_features.1} parent=47 // pred_fallthru
          _
        // Predicated region
        $region89: #{bert_for_features.1} parent=47 // pred_check
          %p758 = pneg %p371
        $region90: #{bert_for_features.1} parent=47 // pred_check_branch
          %760 = sbr.rel (%p758) target = $region92
        $region91: #{bert_for_features.1} parent=47 // pred_region
          %s761 = sand.u32 %s361, 1
          %s762 = scalar_lea.sflag [#allocation9], %s761
          %s763 = sand.u32 %s361, 1
          %s764 = smul.addr %s763, 128
          %s765 = scalar_lea.vmem [#allocation8], %s764
          %s767 = ssub.s32 2048, 2048
          %768 = vsyncadd %s762, %s767
          %s769 = smul.addr %s45, 32
          %s770 = smul.addr %s769, 64
          %s771 = scalar_lea.hbm %s12, %s770
          %s772 = sshll.u32 %s765, 4
          %s773 = int_to_ptr.vmem [resolvable:$true] %s772
          %778 = dma.hbm_to_vmem [thread:$0]  %s771, 2048, %s773, %s762, 64, 64, 4
        $region92: #{bert_for_features.1} parent=47 // pred_fallthru
          _
        // Predicated region
        $region93: #{bert_for_features.1} parent=47 // pred_check
          %p779 = pneg %p397
        $region94: #{bert_for_features.1} parent=47 // pred_check_branch
          %781 = sbr.rel (%p779) target = $region96
        $region95: #{bert_for_features.1} parent=47 // pred_region
          %p782 = scmp.lt.s32.totalorder %s45, 3
          %s783 = scalar_select %p782, %s45, 3
          %s784 = scalar_lea.vmem %s13, %s783
        $region96: #{bert_for_features.1} parent=47 // pred_fallthru
          _
        // Predicated region
        $region97: #{bert_for_features.1} parent=47 // pred_check
          %p785 = pneg %p423
        $region98: #{bert_for_features.1} parent=47 // pred_check_branch
          %787 = sbr.rel (%p785) target = $region100
        $region99: #{bert_for_features.1} parent=47 // pred_region
          %p788 = scmp.lt.s32.totalorder %s45, 3
          %s789 = scalar_select %p788, %s45, 3
          %s790 = scalar_lea.vmem %s14, %s789
        $region100: #{bert_for_features.1} parent=47 // pred_fallthru
          _
        // Predicated region
        $region101: #{bert_for_features.1} parent=47 // pred_check
          %p791 = pneg %p449
        $region102: #{bert_for_features.1} parent=47 // pred_check_branch
          %793 = sbr.rel (%p791) target = $region104
        $region103: #{bert_for_features.1} parent=47 // pred_region
          %p794 = scmp.lt.s32.totalorder %s45, 3
          %s795 = scalar_select %p794, %s45, 3
          %s796 = scalar_lea.vmem %s15, %s795
        $region104: #{bert_for_features.1} parent=47 // pred_fallthru
          _
      $region48: #{bert_for_features.1} parent=5 // pred_fallthru
        _
      %p797 = scmp.le.s32.totalorder 1, %s37
      %p798 = scmp.lt.s32.totalorder %s37, 9
      %p799 = pnand %p797, %p798
      %p800 = pneg %p799
      // Predicated region
      $region105: #{bert_for_features.1} parent=5 // pred_check
        _
      $region106: #{bert_for_features.1} parent=5 // pred_check_branch
        %802 = sbr.rel (%p799) target = $region108
      $region107: #{bert_for_features.1} parent=5 // pred_region
        %s803 = ssub.s32 %s37, 1
        %s804 = sand.u32 %s156, 1
        %s805 = scalar_lea.sflag [#allocation4], %s804
        %s806 = sand.u32 %s156, 1
        %s807 = smul.addr %s806, 192
        %s808 = scalar_lea.vmem [#allocation3], %s807
        // Predicated region
        $region109: #{bert_for_features.1} parent=107 // pred_check
          %p809 = pneg %p169
        $region110: #{bert_for_features.1} parent=107 // pred_check_branch
          %811 = sbr.rel (%p809) target = $region112
        $region111: #{bert_for_features.1} parent=107 // pred_region
          %812 = dma.done %s805, 3072
        $region112: #{bert_for_features.1} parent=107 // pred_fallthru
          _
        %s813 = sand.u32 %s42, 1
        %s814 = scalar_lea.sflag [#allocation6], %s813
        %s815 = sand.u32 %s208, 1
        %s816 = smul.addr %s815, 64
        %s817 = scalar_lea.vmem [#allocation5], %s816
        // Predicated region
        $region113: #{bert_for_features.1} parent=107 // pred_check
          %p818 = pneg %p221
        $region114: #{bert_for_features.1} parent=107 // pred_check_branch
          %820 = sbr.rel (%p818) target = $region116
        $region115: #{bert_for_features.1} parent=107 // pred_region
          %821 = dma.done %s814, 1024
        $region116: #{bert_for_features.1} parent=107 // pred_fallthru
          _
        %s822 = sand.u32 %s42, 1
        %s823 = scalar_lea.sflag [#allocation6], %s822
        %s824 = sand.u32 %s312, 1
        %s825 = smul.addr %s824, 128
        %s826 = scalar_lea.vmem [#allocation7], %s825
        // Predicated region
        $region117: #{bert_for_features.1} parent=107 // pred_check
          %p827 = pneg %p325
        $region118: #{bert_for_features.1} parent=107 // pred_check_branch
          %829 = sbr.rel (%p827) target = $region120
        $region119: #{bert_for_features.1} parent=107 // pred_region
          %830 = dma.done %s823, 2048
        $region120: #{bert_for_features.1} parent=107 // pred_fallthru
          _
        %s831 = sand.u32 %s364, 1
        %s832 = scalar_lea.sflag [#allocation9], %s831
        %s833 = sand.u32 %s364, 1
        %s834 = smul.addr %s833, 128
        %s835 = scalar_lea.vmem [#allocation8], %s834
        // Predicated region
        $region121: #{bert_for_features.1} parent=107 // pred_check
          %p836 = pneg %p377
        $region122: #{bert_for_features.1} parent=107 // pred_check_branch
          %838 = sbr.rel (%p836) target = $region124
        $region123: #{bert_for_features.1} parent=107 // pred_region
          %839 = dma.done %s832, 2048
        $region124: #{bert_for_features.1} parent=107 // pred_fallthru
          _
        %p840 = scmp.lt.s32.totalorder %s46, 1
        %s841 = scalar_select %p840, %s46, 1
        %s842 = smul.addr %s841, 8
        %s843 = scalar_lea.vmem %s0, %s842
        %p844 = pneg %p75
        %p845 = pneg %p72
        %p846 = scmp.lt.s32.totalorder %s46, 1
        %s847 = scalar_select %p846, %s46, 1
        %s848 = scalar_lea.vmem %s1, %s847
        %p849 = pneg %p101
        %p850 = pneg %p98
        %p851 = pneg %p122
        %p852 = pneg %p119
        %p853 = pneg %p143
        %p854 = pneg %p140
        %s855 = sand.u32 %s156, 1
        %s856 = scalar_lea.sflag [#allocation4], %s855
        %s857 = sand.u32 %s156, 1
        %s858 = smul.addr %s857, 192
        %s859 = scalar_lea.vmem [#allocation3], %s858
        %p860 = pneg %p169
        %p861 = pneg %p166
        %p862 = scmp.lt.s32.totalorder %s47, 3
        %s863 = scalar_select %p862, %s47, 3
        %s864 = smul.addr %s863, 3
        %s865 = scalar_lea.vmem %s5, %s864
        %p866 = pneg %p195
        %p867 = pneg %p192
        %s868 = sand.u32 %s42, 1
        %s869 = scalar_lea.sflag [#allocation6], %s868
        %s870 = sand.u32 %s208, 1
        %s871 = smul.addr %s870, 64
        %s872 = scalar_lea.vmem [#allocation5], %s871
        %p873 = pneg %p221
        %p874 = pneg %p218
        %p875 = scmp.lt.s32.totalorder %s47, 3
        %s876 = scalar_select %p875, %s47, 3
        %s877 = scalar_lea.vmem %s7, %s876
        %p878 = pneg %p247
        %p879 = pneg %p244
        %p880 = scmp.lt.s32.totalorder %s47, 3
        %s881 = scalar_select %p880, %s47, 3
        %s882 = scalar_lea.vmem %s8, %s881
        %p883 = pneg %p273
        %p884 = pneg %p270
        %p885 = scmp.lt.s32.totalorder %s47, 3
        %s886 = scalar_select %p885, %s47, 3
        %s887 = scalar_lea.vmem %s9, %s886
        %p888 = pneg %p299
        %p889 = pneg %p296
        %s890 = sand.u32 %s42, 1
        %s891 = scalar_lea.sflag [#allocation6], %s890
        %s892 = sand.u32 %s312, 1
        %s893 = smul.addr %s892, 128
        %s894 = scalar_lea.vmem [#allocation7], %s893
        %p895 = pneg %p325
        %p896 = pneg %p322
        %p897 = scmp.lt.s32.totalorder %s47, 3
        %s898 = scalar_select %p897, %s47, 3
        %s899 = smul.addr %s898, 2
        %s900 = scalar_lea.vmem %s11, %s899
        %p901 = pneg %p351
        %p902 = pneg %p348
        %s903 = sand.u32 %s364, 1
        %s904 = scalar_lea.sflag [#allocation9], %s903
        %s905 = sand.u32 %s364, 1
        %s906 = smul.addr %s905, 128
        %s907 = scalar_lea.vmem [#allocation8], %s906
        %p908 = pneg %p377
        %p909 = pneg %p374
        %p910 = scmp.lt.s32.totalorder %s47, 3
        %s911 = scalar_select %p910, %s47, 3
        %s912 = scalar_lea.vmem %s13, %s911
        %p913 = pneg %p403
        %p914 = pneg %p400
        %p915 = scmp.lt.s32.totalorder %s47, 3
        %s916 = scalar_select %p915, %s47, 3
        %s917 = scalar_lea.vmem %s14, %s916
        %p918 = pneg %p429
        %p919 = pneg %p426
        %p920 = scmp.lt.s32.totalorder %s47, 3
        %s921 = scalar_select %p920, %s47, 3
        %s922 = scalar_lea.vmem %s15, %s921
        %p923 = pneg %p455
        %p924 = pneg %p452
        %p925 = pneg %p476
        %p926 = pneg %p473
        %p927 = pneg %p497
        %p928 = pneg %p494
        %p929 = pneg %p518
        %p930 = pneg %p515
        %p931 = pneg %p539
        %p932 = pneg %p536
        %p933 = pneg %p560
        %p934 = pneg %p557
        %p935 = pneg %p581
        %p936 = pneg %p578
        %p937 = pneg %p607
        %p938 = pneg %p604
        %p939 = scmp.lt.s32.totalorder %s46, 1
        %s940 = scalar_select %p939, %s46, 1
        %s941 = smul.addr %s940, 8
        %s942 = scalar_lea.vmem %s22, %s941
        %p943 = scmp.lt.s32.totalorder %s46, 1
        %s944 = scalar_select %p943, %s46, 1
        %s945 = smul.addr %s944, 8
        %s946 = scalar_lea.vmem %s0, %s945
        %p947 = scmp.lt.s32.totalorder %s46, 1
        %s948 = scalar_select %p947, %s46, 1
        %s949 = scalar_lea.vmem %s1, %s948
        %p950 = scmp.lt.s32.totalorder %s47, 3
        %s951 = scalar_select %p950, %s47, 3
        %s952 = smul.addr %s951, 3
        %s953 = scalar_lea.vmem %s5, %s952
        %p954 = scmp.lt.s32.totalorder %s47, 3
        %s955 = scalar_select %p954, %s47, 3
        %s956 = scalar_lea.vmem %s7, %s955
        %p957 = scmp.lt.s32.totalorder %s47, 3
        %s958 = scalar_select %p957, %s47, 3
        %s959 = scalar_lea.vmem %s8, %s958
        %p960 = scmp.lt.s32.totalorder %s47, 3
        %s961 = scalar_select %p960, %s47, 3
        %s962 = scalar_lea.vmem %s9, %s961
        %p963 = scmp.lt.s32.totalorder %s47, 3
        %s964 = scalar_select %p963, %s47, 3
        %s965 = smul.addr %s964, 2
        %s966 = scalar_lea.vmem %s11, %s965
        %p967 = scmp.lt.s32.totalorder %s47, 3
        %s968 = scalar_select %p967, %s47, 3
        %s969 = scalar_lea.vmem %s13, %s968
        %p970 = scmp.lt.s32.totalorder %s47, 3
        %s971 = scalar_select %p970, %s47, 3
        %s972 = scalar_lea.vmem %s14, %s971
        %p973 = scmp.lt.s32.totalorder %s47, 3
        %s974 = scalar_select %p973, %s47, 3
        %s975 = scalar_lea.vmem %s15, %s974
        %p976 = scmp.lt.s32.totalorder %s46, 1
        %s977 = scalar_select %p976, %s46, 1
        %s978 = smul.addr %s977, 8
        %s979 = scalar_lea.vmem %s22, %s978
        %p981 = scmp.eq.s32.totalorder %s47, 0
        // Predicated region
        $region125: #{bert_for_features.1} parent=107 // pred_check
          %p982 = pneg %p981
        $region126: #{bert_for_features.1} parent=107 // pred_check_branch
          %984 = sbr.rel (%p982) target = $region128
        $region127: #{bert_for_features.1} parent=107 // pred_region
          %v985 = vld [vmem:[%s946] sm:$0xff]
          %v986 = vld [vmem:[%s2] sm:$0x1]
          %v987 = vld [vmem:[%s3] sm:$0x1]
          %988 = vadd.xlane.f32.xlu0 %v985
          %v989 = vpop.xlane.xlu0 %988
          %v990 = vrcp.pop 128.0
          %v991 = vmul.f32 %v989, %v990
          %v992 = vsub.f32 %v985, %v991
          %v993 = vmul.f32 %v992, %v992
          %994 = vadd.xlane.f32.xlu0 %v993
          %v995 = vpop.xlane.xlu0 %994
          %v996 = vmul.f32 %v995, %v990
          %v997 = vadd.f32 %v996, 1e-12
          %v998 = vrsqrt.pop %v997
          %v999 = vmul.f32 %v992, %v998
          %v1001 = vlaneseq
          %v1002 = vshrl.u32 %v1001, 7
          %v1003 = vsub.s32 0, %v1002
          %v1004 = vrot.slane %v986, %v1003
          %v1006 = vmul.f32 %v999, %v1004
          %v1008 = vlaneseq
          %v1009 = vshrl.u32 %v1008, 7
          %v1010 = vsub.s32 0, %v1009
          %v1011 = vrot.slane %v987, %v1010
          %v1013 = vadd.f32 %v1006, %v1011
          %1014 = vst [vmem:[#allocation2] sm:$0xff] %v1013
        $region128: #{bert_for_features.1} parent=107 // pred_fallthru
          _
        %v1015 = vld [vmem:[#allocation2] sm:$0xff]
        %v1016 = vpack.c.bf16 %v1015, %v1015
        %v1017 = vld [vmem:[%s808] sm:$0xff]
        %v1018 = vld [vmem:[%s808 + $0x8] sm:$0xf]
        %v1019 = vld [vmem:[%s808 + $0xc] sm:$0xff]
        %v1020 = vld [vmem:[%s808 + $0x14] sm:$0xf]
        %v1021 = vld [vmem:[%s808 + $0x18] sm:$0xff]
        %v1022 = vld [vmem:[%s808 + $0x20] sm:$0xf]
        %v1023 = vld [vmem:[%s808 + $0x24] sm:$0xff]
        %v1024 = vld [vmem:[%s808 + $0x2c] sm:$0xf]
        %v1025 = vld [vmem:[%s808 + $0x30] sm:$0xff]
        %v1026 = vld [vmem:[%s808 + $0x38] sm:$0xf]
        %v1027 = vld [vmem:[%s808 + $0x3c] sm:$0xff]
        %v1028 = vld [vmem:[%s808 + $0x44] sm:$0xf]
        %v1029 = vld [vmem:[%s808 + $0x48] sm:$0xff]
        %v1030 = vld [vmem:[%s808 + $0x50] sm:$0xf]
        %v1031 = vld [vmem:[%s808 + $0x54] sm:$0xff]
        %v1032 = vld [vmem:[%s808 + $0x5c] sm:$0xf]
        %v1033 = vld [vmem:[%s808 + $0x60] sm:$0xff]
        %v1034 = vld [vmem:[%s808 + $0x68] sm:$0xf]
        %v1035 = vld [vmem:[%s808 + $0x6c] sm:$0xff]
        %v1036 = vld [vmem:[%s808 + $0x74] sm:$0xf]
        %v1037 = vld [vmem:[%s808 + $0x78] sm:$0xff]
        %v1038 = vld [vmem:[%s808 + $0x80] sm:$0xf]
        %v1039 = vld [vmem:[%s808 + $0x84] sm:$0xff]
        %v1040 = vld [vmem:[%s808 + $0x8c] sm:$0xf]
        %v1041 = vld [vmem:[%s808 + $0x90] sm:$0xff]
        %v1042 = vld [vmem:[%s808 + $0x98] sm:$0xf]
        %v1043 = vld [vmem:[%s808 + $0x9c] sm:$0xff]
        %v1044 = vld [vmem:[%s808 + $0xa4] sm:$0xf]
        %v1045 = vld [vmem:[%s808 + $0xa8] sm:$0xff]
        %v1046 = vld [vmem:[%s808 + $0xb0] sm:$0xf]
        %v1047 = vld [vmem:[%s808 + $0xb4] sm:$0xff]
        %v1048 = vld [vmem:[%s808 + $0xbc] sm:$0xf]
        %v1049 = vld [vmem:[%s953] sm:$0x7]
        %v1051 = vlaneseq
        %v1052 = vshrl.u32 %v1051, 7
        %v1053 = vsub.s32 0, %v1052
        %v1054 = vrot.slane %v1049, %v1053
        %v1055 = vlaneseq
        %v1056 = vshrl.u32 %v1055, 7
        %v1057 = vsub.s32 1, %v1056
        %v1058 = vrot.slane %v1049, %v1057
        %v1059 = vlaneseq
        %v1060 = vshrl.u32 %v1059, 7
        %v1061 = vsub.s32 2, %v1060
        %v1062 = vrot.slane %v1049, %v1061
        %v1098 = vunpack.c.l.b16 %v1017
        %v1099 = vunpack.c.h.b16 %v1017
        %v1100 = vunpack.c.l.b16 %v1018
        %v1101 = vunpack.c.l.b16 %v1019
        %v1102 = vunpack.c.h.b16 %v1019
        %v1103 = vunpack.c.l.b16 %v1020
        %v1104 = vunpack.c.l.b16 %v1021
        %v1105 = vunpack.c.h.b16 %v1021
        %v1106 = vunpack.c.l.b16 %v1022
        %v1107 = vunpack.c.l.b16 %v1023
        %v1108 = vunpack.c.h.b16 %v1023
        %v1109 = vunpack.c.l.b16 %v1024
        %v1110 = vunpack.c.l.b16 %v1025
        %v1111 = vunpack.c.h.b16 %v1025
        %v1112 = vunpack.c.l.b16 %v1026
        %v1113 = vunpack.c.l.b16 %v1027
        %v1114 = vunpack.c.h.b16 %v1027
        %v1115 = vunpack.c.l.b16 %v1028
        %v1116 = vunpack.c.l.b16 %v1029
        %v1117 = vunpack.c.h.b16 %v1029
        %v1118 = vunpack.c.l.b16 %v1030
        %v1119 = vunpack.c.l.b16 %v1031
        %v1120 = vunpack.c.h.b16 %v1031
        %v1121 = vunpack.c.l.b16 %v1032
        %v1122 = vunpack.c.l.b16 %v1033
        %v1123 = vunpack.c.h.b16 %v1033
        %v1124 = vunpack.c.l.b16 %v1034
        %v1125 = vunpack.c.l.b16 %v1035
        %v1126 = vunpack.c.h.b16 %v1035
        %v1127 = vunpack.c.l.b16 %v1036
        %v1128 = vunpack.c.l.b16 %v1037
        %v1129 = vunpack.c.h.b16 %v1037
        %v1130 = vunpack.c.l.b16 %v1038
        %v1131 = vunpack.c.l.b16 %v1039
        %v1132 = vunpack.c.h.b16 %v1039
        %v1133 = vunpack.c.l.b16 %v1040
        %v1134 = vunpack.c.l.b16 %v1041
        %v1135 = vunpack.c.h.b16 %v1041
        %v1136 = vunpack.c.l.b16 %v1042
        %v1137 = vunpack.c.l.b16 %v1043
        %v1138 = vunpack.c.h.b16 %v1043
        %v1139 = vunpack.c.l.b16 %v1044
        %v1140 = vunpack.c.l.b16 %v1045
        %v1141 = vunpack.c.h.b16 %v1045
        %v1142 = vunpack.c.l.b16 %v1046
        %v1143 = vunpack.c.l.b16 %v1047
        %v1144 = vunpack.c.h.b16 %v1047
        %v1145 = vunpack.c.l.b16 %v1048
        %v1146 = vpack.c.b16 %v1101, %v1098
        %v1147 = vpack.c.b16 %v1102, %v1099
        %v1148 = vpack.c.b16 %v1103, %v1100
        %v1149 = vpack.c.b16 %v1107, %v1104
        %v1150 = vpack.c.b16 %v1108, %v1105
        %v1151 = vpack.c.b16 %v1109, %v1106
        %v1152 = vpack.c.b16 %v1113, %v1110
        %v1153 = vpack.c.b16 %v1114, %v1111
        %v1154 = vpack.c.b16 %v1115, %v1112
        %v1155 = vpack.c.b16 %v1119, %v1116
        %v1156 = vpack.c.b16 %v1120, %v1117
        %v1157 = vpack.c.b16 %v1121, %v1118
        %v1158 = vpack.c.b16 %v1125, %v1122
        %v1159 = vpack.c.b16 %v1126, %v1123
        %v1160 = vpack.c.b16 %v1127, %v1124
        %v1161 = vpack.c.b16 %v1131, %v1128
        %v1162 = vpack.c.b16 %v1132, %v1129
        %v1163 = vpack.c.b16 %v1133, %v1130
        %v1164 = vpack.c.b16 %v1137, %v1134
        %v1165 = vpack.c.b16 %v1138, %v1135
        %v1166 = vpack.c.b16 %v1139, %v1136
        %v1167 = vpack.c.b16 %v1143, %v1140
        %v1168 = vpack.c.b16 %v1144, %v1141
        %v1169 = vpack.c.b16 %v1145, %v1142
        %1194 = vmatprep.subr.bf16.mxu0 %v1147
        %1195 = vmatpush1.bf16.msra.mxu0 %v1146
        %1196 = vmatprep.subr.bf16.mxu0 %v1150
        %1197 = vmatpush1.bf16.msra.mxu0 %v1149
        %1198 = vmatprep.subr.bf16.mxu0 %v1153
        %1199 = vmatpush1.bf16.msra.mxu0 %v1152
        %1200 = vmatprep.subr.bf16.mxu0 %v1156
        %1201 = vmatpush1.bf16.msra.mxu0 %v1155
        %1202 = vmatprep.subr.bf16.mxu0 %v1159
        %1203 = vmatpush1.bf16.msra.mxu0 %v1158
        %1204 = vmatprep.subr.bf16.mxu0 %v1162
        %1205 = vmatpush1.bf16.msra.mxu0 %v1161
        %1206 = vmatprep.subr.bf16.mxu0 %v1165
        %1207 = vmatpush1.bf16.msra.mxu0 %v1164
        %1208 = vmatprep.subr.bf16.mxu0 %v1168
        %1209 = vmatpush1.bf16.msra.mxu0 %v1167
        %1210 = vmatprep.subr.bf16.mxu0 0
        %1211 = vmatpush1.bf16.msra.mxu0 0
        %1212 = vmatprep.subr.bf16.mxu0 0
        %1213 = vmatpush1.bf16.msra.mxu0 0
        %1214 = vmatprep.subr.bf16.mxu0 0
        %1215 = vmatpush1.bf16.msra.mxu0 0
        %1216 = vmatprep.subr.bf16.mxu0 0
        %1217 = vmatpush1.bf16.msra.mxu0 0
        %1218 = vmatprep.subr.bf16.mxu0 0
        %1219 = vmatpush1.bf16.msra.mxu0 0
        %1220 = vmatprep.subr.bf16.mxu0 0
        %1221 = vmatpush1.bf16.msra.mxu0 0
        %1222 = vmatprep.subr.bf16.mxu0 0
        %1223 = vmatpush1.bf16.msra.mxu0 0
        %1224 = vmatprep.subr.bf16.mxu0 0
        %1225 = vmatpush1.bf16.msra.mxu0 0
        %1226 = vmatprep.mubr.bf16.mxu0 0
        %1227 = vmatmul.mubr.bf16.gmra.mrb[0].mxu0 %v1016
        %v1228 = vpop.f32.mrb[0].mxu0
        %v1229 = vadd.f32 %v1054, %v1228
        %v1230 = vpop.f32.mrb[0].mxu0
        %v1231 = vadd.f32 %v1058, %v1230
        %v1232 = vpop.f32.mrb[0].mxu0
        %v1233 = vpop.f32.mrb[0].mxu0
        %1234 = vdwg.mxu0
        %1235 = vmatprep.subr.bf16.mxu0 0
        %1236 = vmatpush1.bf16.msra.mxu0 %v1148
        %1237 = vmatprep.subr.bf16.mxu0 0
        %1238 = vmatpush1.bf16.msra.mxu0 %v1151
        %1239 = vmatprep.subr.bf16.mxu0 0
        %1240 = vmatpush1.bf16.msra.mxu0 %v1154
        %1241 = vmatprep.subr.bf16.mxu0 0
        %1242 = vmatpush1.bf16.msra.mxu0 %v1157
        %1243 = vmatprep.subr.bf16.mxu0 0
        %1244 = vmatpush1.bf16.msra.mxu0 %v1160
        %1245 = vmatprep.subr.bf16.mxu0 0
        %1246 = vmatpush1.bf16.msra.mxu0 %v1163
        %1247 = vmatprep.subr.bf16.mxu0 0
        %1248 = vmatpush1.bf16.msra.mxu0 %v1166
        %1249 = vmatprep.subr.bf16.mxu0 0
        %1250 = vmatpush1.bf16.msra.mxu0 %v1169
        %1251 = vmatprep.subr.bf16.mxu0 0
        %1252 = vmatpush1.bf16.msra.mxu0 0
        %1253 = vmatprep.subr.bf16.mxu0 0
        %1254 = vmatpush1.bf16.msra.mxu0 0
        %1255 = vmatprep.subr.bf16.mxu0 0
        %1256 = vmatpush1.bf16.msra.mxu0 0
        %1257 = vmatprep.subr.bf16.mxu0 0
        %1258 = vmatpush1.bf16.msra.mxu0 0
        %1259 = vmatprep.subr.bf16.mxu0 0
        %1260 = vmatpush1.bf16.msra.mxu0 0
        %1261 = vmatprep.subr.bf16.mxu0 0
        %1262 = vmatpush1.bf16.msra.mxu0 0
        %1263 = vmatprep.subr.bf16.mxu0 0
        %1264 = vmatpush1.bf16.msra.mxu0 0
        %1265 = vmatprep.subr.bf16.mxu0 0
        %1266 = vmatpush1.bf16.msra.mxu0 0
        %1267 = vmatprep.mubr.bf16.mxu0 0
        %1268 = vmatmul.mubr.bf16.gmra.mrb[0].mxu0 %v1016
        %v1269 = vpop.f32.mrb[0].mxu0
        %v1270 = vadd.f32 %v1062, %v1269
        %v1271 = vpop.f32.mrb[0].mxu0
        %v1272 = vpop.f32.mrb[0].mxu0
        %v1273 = vpop.f32.mrb[0].mxu0
        %1274 = vdwg.mxu0
        %v1275 = vpack.c.bf16 %v1229, %v1229
        %v1276 = vpack.c.bf16 %v1231, %v1231
        %v1277 = vpack.c.bf16 %v1270, %v1270
        %1279 = vrot.lane.b32.xlu0 %v1275, 96
        %v1280 = vpop.permute.xlu0 %1279
        %1281 = vrot.lane.b32.xlu0 %v1275, 64
        %v1282 = vpop.permute.xlu0 %1281
        %1283 = vrot.lane.b32.xlu0 %v1275, 32
        %v1284 = vpop.permute.xlu0 %1283
        %1286 = vrot.lane.b32.xlu0 %v1276, 96
        %v1287 = vpop.permute.xlu0 %1286
        %1288 = vrot.lane.b32.xlu0 %v1276, 64
        %v1289 = vpop.permute.xlu0 %1288
        %1290 = vrot.lane.b32.xlu0 %v1276, 32
        %v1291 = vpop.permute.xlu0 %1290
        %1293 = vrot.lane.b32.xlu0 %v1277, 96
        %v1294 = vpop.permute.xlu0 %1293
        %1295 = vrot.lane.b32.xlu0 %v1277, 64
        %v1296 = vpop.permute.xlu0 %1295
        %1297 = vrot.lane.b32.xlu0 %v1277, 32
        %v1298 = vpop.permute.xlu0 %1297
        %v1299 = vld [vmem:[%s949] sm:$0x1]
        %v1301 = vlaneseq
        %v1302 = vshrl.u32 %v1301, 7
        %v1303 = vsub.s32 0, %v1302
        %v1304 = vrot.slane %v1299, %v1303
        %vm1306 = vcmask 261120
        %v1308 = vsel %vm1306, %v1275, 0
        %v1311 = vsel %vm1306, %v1276, 0
        %1313 = vmatprep.subr.bf16.mxu0 0
        %1314 = vmatpush1.bf16.xpose.msra.mxu0 %v1311
        %1315 = vmatprep.subr.bf16.mxu0 0
        %1316 = vmatpush1.bf16.xpose.msra.mxu0 0
        %1317 = vmatprep.subr.bf16.mxu0 0
        %1318 = vmatpush1.bf16.xpose.msra.mxu0 0
        %1319 = vmatprep.subr.bf16.mxu0 0
        %1320 = vmatpush1.bf16.xpose.msra.mxu0 0
        %1321 = vmatprep.subr.bf16.mxu0 0
        %1322 = vmatpush1.bf16.xpose.msra.mxu0 0
        %1323 = vmatprep.subr.bf16.mxu0 0
        %1324 = vmatpush1.bf16.xpose.msra.mxu0 0
        %1325 = vmatprep.subr.bf16.mxu0 0
        %1326 = vmatpush1.bf16.xpose.msra.mxu0 0
        %1327 = vmatprep.subr.bf16.mxu0 0
        %1328 = vmatpush1.bf16.xpose.msra.mxu0 0
        %1329 = vmatprep.subr.bf16.mxu0 0
        %1330 = vmatpush1.bf16.xpose.msra.mxu0 0
        %1331 = vmatprep.subr.bf16.mxu0 0
        %1332 = vmatpush1.bf16.xpose.msra.mxu0 0
        %1333 = vmatprep.subr.bf16.mxu0 0
        %1334 = vmatpush1.bf16.xpose.msra.mxu0 0
        %1335 = vmatprep.subr.bf16.mxu0 0
        %1336 = vmatpush1.bf16.xpose.msra.mxu0 0
        %1337 = vmatprep.subr.bf16.mxu0 0
        %1338 = vmatpush1.bf16.xpose.msra.mxu0 0
        %1339 = vmatprep.subr.bf16.mxu0 0
        %1340 = vmatpush1.bf16.xpose.msra.mxu0 0
        %1341 = vmatprep.subr.bf16.mxu0 0
        %1342 = vmatpush1.bf16.xpose.msra.mxu0 0
        %1343 = vmatprep.subr.bf16.mxu0 0
        %1344 = vmatpush1.bf16.xpose.msra.mxu0 0
        %1345 = vmatprep.mubr.bf16.mxu0 0
        %1346 = vmatmul.mubr.bf16.gmra.mrb[0].mxu0 %v1308
        %v1347 = vpop.f32.mrb[0].mxu0
        %v1348 = vadd.f32 %v1304, %v1347
        %v1349 = vpop.f32.mrb[0].mxu0
        %v1350 = vpop.f32.mrb[0].mxu0
        %v1351 = vpop.f32.mrb[0].mxu0
        %1352 = vdwg.mxu0
        %v1354 = vsel %vm1306, %v1280, 0
        %v1357 = vsel %vm1306, %v1287, 0
        %1359 = vmatprep.subr.bf16.mxu0 0
        %1360 = vmatpush1.bf16.xpose.msra.mxu0 %v1357
        %1361 = vmatprep.subr.bf16.mxu0 0
        %1362 = vmatpush1.bf16.xpose.msra.mxu0 0
        %1363 = vmatprep.subr.bf16.mxu0 0
        %1364 = vmatpush1.bf16.xpose.msra.mxu0 0
        %1365 = vmatprep.subr.bf16.mxu0 0
        %1366 = vmatpush1.bf16.xpose.msra.mxu0 0
        %1367 = vmatprep.subr.bf16.mxu0 0
        %1368 = vmatpush1.bf16.xpose.msra.mxu0 0
        %1369 = vmatprep.subr.bf16.mxu0 0
        %1370 = vmatpush1.bf16.xpose.msra.mxu0 0
        %1371 = vmatprep.subr.bf16.mxu0 0
        %1372 = vmatpush1.bf16.xpose.msra.mxu0 0
        %1373 = vmatprep.subr.bf16.mxu0 0
        %1374 = vmatpush1.bf16.xpose.msra.mxu0 0
        %1375 = vmatprep.subr.bf16.mxu0 0
        %1376 = vmatpush1.bf16.xpose.msra.mxu0 0
        %1377 = vmatprep.subr.bf16.mxu0 0
        %1378 = vmatpush1.bf16.xpose.msra.mxu0 0
        %1379 = vmatprep.subr.bf16.mxu0 0
        %1380 = vmatpush1.bf16.xpose.msra.mxu0 0
        %1381 = vmatprep.subr.bf16.mxu0 0
        %1382 = vmatpush1.bf16.xpose.msra.mxu0 0
        %1383 = vmatprep.subr.bf16.mxu0 0
        %1384 = vmatpush1.bf16.xpose.msra.mxu0 0
        %1385 = vmatprep.subr.bf16.mxu0 0
        %1386 = vmatpush1.bf16.xpose.msra.mxu0 0
        %1387 = vmatprep.subr.bf16.mxu0 0
        %1388 = vmatpush1.bf16.xpose.msra.mxu0 0
        %1389 = vmatprep.subr.bf16.mxu0 0
        %1390 = vmatpush1.bf16.xpose.msra.mxu0 0
        %1391 = vmatprep.mubr.bf16.mxu0 0
        %1392 = vmatmul.mubr.bf16.gmra.mrb[0].mxu0 %v1354
        %v1393 = vpop.f32.mrb[0].mxu0
        %v1394 = vadd.f32 %v1304, %v1393
        %v1395 = vpop.f32.mrb[0].mxu0
        %v1396 = vpop.f32.mrb[0].mxu0
        %v1397 = vpop.f32.mrb[0].mxu0
        %1398 = vdwg.mxu0
        %v1400 = vsel %vm1306, %v1282, 0
        %v1403 = vsel %vm1306, %v1289, 0
        %1405 = vmatprep.subr.bf16.mxu0 0
        %1406 = vmatpush1.bf16.xpose.msra.mxu0 %v1403
        %1407 = vmatprep.subr.bf16.mxu0 0
        %1408 = vmatpush1.bf16.xpose.msra.mxu0 0
        %1409 = vmatprep.subr.bf16.mxu0 0
        %1410 = vmatpush1.bf16.xpose.msra.mxu0 0
        %1411 = vmatprep.subr.bf16.mxu0 0
        %1412 = vmatpush1.bf16.xpose.msra.mxu0 0
        %1413 = vmatprep.subr.bf16.mxu0 0
        %1414 = vmatpush1.bf16.xpose.msra.mxu0 0
        %1415 = vmatprep.subr.bf16.mxu0 0
        %1416 = vmatpush1.bf16.xpose.msra.mxu0 0
        %1417 = vmatprep.subr.bf16.mxu0 0
        %1418 = vmatpush1.bf16.xpose.msra.mxu0 0
        %1419 = vmatprep.subr.bf16.mxu0 0
        %1420 = vmatpush1.bf16.xpose.msra.mxu0 0
        %1421 = vmatprep.subr.bf16.mxu0 0
        %1422 = vmatpush1.bf16.xpose.msra.mxu0 0
        %1423 = vmatprep.subr.bf16.mxu0 0
        %1424 = vmatpush1.bf16.xpose.msra.mxu0 0
        %1425 = vmatprep.subr.bf16.mxu0 0
        %1426 = vmatpush1.bf16.xpose.msra.mxu0 0
        %1427 = vmatprep.subr.bf16.mxu0 0
        %1428 = vmatpush1.bf16.xpose.msra.mxu0 0
        %1429 = vmatprep.subr.bf16.mxu0 0
        %1430 = vmatpush1.bf16.xpose.msra.mxu0 0
        %1431 = vmatprep.subr.bf16.mxu0 0
        %1432 = vmatpush1.bf16.xpose.msra.mxu0 0
        %1433 = vmatprep.subr.bf16.mxu0 0
        %1434 = vmatpush1.bf16.xpose.msra.mxu0 0
        %1435 = vmatprep.subr.bf16.mxu0 0
        %1436 = vmatpush1.bf16.xpose.msra.mxu0 0
        %1437 = vmatprep.mubr.bf16.mxu0 0
        %1438 = vmatmul.mubr.bf16.gmra.mrb[0].mxu0 %v1400
        %v1439 = vpop.f32.mrb[0].mxu0
        %v1440 = vadd.f32 %v1304, %v1439
        %v1441 = vpop.f32.mrb[0].mxu0
        %v1442 = vpop.f32.mrb[0].mxu0
        %v1443 = vpop.f32.mrb[0].mxu0
        %1444 = vdwg.mxu0
        %v1446 = vsel %vm1306, %v1284, 0
        %v1449 = vsel %vm1306, %v1291, 0
        %1451 = vmatprep.subr.bf16.mxu0 0
        %1452 = vmatpush1.bf16.xpose.msra.mxu0 %v1449
        %1453 = vmatprep.subr.bf16.mxu0 0
        %1454 = vmatpush1.bf16.xpose.msra.mxu0 0
        %1455 = vmatprep.subr.bf16.mxu0 0
        %1456 = vmatpush1.bf16.xpose.msra.mxu0 0
        %1457 = vmatprep.subr.bf16.mxu0 0
        %1458 = vmatpush1.bf16.xpose.msra.mxu0 0
        %1459 = vmatprep.subr.bf16.mxu0 0
        %1460 = vmatpush1.bf16.xpose.msra.mxu0 0
        %1461 = vmatprep.subr.bf16.mxu0 0
        %1462 = vmatpush1.bf16.xpose.msra.mxu0 0
        %1463 = vmatprep.subr.bf16.mxu0 0
        %1464 = vmatpush1.bf16.xpose.msra.mxu0 0
        %1465 = vmatprep.subr.bf16.mxu0 0
        %1466 = vmatpush1.bf16.xpose.msra.mxu0 0
        %1467 = vmatprep.subr.bf16.mxu0 0
        %1468 = vmatpush1.bf16.xpose.msra.mxu0 0
        %1469 = vmatprep.subr.bf16.mxu0 0
        %1470 = vmatpush1.bf16.xpose.msra.mxu0 0
        %1471 = vmatprep.subr.bf16.mxu0 0
        %1472 = vmatpush1.bf16.xpose.msra.mxu0 0
        %1473 = vmatprep.subr.bf16.mxu0 0
        %1474 = vmatpush1.bf16.xpose.msra.mxu0 0
        %1475 = vmatprep.subr.bf16.mxu0 0
        %1476 = vmatpush1.bf16.xpose.msra.mxu0 0
        %1477 = vmatprep.subr.bf16.mxu0 0
        %1478 = vmatpush1.bf16.xpose.msra.mxu0 0
        %1479 = vmatprep.subr.bf16.mxu0 0
        %1480 = vmatpush1.bf16.xpose.msra.mxu0 0
        %1481 = vmatprep.subr.bf16.mxu0 0
        %1482 = vmatpush1.bf16.xpose.msra.mxu0 0
        %1483 = vmatprep.mubr.bf16.mxu0 0
        %1484 = vmatmul.mubr.bf16.gmra.mrb[0].mxu0 %v1446
        %v1485 = vpop.f32.mrb[0].mxu0
        %v1486 = vadd.f32 %v1304, %v1485
        %v1487 = vpop.f32.mrb[0].mxu0
        %v1488 = vpop.f32.mrb[0].mxu0
        %v1489 = vpop.f32.mrb[0].mxu0
        %1490 = vdwg.mxu0
        %vm1491 = vcmask 64512
        %v1492 = vsel %vm1491, %v1348, -inf
        %1493 = vmax.xlane.f32.xlu0 %v1492
        %v1494 = vpop.xlane.xlu0 %1493
        %v1495 = vsel %vm1491, %v1394, -inf
        %1496 = vmax.xlane.f32.xlu0 %v1495
        %v1497 = vpop.xlane.xlu0 %1496
        %v1498 = vsel %vm1491, %v1440, -inf
        %1499 = vmax.xlane.f32.xlu0 %v1498
        %v1500 = vpop.xlane.xlu0 %1499
        %v1501 = vsel %vm1491, %v1486, -inf
        %1502 = vmax.xlane.f32.xlu0 %v1501
        %v1503 = vpop.xlane.xlu0 %1502
        %v1504 = vsub.f32 %v1348, %v1494
        %v1505 = vsub.f32 %v1394, %v1497
        %v1506 = vsub.f32 %v1440, %v1500
        %v1507 = vsub.f32 %v1486, %v1503
        %v1508 = vmul.f32 %v1504, 1.442695
        %v1509 = vpow.pop %v1508
        %v1510 = vmul.f32 %v1505, 1.442695
        %v1511 = vpow.pop %v1510
        %v1512 = vmul.f32 %v1506, 1.442695
        %v1513 = vpow.pop %v1512
        %v1514 = vmul.f32 %v1507, 1.442695
        %v1515 = vpow.pop %v1514
        %v1516 = vsel %vm1491, %v1509, 0.0
        %1517 = vadd.xlane.f32.xlu0 %v1516
        %v1518 = vpop.xlane.xlu0 %1517
        %v1519 = vsel %vm1491, %v1511, 0.0
        %1520 = vadd.xlane.f32.xlu0 %v1519
        %v1521 = vpop.xlane.xlu0 %1520
        %v1522 = vsel %vm1491, %v1513, 0.0
        %1523 = vadd.xlane.f32.xlu0 %v1522
        %v1524 = vpop.xlane.xlu0 %1523
        %v1525 = vsel %vm1491, %v1515, 0.0
        %1526 = vadd.xlane.f32.xlu0 %v1525
        %v1527 = vpop.xlane.xlu0 %1526
        %v1528 = vrcp.pop %v1518
        %v1529 = vrcp.pop %v1521
        %v1530 = vrcp.pop %v1524
        %v1531 = vrcp.pop %v1527
        %v1532 = vmul.f32 %v1509, %v1528
        %v1533 = vmul.f32 %v1511, %v1529
        %v1534 = vmul.f32 %v1513, %v1530
        %v1535 = vmul.f32 %v1515, %v1531
        %v1536 = vpack.c.bf16 %v1532, %v1532
        %v1537 = vpack.c.bf16 %v1533, %v1533
        %v1538 = vpack.c.bf16 %v1534, %v1534
        %v1539 = vpack.c.bf16 %v1535, %v1535
        %v1541 = vsel %vm1491, %v1536, 0
        %vm1543 = vcmask 1043456
        %v1545 = vsel %vm1543, %v1277, 0
        %1547 = vmatprep.subr.bf16.mxu0 0
        %1548 = vmatpush1.bf16.msra.mxu0 %v1545
        %1549 = vmatprep.subr.bf16.mxu0 0
        %1550 = vmatpush1.bf16.msra.mxu0 0
        %1551 = vmatprep.subr.bf16.mxu0 0
        %1552 = vmatpush1.bf16.msra.mxu0 0
        %1553 = vmatprep.subr.bf16.mxu0 0
        %1554 = vmatpush1.bf16.msra.mxu0 0
        %1555 = vmatprep.subr.bf16.mxu0 0
        %1556 = vmatpush1.bf16.msra.mxu0 0
        %1557 = vmatprep.subr.bf16.mxu0 0
        %1558 = vmatpush1.bf16.msra.mxu0 0
        %1559 = vmatprep.subr.bf16.mxu0 0
        %1560 = vmatpush1.bf16.msra.mxu0 0
        %1561 = vmatprep.subr.bf16.mxu0 0
        %1562 = vmatpush1.bf16.msra.mxu0 0
        %1563 = vmatprep.subr.bf16.mxu0 0
        %1564 = vmatpush1.bf16.msra.mxu0 0
        %1565 = vmatprep.subr.bf16.mxu0 0
        %1566 = vmatpush1.bf16.msra.mxu0 0
        %1567 = vmatprep.subr.bf16.mxu0 0
        %1568 = vmatpush1.bf16.msra.mxu0 0
        %1569 = vmatprep.subr.bf16.mxu0 0
        %1570 = vmatpush1.bf16.msra.mxu0 0
        %1571 = vmatprep.subr.bf16.mxu0 0
        %1572 = vmatpush1.bf16.msra.mxu0 0
        %1573 = vmatprep.subr.bf16.mxu0 0
        %1574 = vmatpush1.bf16.msra.mxu0 0
        %1575 = vmatprep.subr.bf16.mxu0 0
        %1576 = vmatpush1.bf16.msra.mxu0 0
        %1577 = vmatprep.subr.bf16.mxu0 0
        %1578 = vmatpush1.bf16.msra.mxu0 0
        %1579 = vmatprep.mubr.bf16.mxu0 0
        %1580 = vmatmul.mubr.bf16.gmra.mrb[0].mxu0 %v1541
        %v1581 = vpop.f32.mrb[0].mxu0
        %v1582 = vadd.f32 0.0, %v1581
        %v1583 = vpop.f32.mrb[0].mxu0
        %v1584 = vpop.f32.mrb[0].mxu0
        %v1585 = vpop.f32.mrb[0].mxu0
        %1586 = vdwg.mxu0
        %v1588 = vsel %vm1491, %v1537, 0
        %v1591 = vsel %vm1543, %v1294, 0
        %1593 = vmatprep.subr.bf16.mxu0 0
        %1594 = vmatpush1.bf16.msra.mxu0 %v1591
        %1595 = vmatprep.subr.bf16.mxu0 0
        %1596 = vmatpush1.bf16.msra.mxu0 0
        %1597 = vmatprep.subr.bf16.mxu0 0
        %1598 = vmatpush1.bf16.msra.mxu0 0
        %1599 = vmatprep.subr.bf16.mxu0 0
        %1600 = vmatpush1.bf16.msra.mxu0 0
        %1601 = vmatprep.subr.bf16.mxu0 0
        %1602 = vmatpush1.bf16.msra.mxu0 0
        %1603 = vmatprep.subr.bf16.mxu0 0
        %1604 = vmatpush1.bf16.msra.mxu0 0
        %1605 = vmatprep.subr.bf16.mxu0 0
        %1606 = vmatpush1.bf16.msra.mxu0 0
        %1607 = vmatprep.subr.bf16.mxu0 0
        %1608 = vmatpush1.bf16.msra.mxu0 0
        %1609 = vmatprep.subr.bf16.mxu0 0
        %1610 = vmatpush1.bf16.msra.mxu0 0
        %1611 = vmatprep.subr.bf16.mxu0 0
        %1612 = vmatpush1.bf16.msra.mxu0 0
        %1613 = vmatprep.subr.bf16.mxu0 0
        %1614 = vmatpush1.bf16.msra.mxu0 0
        %1615 = vmatprep.subr.bf16.mxu0 0
        %1616 = vmatpush1.bf16.msra.mxu0 0
        %1617 = vmatprep.subr.bf16.mxu0 0
        %1618 = vmatpush1.bf16.msra.mxu0 0
        %1619 = vmatprep.subr.bf16.mxu0 0
        %1620 = vmatpush1.bf16.msra.mxu0 0
        %1621 = vmatprep.subr.bf16.mxu0 0
        %1622 = vmatpush1.bf16.msra.mxu0 0
        %1623 = vmatprep.subr.bf16.mxu0 0
        %1624 = vmatpush1.bf16.msra.mxu0 0
        %1625 = vmatprep.mubr.bf16.mxu0 0
        %1626 = vmatmul.mubr.bf16.gmra.mrb[0].mxu0 %v1588
        %v1627 = vpop.f32.mrb[0].mxu0
        %v1628 = vadd.f32 0.0, %v1627
        %v1629 = vpop.f32.mrb[0].mxu0
        %v1630 = vpop.f32.mrb[0].mxu0
        %v1631 = vpop.f32.mrb[0].mxu0
        %1632 = vdwg.mxu0
        %v1634 = vsel %vm1491, %v1538, 0
        %v1637 = vsel %vm1543, %v1296, 0
        %1639 = vmatprep.subr.bf16.mxu0 0
        %1640 = vmatpush1.bf16.msra.mxu0 %v1637
        %1641 = vmatprep.subr.bf16.mxu0 0
        %1642 = vmatpush1.bf16.msra.mxu0 0
        %1643 = vmatprep.subr.bf16.mxu0 0
        %1644 = vmatpush1.bf16.msra.mxu0 0
        %1645 = vmatprep.subr.bf16.mxu0 0
        %1646 = vmatpush1.bf16.msra.mxu0 0
        %1647 = vmatprep.subr.bf16.mxu0 0
        %1648 = vmatpush1.bf16.msra.mxu0 0
        %1649 = vmatprep.subr.bf16.mxu0 0
        %1650 = vmatpush1.bf16.msra.mxu0 0
        %1651 = vmatprep.subr.bf16.mxu0 0
        %1652 = vmatpush1.bf16.msra.mxu0 0
        %1653 = vmatprep.subr.bf16.mxu0 0
        %1654 = vmatpush1.bf16.msra.mxu0 0
        %1655 = vmatprep.subr.bf16.mxu0 0
        %1656 = vmatpush1.bf16.msra.mxu0 0
        %1657 = vmatprep.subr.bf16.mxu0 0
        %1658 = vmatpush1.bf16.msra.mxu0 0
        %1659 = vmatprep.subr.bf16.mxu0 0
        %1660 = vmatpush1.bf16.msra.mxu0 0
        %1661 = vmatprep.subr.bf16.mxu0 0
        %1662 = vmatpush1.bf16.msra.mxu0 0
        %1663 = vmatprep.subr.bf16.mxu0 0
        %1664 = vmatpush1.bf16.msra.mxu0 0
        %1665 = vmatprep.subr.bf16.mxu0 0
        %1666 = vmatpush1.bf16.msra.mxu0 0
        %1667 = vmatprep.subr.bf16.mxu0 0
        %1668 = vmatpush1.bf16.msra.mxu0 0
        %1669 = vmatprep.subr.bf16.mxu0 0
        %1670 = vmatpush1.bf16.msra.mxu0 0
        %1671 = vmatprep.mubr.bf16.mxu0 0
        %1672 = vmatmul.mubr.bf16.gmra.mrb[0].mxu0 %v1634
        %v1673 = vpop.f32.mrb[0].mxu0
        %v1674 = vadd.f32 0.0, %v1673
        %v1675 = vpop.f32.mrb[0].mxu0
        %v1676 = vpop.f32.mrb[0].mxu0
        %v1677 = vpop.f32.mrb[0].mxu0
        %1678 = vdwg.mxu0
        %v1680 = vsel %vm1491, %v1539, 0
        %v1683 = vsel %vm1543, %v1298, 0
        %1685 = vmatprep.subr.bf16.mxu0 0
        %1686 = vmatpush1.bf16.msra.mxu0 %v1683
        %1687 = vmatprep.subr.bf16.mxu0 0
        %1688 = vmatpush1.bf16.msra.mxu0 0
        %1689 = vmatprep.subr.bf16.mxu0 0
        %1690 = vmatpush1.bf16.msra.mxu0 0
        %1691 = vmatprep.subr.bf16.mxu0 0
        %1692 = vmatpush1.bf16.msra.mxu0 0
        %1693 = vmatprep.subr.bf16.mxu0 0
        %1694 = vmatpush1.bf16.msra.mxu0 0
        %1695 = vmatprep.subr.bf16.mxu0 0
        %1696 = vmatpush1.bf16.msra.mxu0 0
        %1697 = vmatprep.subr.bf16.mxu0 0
        %1698 = vmatpush1.bf16.msra.mxu0 0
        %1699 = vmatprep.subr.bf16.mxu0 0
        %1700 = vmatpush1.bf16.msra.mxu0 0
        %1701 = vmatprep.subr.bf16.mxu0 0
        %1702 = vmatpush1.bf16.msra.mxu0 0
        %1703 = vmatprep.subr.bf16.mxu0 0
        %1704 = vmatpush1.bf16.msra.mxu0 0
        %1705 = vmatprep.subr.bf16.mxu0 0
        %1706 = vmatpush1.bf16.msra.mxu0 0
        %1707 = vmatprep.subr.bf16.mxu0 0
        %1708 = vmatpush1.bf16.msra.mxu0 0
        %1709 = vmatprep.subr.bf16.mxu0 0
        %1710 = vmatpush1.bf16.msra.mxu0 0
        %1711 = vmatprep.subr.bf16.mxu0 0
        %1712 = vmatpush1.bf16.msra.mxu0 0
        %1713 = vmatprep.subr.bf16.mxu0 0
        %1714 = vmatpush1.bf16.msra.mxu0 0
        %1715 = vmatprep.subr.bf16.mxu0 0
        %1716 = vmatpush1.bf16.msra.mxu0 0
        %1717 = vmatprep.mubr.bf16.mxu0 0
        %1718 = vmatmul.mubr.bf16.gmra.mrb[0].mxu0 %v1680
        %v1719 = vpop.f32.mrb[0].mxu0
        %v1720 = vadd.f32 0.0, %v1719
        %v1721 = vpop.f32.mrb[0].mxu0
        %v1722 = vpop.f32.mrb[0].mxu0
        %v1723 = vpop.f32.mrb[0].mxu0
        %1724 = vdwg.mxu0
        %1726 = vrot.lane.b32.xlu0 %v1628, 32
        %v1727 = vpop.permute.xlu0 %1726
        %1730 = vrot.lane.b32.xlu0 %v1674, 64
        %v1731 = vpop.permute.xlu0 %1730
        %1734 = vrot.lane.b32.xlu0 %v1720, 96
        %v1735 = vpop.permute.xlu0 %1734
        %v1737 = vsel %vm1306, %v1582, %v1727
        %vm1738 = vcmask 523264
        %v1739 = vsel %vm1738, %v1737, %v1731
        %vm1740 = vcmask 785408
        %v1741 = vsel %vm1740, %v1739, %v1735
        %v1742 = vpack.c.bf16 %v1741, %v1741
        %v1743 = vld [vmem:[%s817] sm:$0xf]
        %v1744 = vld [vmem:[%s817 + $0x4] sm:$0xf]
        %v1745 = vld [vmem:[%s817 + $0x8] sm:$0xf]
        %v1746 = vld [vmem:[%s817 + $0xc] sm:$0xf]
        %v1747 = vld [vmem:[%s817 + $0x10] sm:$0xf]
        %v1748 = vld [vmem:[%s817 + $0x14] sm:$0xf]
        %v1749 = vld [vmem:[%s817 + $0x18] sm:$0xf]
        %v1750 = vld [vmem:[%s817 + $0x1c] sm:$0xf]
        %v1751 = vld [vmem:[%s817 + $0x20] sm:$0xf]
        %v1752 = vld [vmem:[%s817 + $0x24] sm:$0xf]
        %v1753 = vld [vmem:[%s817 + $0x28] sm:$0xf]
        %v1754 = vld [vmem:[%s817 + $0x2c] sm:$0xf]
        %v1755 = vld [vmem:[%s817 + $0x30] sm:$0xf]
        %v1756 = vld [vmem:[%s817 + $0x34] sm:$0xf]
        %v1757 = vld [vmem:[%s817 + $0x38] sm:$0xf]
        %v1758 = vld [vmem:[%s817 + $0x3c] sm:$0xf]
        %v1759 = vld [vmem:[%s956] sm:$0x1]
        %v1761 = vlaneseq
        %v1762 = vshrl.u32 %v1761, 7
        %v1763 = vsub.s32 0, %v1762
        %v1764 = vrot.slane %v1759, %v1763
        %v1782 = vunpack.c.l.b16 %v1743
        %v1783 = vunpack.c.l.b16 %v1744
        %v1784 = vunpack.c.l.b16 %v1745
        %v1785 = vunpack.c.l.b16 %v1746
        %v1786 = vunpack.c.l.b16 %v1747
        %v1787 = vunpack.c.l.b16 %v1748
        %v1788 = vunpack.c.l.b16 %v1749
        %v1789 = vunpack.c.l.b16 %v1750
        %v1790 = vunpack.c.l.b16 %v1751
        %v1791 = vunpack.c.l.b16 %v1752
        %v1792 = vunpack.c.l.b16 %v1753
        %v1793 = vunpack.c.l.b16 %v1754
        %v1794 = vunpack.c.l.b16 %v1755
        %v1795 = vunpack.c.l.b16 %v1756
        %v1796 = vunpack.c.l.b16 %v1757
        %v1797 = vunpack.c.l.b16 %v1758
        %v1798 = vpack.c.b16 %v1783, %v1782
        %v1799 = vpack.c.b16 %v1785, %v1784
        %v1800 = vpack.c.b16 %v1787, %v1786
        %v1801 = vpack.c.b16 %v1789, %v1788
        %v1802 = vpack.c.b16 %v1791, %v1790
        %v1803 = vpack.c.b16 %v1793, %v1792
        %v1804 = vpack.c.b16 %v1795, %v1794
        %v1805 = vpack.c.b16 %v1797, %v1796
        %1814 = vmatprep.subr.bf16.mxu0 0
        %1815 = vmatpush1.bf16.msra.mxu0 %v1798
        %1816 = vmatprep.subr.bf16.mxu0 0
        %1817 = vmatpush1.bf16.msra.mxu0 %v1799
        %1818 = vmatprep.subr.bf16.mxu0 0
        %1819 = vmatpush1.bf16.msra.mxu0 %v1800
        %1820 = vmatprep.subr.bf16.mxu0 0
        %1821 = vmatpush1.bf16.msra.mxu0 %v1801
        %1822 = vmatprep.subr.bf16.mxu0 0
        %1823 = vmatpush1.bf16.msra.mxu0 %v1802
        %1824 = vmatprep.subr.bf16.mxu0 0
        %1825 = vmatpush1.bf16.msra.mxu0 %v1803
        %1826 = vmatprep.subr.bf16.mxu0 0
        %1827 = vmatpush1.bf16.msra.mxu0 %v1804
        %1828 = vmatprep.subr.bf16.mxu0 0
        %1829 = vmatpush1.bf16.msra.mxu0 %v1805
        %1830 = vmatprep.subr.bf16.mxu0 0
        %1831 = vmatpush1.bf16.msra.mxu0 0
        %1832 = vmatprep.subr.bf16.mxu0 0
        %1833 = vmatpush1.bf16.msra.mxu0 0
        %1834 = vmatprep.subr.bf16.mxu0 0
        %1835 = vmatpush1.bf16.msra.mxu0 0
        %1836 = vmatprep.subr.bf16.mxu0 0
        %1837 = vmatpush1.bf16.msra.mxu0 0
        %1838 = vmatprep.subr.bf16.mxu0 0
        %1839 = vmatpush1.bf16.msra.mxu0 0
        %1840 = vmatprep.subr.bf16.mxu0 0
        %1841 = vmatpush1.bf16.msra.mxu0 0
        %1842 = vmatprep.subr.bf16.mxu0 0
        %1843 = vmatpush1.bf16.msra.mxu0 0
        %1844 = vmatprep.subr.bf16.mxu0 0
        %1845 = vmatpush1.bf16.msra.mxu0 0
        %1846 = vmatprep.mubr.bf16.mxu0 0
        %1847 = vmatmul.mubr.bf16.gmra.mrb[0].mxu0 %v1742
        %v1848 = vpop.f32.mrb[0].mxu0
        %v1849 = vadd.f32 %v1764, %v1848
        %v1850 = vpop.f32.mrb[0].mxu0
        %v1851 = vpop.f32.mrb[0].mxu0
        %v1852 = vpop.f32.mrb[0].mxu0
        %1853 = vdwg.mxu0
        %v1854 = vadd.f32 %v1849, %v1015
        %v1855 = vld [vmem:[%s959] sm:$0x1]
        %v1856 = vld [vmem:[%s962] sm:$0x1]
        %1857 = vadd.xlane.f32.xlu0 %v1854
        %v1858 = vpop.xlane.xlu0 %1857
        %v1859 = vrcp.pop 128.0
        %v1860 = vmul.f32 %v1858, %v1859
        %v1861 = vsub.f32 %v1854, %v1860
        %v1862 = vmul.f32 %v1861, %v1861
        %1863 = vadd.xlane.f32.xlu0 %v1862
        %v1864 = vpop.xlane.xlu0 %1863
        %v1865 = vmul.f32 %v1864, %v1859
        %v1866 = vadd.f32 %v1865, 1e-12
        %v1867 = vrsqrt.pop %v1866
        %v1868 = vmul.f32 %v1861, %v1867
        %v1870 = vlaneseq
        %v1871 = vshrl.u32 %v1870, 7
        %v1872 = vsub.s32 0, %v1871
        %v1873 = vrot.slane %v1855, %v1872
        %v1875 = vmul.f32 %v1868, %v1873
        %v1877 = vlaneseq
        %v1878 = vshrl.u32 %v1877, 7
        %v1879 = vsub.s32 0, %v1878
        %v1880 = vrot.slane %v1856, %v1879
        %v1882 = vadd.f32 %v1875, %v1880
        %v1883 = vpack.c.bf16 %v1882, %v1882
        %v1884 = vld [vmem:[%s826] sm:$0xff]
        %v1885 = vld [vmem:[%s826 + $0x8] sm:$0xff]
        %v1886 = vld [vmem:[%s826 + $0x10] sm:$0xff]
        %v1887 = vld [vmem:[%s826 + $0x18] sm:$0xff]
        %v1888 = vld [vmem:[%s826 + $0x20] sm:$0xff]
        %v1889 = vld [vmem:[%s826 + $0x28] sm:$0xff]
        %v1890 = vld [vmem:[%s826 + $0x30] sm:$0xff]
        %v1891 = vld [vmem:[%s826 + $0x38] sm:$0xff]
        %v1892 = vld [vmem:[%s826 + $0x40] sm:$0xff]
        %v1893 = vld [vmem:[%s826 + $0x48] sm:$0xff]
        %v1894 = vld [vmem:[%s826 + $0x50] sm:$0xff]
        %v1895 = vld [vmem:[%s826 + $0x58] sm:$0xff]
        %v1896 = vld [vmem:[%s826 + $0x60] sm:$0xff]
        %v1897 = vld [vmem:[%s826 + $0x68] sm:$0xff]
        %v1898 = vld [vmem:[%s826 + $0x70] sm:$0xff]
        %v1899 = vld [vmem:[%s826 + $0x78] sm:$0xff]
        %v1900 = vld [vmem:[%s966] sm:$0x3]
        %v1902 = vlaneseq
        %v1903 = vshrl.u32 %v1902, 7
        %v1904 = vsub.s32 0, %v1903
        %v1905 = vrot.slane %v1900, %v1904
        %v1906 = vlaneseq
        %v1907 = vshrl.u32 %v1906, 7
        %v1908 = vsub.s32 1, %v1907
        %v1909 = vrot.slane %v1900, %v1908
        %v1928 = vunpack.c.l.b16 %v1884
        %v1929 = vunpack.c.h.b16 %v1884
        %v1930 = vunpack.c.l.b16 %v1885
        %v1931 = vunpack.c.h.b16 %v1885
        %v1932 = vunpack.c.l.b16 %v1886
        %v1933 = vunpack.c.h.b16 %v1886
        %v1934 = vunpack.c.l.b16 %v1887
        %v1935 = vunpack.c.h.b16 %v1887
        %v1936 = vunpack.c.l.b16 %v1888
        %v1937 = vunpack.c.h.b16 %v1888
        %v1938 = vunpack.c.l.b16 %v1889
        %v1939 = vunpack.c.h.b16 %v1889
        %v1940 = vunpack.c.l.b16 %v1890
        %v1941 = vunpack.c.h.b16 %v1890
        %v1942 = vunpack.c.l.b16 %v1891
        %v1943 = vunpack.c.h.b16 %v1891
        %v1944 = vunpack.c.l.b16 %v1892
        %v1945 = vunpack.c.h.b16 %v1892
        %v1946 = vunpack.c.l.b16 %v1893
        %v1947 = vunpack.c.h.b16 %v1893
        %v1948 = vunpack.c.l.b16 %v1894
        %v1949 = vunpack.c.h.b16 %v1894
        %v1950 = vunpack.c.l.b16 %v1895
        %v1951 = vunpack.c.h.b16 %v1895
        %v1952 = vunpack.c.l.b16 %v1896
        %v1953 = vunpack.c.h.b16 %v1896
        %v1954 = vunpack.c.l.b16 %v1897
        %v1955 = vunpack.c.h.b16 %v1897
        %v1956 = vunpack.c.l.b16 %v1898
        %v1957 = vunpack.c.h.b16 %v1898
        %v1958 = vunpack.c.l.b16 %v1899
        %v1959 = vunpack.c.h.b16 %v1899
        %v1960 = vpack.c.b16 %v1930, %v1928
        %v1961 = vpack.c.b16 %v1931, %v1929
        %v1962 = vpack.c.b16 %v1934, %v1932
        %v1963 = vpack.c.b16 %v1935, %v1933
        %v1964 = vpack.c.b16 %v1938, %v1936
        %v1965 = vpack.c.b16 %v1939, %v1937
        %v1966 = vpack.c.b16 %v1942, %v1940
        %v1967 = vpack.c.b16 %v1943, %v1941
        %v1968 = vpack.c.b16 %v1946, %v1944
        %v1969 = vpack.c.b16 %v1947, %v1945
        %v1970 = vpack.c.b16 %v1950, %v1948
        %v1971 = vpack.c.b16 %v1951, %v1949
        %v1972 = vpack.c.b16 %v1954, %v1952
        %v1973 = vpack.c.b16 %v1955, %v1953
        %v1974 = vpack.c.b16 %v1958, %v1956
        %v1975 = vpack.c.b16 %v1959, %v1957
        %1992 = vmatprep.subr.bf16.mxu0 %v1961
        %1993 = vmatpush1.bf16.msra.mxu0 %v1960
        %1994 = vmatprep.subr.bf16.mxu0 %v1963
        %1995 = vmatpush1.bf16.msra.mxu0 %v1962
        %1996 = vmatprep.subr.bf16.mxu0 %v1965
        %1997 = vmatpush1.bf16.msra.mxu0 %v1964
        %1998 = vmatprep.subr.bf16.mxu0 %v1967
        %1999 = vmatpush1.bf16.msra.mxu0 %v1966
        %2000 = vmatprep.subr.bf16.mxu0 %v1969
        %2001 = vmatpush1.bf16.msra.mxu0 %v1968
        %2002 = vmatprep.subr.bf16.mxu0 %v1971
        %2003 = vmatpush1.bf16.msra.mxu0 %v1970
        %2004 = vmatprep.subr.bf16.mxu0 %v1973
        %2005 = vmatpush1.bf16.msra.mxu0 %v1972
        %2006 = vmatprep.subr.bf16.mxu0 %v1975
        %2007 = vmatpush1.bf16.msra.mxu0 %v1974
        %2008 = vmatprep.subr.bf16.mxu0 0
        %2009 = vmatpush1.bf16.msra.mxu0 0
        %2010 = vmatprep.subr.bf16.mxu0 0
        %2011 = vmatpush1.bf16.msra.mxu0 0
        %2012 = vmatprep.subr.bf16.mxu0 0
        %2013 = vmatpush1.bf16.msra.mxu0 0
        %2014 = vmatprep.subr.bf16.mxu0 0
        %2015 = vmatpush1.bf16.msra.mxu0 0
        %2016 = vmatprep.subr.bf16.mxu0 0
        %2017 = vmatpush1.bf16.msra.mxu0 0
        %2018 = vmatprep.subr.bf16.mxu0 0
        %2019 = vmatpush1.bf16.msra.mxu0 0
        %2020 = vmatprep.subr.bf16.mxu0 0
        %2021 = vmatpush1.bf16.msra.mxu0 0
        %2022 = vmatprep.subr.bf16.mxu0 0
        %2023 = vmatpush1.bf16.msra.mxu0 0
        %2024 = vmatprep.mubr.bf16.mxu0 0
        %2025 = vmatmul.mubr.bf16.gmra.mrb[0].mxu0 %v1883
        %v2026 = vpop.f32.mrb[0].mxu0
        %v2027 = vadd.f32 %v1905, %v2026
        %v2028 = vpop.f32.mrb[0].mxu0
        %v2029 = vadd.f32 %v1909, %v2028
        %v2030 = vpop.f32.mrb[0].mxu0
        %v2031 = vpop.f32.mrb[0].mxu0
        %2032 = vdwg.mxu0
        %v2033 = vmul.f32 %v2027, 0.5
        %v2034 = vmul.f32 %v2029, 0.5
        %v2035 = vmul.f32 %v2027, 0.044715
        %v2036 = vmul.f32 %v2029, 0.044715
        %v2037 = vmul.f32 %v2035, %v2027
        %v2038 = vmul.f32 %v2036, %v2029
        %v2039 = vmul.f32 %v2037, %v2027
        %v2040 = vmul.f32 %v2038, %v2029
        %v2041 = vadd.f32 %v2027, %v2039
        %v2042 = vadd.f32 %v2029, %v2040
        %v2043 = vmul.f32 %v2041, 0.7978846
        %v2044 = vmul.f32 %v2042, 0.7978846
        %v2045 = vtanh.pop %v2043
        %v2046 = vtanh.pop %v2044
        %v2047 = vadd.f32 %v2045, 1.0
        %v2048 = vadd.f32 %v2046, 1.0
        %v2049 = vmul.f32 %v2033, %v2047
        %v2050 = vmul.f32 %v2034, %v2048
        %v2051 = vpack.c.bf16 %v2049, %v2049
        %v2052 = vpack.c.bf16 %v2050, %v2050
        %v2053 = vld [vmem:[%s835] sm:$0xf]
        %v2054 = vld [vmem:[%s835 + $0x4] sm:$0xf]
        %v2055 = vld [vmem:[%s835 + $0x8] sm:$0xf]
        %v2056 = vld [vmem:[%s835 + $0xc] sm:$0xf]
        %v2057 = vld [vmem:[%s835 + $0x10] sm:$0xf]
        %v2058 = vld [vmem:[%s835 + $0x14] sm:$0xf]
        %v2059 = vld [vmem:[%s835 + $0x18] sm:$0xf]
        %v2060 = vld [vmem:[%s835 + $0x1c] sm:$0xf]
        %v2061 = vld [vmem:[%s835 + $0x20] sm:$0xf]
        %v2062 = vld [vmem:[%s835 + $0x24] sm:$0xf]
        %v2063 = vld [vmem:[%s835 + $0x28] sm:$0xf]
        %v2064 = vld [vmem:[%s835 + $0x2c] sm:$0xf]
        %v2065 = vld [vmem:[%s835 + $0x30] sm:$0xf]
        %v2066 = vld [vmem:[%s835 + $0x34] sm:$0xf]
        %v2067 = vld [vmem:[%s835 + $0x38] sm:$0xf]
        %v2068 = vld [vmem:[%s835 + $0x3c] sm:$0xf]
        %v2069 = vld [vmem:[%s835 + $0x40] sm:$0xf]
        %v2070 = vld [vmem:[%s835 + $0x44] sm:$0xf]
        %v2071 = vld [vmem:[%s835 + $0x48] sm:$0xf]
        %v2072 = vld [vmem:[%s835 + $0x4c] sm:$0xf]
        %v2073 = vld [vmem:[%s835 + $0x50] sm:$0xf]
        %v2074 = vld [vmem:[%s835 + $0x54] sm:$0xf]
        %v2075 = vld [vmem:[%s835 + $0x58] sm:$0xf]
        %v2076 = vld [vmem:[%s835 + $0x5c] sm:$0xf]
        %v2077 = vld [vmem:[%s835 + $0x60] sm:$0xf]
        %v2078 = vld [vmem:[%s835 + $0x64] sm:$0xf]
        %v2079 = vld [vmem:[%s835 + $0x68] sm:$0xf]
        %v2080 = vld [vmem:[%s835 + $0x6c] sm:$0xf]
        %v2081 = vld [vmem:[%s835 + $0x70] sm:$0xf]
        %v2082 = vld [vmem:[%s835 + $0x74] sm:$0xf]
        %v2083 = vld [vmem:[%s835 + $0x78] sm:$0xf]
        %v2084 = vld [vmem:[%s835 + $0x7c] sm:$0xf]
        %v2085 = vld [vmem:[%s969] sm:$0x1]
        %v2087 = vlaneseq
        %v2088 = vshrl.u32 %v2087, 7
        %v2089 = vsub.s32 0, %v2088
        %v2090 = vrot.slane %v2085, %v2089
        %v2124 = vunpack.c.l.b16 %v2053
        %v2125 = vunpack.c.l.b16 %v2054
        %v2126 = vunpack.c.l.b16 %v2055
        %v2127 = vunpack.c.l.b16 %v2056
        %v2128 = vunpack.c.l.b16 %v2057
        %v2129 = vunpack.c.l.b16 %v2058
        %v2130 = vunpack.c.l.b16 %v2059
        %v2131 = vunpack.c.l.b16 %v2060
        %v2132 = vunpack.c.l.b16 %v2061
        %v2133 = vunpack.c.l.b16 %v2062
        %v2134 = vunpack.c.l.b16 %v2063
        %v2135 = vunpack.c.l.b16 %v2064
        %v2136 = vunpack.c.l.b16 %v2065
        %v2137 = vunpack.c.l.b16 %v2066
        %v2138 = vunpack.c.l.b16 %v2067
        %v2139 = vunpack.c.l.b16 %v2068
        %v2140 = vunpack.c.l.b16 %v2069
        %v2141 = vunpack.c.l.b16 %v2070
        %v2142 = vunpack.c.l.b16 %v2071
        %v2143 = vunpack.c.l.b16 %v2072
        %v2144 = vunpack.c.l.b16 %v2073
        %v2145 = vunpack.c.l.b16 %v2074
        %v2146 = vunpack.c.l.b16 %v2075
        %v2147 = vunpack.c.l.b16 %v2076
        %v2148 = vunpack.c.l.b16 %v2077
        %v2149 = vunpack.c.l.b16 %v2078
        %v2150 = vunpack.c.l.b16 %v2079
        %v2151 = vunpack.c.l.b16 %v2080
        %v2152 = vunpack.c.l.b16 %v2081
        %v2153 = vunpack.c.l.b16 %v2082
        %v2154 = vunpack.c.l.b16 %v2083
        %v2155 = vunpack.c.l.b16 %v2084
        %v2156 = vpack.c.b16 %v2125, %v2124
        %v2157 = vpack.c.b16 %v2127, %v2126
        %v2158 = vpack.c.b16 %v2129, %v2128
        %v2159 = vpack.c.b16 %v2131, %v2130
        %v2160 = vpack.c.b16 %v2133, %v2132
        %v2161 = vpack.c.b16 %v2135, %v2134
        %v2162 = vpack.c.b16 %v2137, %v2136
        %v2163 = vpack.c.b16 %v2139, %v2138
        %v2164 = vpack.c.b16 %v2141, %v2140
        %v2165 = vpack.c.b16 %v2143, %v2142
        %v2166 = vpack.c.b16 %v2145, %v2144
        %v2167 = vpack.c.b16 %v2147, %v2146
        %v2168 = vpack.c.b16 %v2149, %v2148
        %v2169 = vpack.c.b16 %v2151, %v2150
        %v2170 = vpack.c.b16 %v2153, %v2152
        %v2171 = vpack.c.b16 %v2155, %v2154
        %2188 = vmatprep.subr.bf16.mxu0 0
        %2189 = vmatpush1.bf16.msra.mxu0 %v2156
        %2190 = vmatprep.subr.bf16.mxu0 0
        %2191 = vmatpush1.bf16.msra.mxu0 %v2157
        %2192 = vmatprep.subr.bf16.mxu0 0
        %2193 = vmatpush1.bf16.msra.mxu0 %v2158
        %2194 = vmatprep.subr.bf16.mxu0 0
        %2195 = vmatpush1.bf16.msra.mxu0 %v2159
        %2196 = vmatprep.subr.bf16.mxu0 0
        %2197 = vmatpush1.bf16.msra.mxu0 %v2160
        %2198 = vmatprep.subr.bf16.mxu0 0
        %2199 = vmatpush1.bf16.msra.mxu0 %v2161
        %2200 = vmatprep.subr.bf16.mxu0 0
        %2201 = vmatpush1.bf16.msra.mxu0 %v2162
        %2202 = vmatprep.subr.bf16.mxu0 0
        %2203 = vmatpush1.bf16.msra.mxu0 %v2163
        %2204 = vmatprep.subr.bf16.mxu0 0
        %2205 = vmatpush1.bf16.msra.mxu0 %v2164
        %2206 = vmatprep.subr.bf16.mxu0 0
        %2207 = vmatpush1.bf16.msra.mxu0 %v2165
        %2208 = vmatprep.subr.bf16.mxu0 0
        %2209 = vmatpush1.bf16.msra.mxu0 %v2166
        %2210 = vmatprep.subr.bf16.mxu0 0
        %2211 = vmatpush1.bf16.msra.mxu0 %v2167
        %2212 = vmatprep.subr.bf16.mxu0 0
        %2213 = vmatpush1.bf16.msra.mxu0 %v2168
        %2214 = vmatprep.subr.bf16.mxu0 0
        %2215 = vmatpush1.bf16.msra.mxu0 %v2169
        %2216 = vmatprep.subr.bf16.mxu0 0
        %2217 = vmatpush1.bf16.msra.mxu0 %v2170
        %2218 = vmatprep.subr.bf16.mxu0 0
        %2219 = vmatpush1.bf16.msra.mxu0 %v2171
        %2220 = vmatprep.mubr.bf16.mxu0 %v2052
        %2221 = vmatmul.mubr.bf16.gmra.mrb[0].mxu0 %v2051
        %v2222 = vpop.f32.mrb[0].mxu0
        %v2223 = vadd.f32 %v2090, %v2222
        %v2224 = vpop.f32.mrb[0].mxu0
        %v2225 = vpop.f32.mrb[0].mxu0
        %v2226 = vpop.f32.mrb[0].mxu0
        %2227 = vdwg.mxu0
        %v2228 = vadd.f32 %v2223, %v1882
        %v2229 = vld [vmem:[%s972] sm:$0x1]
        %v2230 = vld [vmem:[%s975] sm:$0x1]
        %2231 = vadd.xlane.f32.xlu0 %v2228
        %v2232 = vpop.xlane.xlu0 %2231
        %v2233 = vmul.f32 %v2232, %v1859
        %v2234 = vsub.f32 %v2228, %v2233
        %v2235 = vmul.f32 %v2234, %v2234
        %2236 = vadd.xlane.f32.xlu0 %v2235
        %v2237 = vpop.xlane.xlu0 %2236
        %v2238 = vmul.f32 %v2237, %v1859
        %v2239 = vadd.f32 %v2238, 1e-12
        %v2240 = vrsqrt.pop %v2239
        %v2241 = vmul.f32 %v2234, %v2240
        %v2243 = vlaneseq
        %v2244 = vshrl.u32 %v2243, 7
        %v2245 = vsub.s32 0, %v2244
        %v2246 = vrot.slane %v2229, %v2245
        %v2248 = vmul.f32 %v2241, %v2246
        %v2250 = vlaneseq
        %v2251 = vshrl.u32 %v2250, 7
        %v2252 = vsub.s32 0, %v2251
        %v2253 = vrot.slane %v2230, %v2252
        %v2255 = vadd.f32 %v2248, %v2253
        %2256 = vst [vmem:[#allocation2] sm:$0xff] %v2255
        %p2257 = scmp.eq.s32.totalorder %s47, 3
        // Predicated region
        $region129: #{bert_for_features.1} parent=107 // pred_check
          %p2258 = pneg %p2257
        $region130: #{bert_for_features.1} parent=107 // pred_check_branch
          %2260 = sbr.rel (%p2258) target = $region132
        $region131: #{bert_for_features.1} parent=107 // pred_region
          %v2261 = vpack.c.bf16 %v2255, %v2255
          %v2262 = vld [vmem:[%s16] sm:$0xf]
          %v2263 = vld [vmem:[%s16 + $0x4] sm:$0xf]
          %v2264 = vld [vmem:[%s16 + $0x8] sm:$0xf]
          %v2265 = vld [vmem:[%s16 + $0xc] sm:$0xf]
          %v2266 = vld [vmem:[%s16 + $0x10] sm:$0xf]
          %v2267 = vld [vmem:[%s16 + $0x14] sm:$0xf]
          %v2268 = vld [vmem:[%s16 + $0x18] sm:$0xf]
          %v2269 = vld [vmem:[%s16 + $0x1c] sm:$0xf]
          %v2270 = vld [vmem:[%s16 + $0x20] sm:$0xf]
          %v2271 = vld [vmem:[%s16 + $0x24] sm:$0xf]
          %v2272 = vld [vmem:[%s16 + $0x28] sm:$0xf]
          %v2273 = vld [vmem:[%s16 + $0x2c] sm:$0xf]
          %v2274 = vld [vmem:[%s16 + $0x30] sm:$0xf]
          %v2275 = vld [vmem:[%s16 + $0x34] sm:$0xf]
          %v2276 = vld [vmem:[%s16 + $0x38] sm:$0xf]
          %v2277 = vld [vmem:[%s16 + $0x3c] sm:$0xf]
          %v2278 = vld [vmem:[%s17] sm:$0x1]
          %v2295 = vunpack.c.l.b16 %v2262
          %v2296 = vunpack.c.l.b16 %v2263
          %v2297 = vunpack.c.l.b16 %v2264
          %v2298 = vunpack.c.l.b16 %v2265
          %v2299 = vunpack.c.l.b16 %v2266
          %v2300 = vunpack.c.l.b16 %v2267
          %v2301 = vunpack.c.l.b16 %v2268
          %v2302 = vunpack.c.l.b16 %v2269
          %v2303 = vunpack.c.l.b16 %v2270
          %v2304 = vunpack.c.l.b16 %v2271
          %v2305 = vunpack.c.l.b16 %v2272
          %v2306 = vunpack.c.l.b16 %v2273
          %v2307 = vunpack.c.l.b16 %v2274
          %v2308 = vunpack.c.l.b16 %v2275
          %v2309 = vunpack.c.l.b16 %v2276
          %v2310 = vunpack.c.l.b16 %v2277
          %v2311 = vpack.c.b16 %v2296, %v2295
          %v2312 = vpack.c.b16 %v2298, %v2297
          %v2313 = vpack.c.b16 %v2300, %v2299
          %v2314 = vpack.c.b16 %v2302, %v2301
          %v2315 = vpack.c.b16 %v2304, %v2303
          %v2316 = vpack.c.b16 %v2306, %v2305
          %v2317 = vpack.c.b16 %v2308, %v2307
          %v2318 = vpack.c.b16 %v2310, %v2309
          %2327 = vmatprep.subr.bf16.mxu0 0
          %2328 = vmatpush1.bf16.msra.mxu0 %v2311
          %2329 = vmatprep.subr.bf16.mxu0 0
          %2330 = vmatpush1.bf16.msra.mxu0 %v2312
          %2331 = vmatprep.subr.bf16.mxu0 0
          %2332 = vmatpush1.bf16.msra.mxu0 %v2313
          %2333 = vmatprep.subr.bf16.mxu0 0
          %2334 = vmatpush1.bf16.msra.mxu0 %v2314
          %2335 = vmatprep.subr.bf16.mxu0 0
          %2336 = vmatpush1.bf16.msra.mxu0 %v2315
          %2337 = vmatprep.subr.bf16.mxu0 0
          %2338 = vmatpush1.bf16.msra.mxu0 %v2316
          %2339 = vmatprep.subr.bf16.mxu0 0
          %2340 = vmatpush1.bf16.msra.mxu0 %v2317
          %2341 = vmatprep.subr.bf16.mxu0 0
          %2342 = vmatpush1.bf16.msra.mxu0 %v2318
          %2343 = vmatprep.subr.bf16.mxu0 0
          %2344 = vmatpush1.bf16.msra.mxu0 0
          %2345 = vmatprep.subr.bf16.mxu0 0
          %2346 = vmatpush1.bf16.msra.mxu0 0
          %2347 = vmatprep.subr.bf16.mxu0 0
          %2348 = vmatpush1.bf16.msra.mxu0 0
          %2349 = vmatprep.subr.bf16.mxu0 0
          %2350 = vmatpush1.bf16.msra.mxu0 0
          %2351 = vmatprep.subr.bf16.mxu0 0
          %2352 = vmatpush1.bf16.msra.mxu0 0
          %2353 = vmatprep.subr.bf16.mxu0 0
          %2354 = vmatpush1.bf16.msra.mxu0 0
          %2355 = vmatprep.subr.bf16.mxu0 0
          %2356 = vmatpush1.bf16.msra.mxu0 0
          %2357 = vmatprep.subr.bf16.mxu0 0
          %2358 = vmatpush1.bf16.msra.mxu0 0
          %2359 = vmatprep.mubr.bf16.mxu0 0
          %2360 = vmatmul.mubr.bf16.gmra.mrb[0].mxu0 %v2261
          %v2361 = vpop.f32.mrb[0].mxu0
          %v2362 = vadd.f32 %v2278, %v2361
          %v2363 = vpop.f32.mrb[0].mxu0
          %v2364 = vpop.f32.mrb[0].mxu0
          %v2365 = vpop.f32.mrb[0].mxu0
          %2366 = vdwg.mxu0
          %v2367 = vtanh.pop %v2362
          %v2368 = vld [vmem:[%s18] sm:$0xff]
          %v2369 = vld [vmem:[%s18 + $0x8] sm:$0xff]
          %v2370 = vld [vmem:[%s18 + $0x10] sm:$0xff]
          %v2371 = vld [vmem:[%s18 + $0x18] sm:$0xff]
          %v2372 = vld [vmem:[%s18 + $0x20] sm:$0xff]
          %v2373 = vld [vmem:[%s18 + $0x28] sm:$0xff]
          %v2374 = vld [vmem:[%s18 + $0x30] sm:$0xff]
          %v2375 = vld [vmem:[%s18 + $0x38] sm:$0xff]
          %v2376 = vld [vmem:[%s18 + $0x40] sm:$0xff]
          %v2377 = vld [vmem:[%s18 + $0x48] sm:$0xff]
          %v2378 = vld [vmem:[%s18 + $0x50] sm:$0xff]
          %v2379 = vld [vmem:[%s18 + $0x58] sm:$0xff]
          %v2380 = vld [vmem:[%s18 + $0x60] sm:$0xff]
          %v2381 = vld [vmem:[%s18 + $0x68] sm:$0xff]
          %v2382 = vld [vmem:[%s18 + $0x70] sm:$0xff]
          %v2383 = vld [vmem:[%s18 + $0x78] sm:$0xff]
          %v2384 = vld [vmem:[%s19] sm:$0x1]
          %2385 = vmatprep.subr.mxu0 0.0
          %2386 = vmatpush1.msra.mxu0 %v2368
          %2387 = vmatprep.subr.mxu0 0.0
          %2388 = vmatpush1.msra.mxu0 %v2369
          %2389 = vmatprep.subr.mxu0 0.0
          %2390 = vmatpush1.msra.mxu0 %v2370
          %2391 = vmatprep.subr.mxu0 0.0
          %2392 = vmatpush1.msra.mxu0 %v2371
          %2393 = vmatprep.subr.mxu0 0.0
          %2394 = vmatpush1.msra.mxu0 %v2372
          %2395 = vmatprep.subr.mxu0 0.0
          %2396 = vmatpush1.msra.mxu0 %v2373
          %2397 = vmatprep.subr.mxu0 0.0
          %2398 = vmatpush1.msra.mxu0 %v2374
          %2399 = vmatprep.subr.mxu0 0.0
          %2400 = vmatpush1.msra.mxu0 %v2375
          %2401 = vmatprep.subr.mxu0 0.0
          %2402 = vmatpush1.msra.mxu0 %v2376
          %2403 = vmatprep.subr.mxu0 0.0
          %2404 = vmatpush1.msra.mxu0 %v2377
          %2405 = vmatprep.subr.mxu0 0.0
          %2406 = vmatpush1.msra.mxu0 %v2378
          %2407 = vmatprep.subr.mxu0 0.0
          %2408 = vmatpush1.msra.mxu0 %v2379
          %2409 = vmatprep.subr.mxu0 0.0
          %2410 = vmatpush1.msra.mxu0 %v2380
          %2411 = vmatprep.subr.mxu0 0.0
          %2412 = vmatpush1.msra.mxu0 %v2381
          %2413 = vmatprep.subr.mxu0 0.0
          %2414 = vmatpush1.msra.mxu0 %v2382
          %2415 = vmatprep.subr.mxu0 0.0
          %2416 = vmatpush1.msra.mxu0 %v2383
          %2417 = vmatprep.subr.mxu0 0.0
          %2418 = vmatpush1.msra.mxu0 0.0
          %2419 = vmatprep.subr.mxu0 0.0
          %2420 = vmatpush1.msra.mxu0 0.0
          %2421 = vmatprep.subr.mxu0 0.0
          %2422 = vmatpush1.msra.mxu0 0.0
          %2423 = vmatprep.subr.mxu0 0.0
          %2424 = vmatpush1.msra.mxu0 0.0
          %2425 = vmatprep.subr.mxu0 0.0
          %2426 = vmatpush1.msra.mxu0 0.0
          %2427 = vmatprep.subr.mxu0 0.0
          %2428 = vmatpush1.msra.mxu0 0.0
          %2429 = vmatprep.subr.mxu0 0.0
          %2430 = vmatpush1.msra.mxu0 0.0
          %2431 = vmatprep.subr.mxu0 0.0
          %2432 = vmatpush1.msra.mxu0 0.0
          %2433 = vmatprep.subr.mxu0 0.0
          %2434 = vmatpush1.msra.mxu0 0.0
          %2435 = vmatprep.subr.mxu0 0.0
          %2436 = vmatpush1.msra.mxu0 0.0
          %2437 = vmatprep.subr.mxu0 0.0
          %2438 = vmatpush1.msra.mxu0 0.0
          %2439 = vmatprep.subr.mxu0 0.0
          %2440 = vmatpush1.msra.mxu0 0.0
          %2441 = vmatprep.subr.mxu0 0.0
          %2442 = vmatpush1.msra.mxu0 0.0
          %2443 = vmatprep.subr.mxu0 0.0
          %2444 = vmatpush1.msra.mxu0 0.0
          %2445 = vmatprep.subr.mxu0 0.0
          %2446 = vmatpush1.msra.mxu0 0.0
          %2447 = vmatprep.subr.mxu0 0.0
          %2448 = vmatpush1.msra.mxu0 0.0
          %2449 = vmatprep.mubr.f32.mxu0 0.0
          %2450 = vmatmul.mubr.f32.gmra.mrb[0].mxu0 %v2367
          %v2451 = vpop.f32.mrb[0].mxu0
          %v2452 = vadd.f32 %v2384, %v2451
          %v2453 = vpop.f32.mrb[0].mxu0
          %2454 = vdwg.mxu0
          %v2455 = vld [vmem:[%s20] sm:$0xff]
          %v2456 = vld [vmem:[%s20 + $0x8] sm:$0xff]
          %v2457 = vld [vmem:[%s20 + $0x10] sm:$0xff]
          %v2458 = vld [vmem:[%s20 + $0x18] sm:$0xff]
          %v2459 = vld [vmem:[%s20 + $0x20] sm:$0xff]
          %v2460 = vld [vmem:[%s20 + $0x28] sm:$0xff]
          %v2461 = vld [vmem:[%s20 + $0x30] sm:$0xff]
          %v2462 = vld [vmem:[%s20 + $0x38] sm:$0xff]
          %v2463 = vld [vmem:[%s20 + $0x40] sm:$0xff]
          %v2464 = vld [vmem:[%s20 + $0x48] sm:$0xff]
          %v2465 = vld [vmem:[%s20 + $0x50] sm:$0xff]
          %v2466 = vld [vmem:[%s20 + $0x58] sm:$0xff]
          %v2467 = vld [vmem:[%s20 + $0x60] sm:$0xff]
          %v2468 = vld [vmem:[%s20 + $0x68] sm:$0xff]
          %v2469 = vld [vmem:[%s20 + $0x70] sm:$0xff]
          %v2470 = vld [vmem:[%s20 + $0x78] sm:$0xff]
          %v2471 = vld [vmem:[%s21] sm:$0x1]
          %2472 = vmatprep.subr.mxu0 0.0
          %2473 = vmatpush1.msra.mxu0 %v2455
          %2474 = vmatprep.subr.mxu0 0.0
          %2475 = vmatpush1.msra.mxu0 %v2456
          %2476 = vmatprep.subr.mxu0 0.0
          %2477 = vmatpush1.msra.mxu0 %v2457
          %2478 = vmatprep.subr.mxu0 0.0
          %2479 = vmatpush1.msra.mxu0 %v2458
          %2480 = vmatprep.subr.mxu0 0.0
          %2481 = vmatpush1.msra.mxu0 %v2459
          %2482 = vmatprep.subr.mxu0 0.0
          %2483 = vmatpush1.msra.mxu0 %v2460
          %2484 = vmatprep.subr.mxu0 0.0
          %2485 = vmatpush1.msra.mxu0 %v2461
          %2486 = vmatprep.subr.mxu0 0.0
          %2487 = vmatpush1.msra.mxu0 %v2462
          %2488 = vmatprep.subr.mxu0 0.0
          %2489 = vmatpush1.msra.mxu0 %v2463
          %2490 = vmatprep.subr.mxu0 0.0
          %2491 = vmatpush1.msra.mxu0 %v2464
          %2492 = vmatprep.subr.mxu0 0.0
          %2493 = vmatpush1.msra.mxu0 %v2465
          %2494 = vmatprep.subr.mxu0 0.0
          %2495 = vmatpush1.msra.mxu0 %v2466
          %2496 = vmatprep.subr.mxu0 0.0
          %2497 = vmatpush1.msra.mxu0 %v2467
          %2498 = vmatprep.subr.mxu0 0.0
          %2499 = vmatpush1.msra.mxu0 %v2468
          %2500 = vmatprep.subr.mxu0 0.0
          %2501 = vmatpush1.msra.mxu0 %v2469
          %2502 = vmatprep.subr.mxu0 0.0
          %2503 = vmatpush1.msra.mxu0 %v2470
          %2504 = vmatprep.subr.mxu0 0.0
          %2505 = vmatpush1.msra.mxu0 0.0
          %2506 = vmatprep.subr.mxu0 0.0
          %2507 = vmatpush1.msra.mxu0 0.0
          %2508 = vmatprep.subr.mxu0 0.0
          %2509 = vmatpush1.msra.mxu0 0.0
          %2510 = vmatprep.subr.mxu0 0.0
          %2511 = vmatpush1.msra.mxu0 0.0
          %2512 = vmatprep.subr.mxu0 0.0
          %2513 = vmatpush1.msra.mxu0 0.0
          %2514 = vmatprep.subr.mxu0 0.0
          %2515 = vmatpush1.msra.mxu0 0.0
          %2516 = vmatprep.subr.mxu0 0.0
          %2517 = vmatpush1.msra.mxu0 0.0
          %2518 = vmatprep.subr.mxu0 0.0
          %2519 = vmatpush1.msra.mxu0 0.0
          %2520 = vmatprep.subr.mxu0 0.0
          %2521 = vmatpush1.msra.mxu0 0.0
          %2522 = vmatprep.subr.mxu0 0.0
          %2523 = vmatpush1.msra.mxu0 0.0
          %2524 = vmatprep.subr.mxu0 0.0
          %2525 = vmatpush1.msra.mxu0 0.0
          %2526 = vmatprep.subr.mxu0 0.0
          %2527 = vmatpush1.msra.mxu0 0.0
          %2528 = vmatprep.subr.mxu0 0.0
          %2529 = vmatpush1.msra.mxu0 0.0
          %2530 = vmatprep.subr.mxu0 0.0
          %2531 = vmatpush1.msra.mxu0 0.0
          %2532 = vmatprep.subr.mxu0 0.0
          %2533 = vmatpush1.msra.mxu0 0.0
          %2534 = vmatprep.subr.mxu0 0.0
          %2535 = vmatpush1.msra.mxu0 0.0
          %2536 = vmatprep.mubr.f32.mxu0 0.0
          %2537 = vmatmul.mubr.f32.gmra.mrb[0].mxu0 %v2452
          %v2538 = vpop.f32.mrb[0].mxu0
          %v2539 = vadd.f32 %v2471, %v2538
          %v2540 = vpop.f32.mrb[0].mxu0
          %2541 = vdwg.mxu0
          %v2542 = vlaneseq
          %v2543 = vshrl.u32 %v2542, 7
          %v2544 = vsub.s32 0, %v2543
          %v2545 = vrot.slane %v2539, %v2544
          %2546 = vst [vmem:[%s979] sm:$0xff] %v2545
        $region132: #{bert_for_features.1} parent=107 // pred_fallthru
          _
        %p2547 = scmp.lt.s32.totalorder %s46, 1
        %s2548 = scalar_select %p2547, %s46, 1
        %s2549 = smul.addr %s2548, 8
        %s2550 = scalar_lea.vmem %s22, %s2549
        // Predicated region
        $region133: #{bert_for_features.1} parent=107 // pred_check
          %p2551 = pneg %p604
        $region134: #{bert_for_features.1} parent=107 // pred_check_branch
          %2553 = sbr.rel (%p2551) target = $region136
        $region135: #{bert_for_features.1} parent=107 // pred_region
          _
        $region136: #{bert_for_features.1} parent=107 // pred_fallthru
          _
      $region108: #{bert_for_features.1} parent=5 // pred_fallthru
        _
      %p2554 = scmp.le.s32.totalorder 2, %s37
      // Predicated region
      $region137: #{bert_for_features.1} parent=5 // pred_check
        %p2555 = pneg %p2554
      $region138: #{bert_for_features.1} parent=5 // pred_check_branch
        %2557 = sbr.rel (%p2555) target = $region140
      $region139: #{bert_for_features.1} parent=5 // pred_region
        %s2558 = ssub.s32 %s37, 2
        // Predicated region
        $region141: #{bert_for_features.1} parent=139 // pred_check
          %p2559 = pneg %p610
        $region142: #{bert_for_features.1} parent=139 // pred_check_branch
          %2561 = sbr.rel (%p2559) target = $region144
        $region143: #{bert_for_features.1} parent=139 // pred_region
          %p2562 = scmp.lt.s32.totalorder %s48, 1
          %s2563 = scalar_select %p2562, %s48, 1
          %s2564 = smul.addr %s2563, 8
          %s2565 = scalar_lea.vmem %s22, %s2564
        $region144: #{bert_for_features.1} parent=139 // pred_fallthru
          _
      $region140: #{bert_for_features.1} parent=5 // pred_fallthru
        _
    $region6: #{bert_for_features.1} parent=1 // loop_footer
      %s41 = sadd.s32 1, %s37
    $region7: #{bert_for_features.1} parent=1 // loop_footer_branch
      %36 = sbr.rel target = $region3
    $region8: #{bert_for_features.1} parent=1 // loop_exit
      _
    %2566 = vsyncpa [#allocation4], 1
    %s2567 = scalar_lea.sflag [#allocation4], 1
    %2568 = vsyncpa %s2567, 1
    %2569 = vsyncpa [#allocation6], 1
    %s2570 = scalar_lea.sflag [#allocation6], 1
    %2571 = vsyncpa %s2570, 1
    %2572 = vsyncpa [#allocation9], 1
    %s2573 = scalar_lea.sflag [#allocation9], 1
    %2574 = vsyncpa %s2573, 1

</llo_original>
